<compile_context>
chip_gen: v5e
topology: v5e:2x2
jax: 0.10.0
libtpu: 0.0.40
codegen_flags: <defaults>
</compile_context>

<pallas_src>
import jax
import jax.numpy as jnp
from jax.experimental import pallas as pl
from jax.experimental.pallas import tpu as pltpu

PACK = 16          # samples packed per 128-lane row (16 samples x 8 features)
FEAT = 8           # input/output feature width of the MLP


def _round_up(a, m):
    return (a + m - 1) // m * m


def _mlp_kernel(x_ref,
                w1_ref, b1_ref,
                w2_ref, b2_ref,
                w3_ref, b3_ref,
                w4_ref, b4_ref,
                o_ref):
    """All refs are lane-dense (last dim a multiple of 128).

    x_ref/o_ref : (tile_rows, 128) -- 16 samples x 8 features per row.
    wN_ref      : kron(I_16, W_N) block-diagonal weights, so one matmul applies
                  the per-sample Linear to all 16 packed samples at once.
    bN_ref      : (1, 16 * out_N)  -- per-sample bias tiled across the packing.
    """
    x = x_ref[...]                                                   # (R, 128)

    # Layer 1: Linear(8 -> 8) + ReLU            (packed: 128 -> 128)
    h = jnp.dot(x, w1_ref[...], preferred_element_type=jnp.float32) + b1_ref[...]
    h = jnp.maximum(h, 0.0)

    # Layer 2: Linear(8 -> 128) + ReLU          (packed: 128 -> 2048)
    h = jnp.dot(h, w2_ref[...], preferred_element_type=jnp.float32) + b2_ref[...]
    h = jnp.maximum(h, 0.0)

    # Layer 3: Linear(128 -> 32) + ReLU         (packed: 2048 -> 512)
    h = jnp.dot(h, w3_ref[...], preferred_element_type=jnp.float32) + b3_ref[...]
    h = jnp.maximum(h, 0.0)

    # Layer 4: Linear(32 -> 8) + LeakyReLU(0.01)   (packed: 512 -> 128)
    y = jnp.dot(h, w4_ref[...], preferred_element_type=jnp.float32) + b4_ref[...]
    o_ref[...] = jnp.where(y > 0.0, y, 0.01 * y)


def _expand_packed(w, b):
    """Block-diagonal (kron) expansion of one Linear layer for the packed layout."""
    wk = jnp.kron(jnp.eye(PACK, dtype=w.dtype), w)        # (16*in, 16*out)
    bk = jnp.tile(jnp.reshape(b, (1, -1)), (1, PACK))     # (1, 16*out)
    return wk, bk


def nn_final_forward(x, params, *, tile_rows=256):
    """x: (B, 8) float32.  params: dict of weights (in, out) and biases (1, out)."""
    B, d_in = x.shape
    assert d_in == FEAT

    # ---- choose batch tiling (in packed rows of 16 samples) -----------------
    rows = pl.cdiv(B, PACK)
    tile_rows = max(8, min(tile_rows, _round_up(rows, 8)))        # sublane-aligned
    if rows >= 16:
        # keep at least 2 grid steps when possible (v7x megacore sharding)
        tile_rows = min(tile_rows, _round_up(pl.cdiv(rows, 2), 8))
    rows_p = _round_up(rows, tile_rows)
    b_pad = rows_p * PACK

    # ---- lane-dense packed view of the batch --------------------------------
    if b_pad != B:
        x = jnp.pad(x, ((0, b_pad - B), (0, 0)))      # padded rows sliced off later
    x_packed = x.reshape(rows_p, PACK * FEAT)          # row-major bit-identical view

    w1k, b1k = _expand_packed(params["w1"], params["b1"])   # (128, 128),  (1, 128)
    w2k, b2k = _expand_packed(params["w2"], params["b2"])   # (128, 2048), (1, 2048)
    w3k, b3k = _expand_packed(params["w3"], params["b3"])   # (2048, 512), (1, 512)
    w4k, b4k = _expand_packed(params["w4"], params["b4"])   # (512, 128),  (1, 128)

    def full_spec(shape):
        # Whole array, same block every grid step -> the pipeline fetches it once.
        # TODO(synk): pipeline_mode=pl.Buffered(1) would drop the second weight
        #             buffer (~5 MiB VMEM); kept default for portability.
        return pl.BlockSpec(shape, lambda i: (0,) * len(shape))

    grid = (rows_p // tile_rows,)

    out_packed = pl.pallas_call(
        _mlp_kernel,
        out_shape=jax.ShapeDtypeStruct((rows_p, PACK * FEAT), jnp.float32),
        grid_spec=pltpu.PrefetchScalarGridSpec(
            num_scalar_prefetch=0,
            grid=grid,
            in_specs=[
                pl.BlockSpec((tile_rows, PACK * FEAT), lambda i: (i, 0)),   # x tile
                full_spec(w1k.shape), full_spec(b1k.shape),
                full_spec(w2k.shape), full_spec(b2k.shape),
                full_spec(w3k.shape), full_spec(b3k.shape),
                full_spec(w4k.shape), full_spec(b4k.shape),
            ],
            out_specs=pl.BlockSpec((tile_rows, PACK * FEAT), lambda i: (i, 0)),
        ),
        compiler_params=pltpu.CompilerParams(
            dimension_semantics=("parallel",),
            vmem_limit_bytes=32 * 1024 * 1024,
        ),
    )(x_packed, w1k, b1k, w2k, b2k, w3k, b3k, w4k, b4k)

    return out_packed.reshape(b_pad, FEAT)[:B]


def init_params(key):
    """Deterministic init mimicking nn.Linear default: U(-1/sqrt(fan_in), 1/sqrt(fan_in)).
    Weights stored as (in, out) so the forward does x @ W + b."""
    dims = [(8, 8), (8, 128), (128, 32), (32, 8)]
    params = {}
    for idx, (fan_in, fan_out) in enumerate(dims, start=1):
        key, kw, kb = jax.random.split(key, 3)
        bound = 1.0 / jnp.sqrt(jnp.float32(fan_in))
        params[f"w{idx}"] = jax.random.uniform(
            kw, (fan_in, fan_out), jnp.float32, -bound, bound)
        params[f"b{idx}"] = jax.random.uniform(
            kb, (1, fan_out), jnp.float32, -bound, bound)
    return params


def reference_forward(x, params):
    h = jnp.maximum(x @ params["w1"] + params["b1"], 0.0)
    h = jnp.maximum(h @ params["w2"] + params["b2"], 0.0)
    h = jnp.maximum(h @ params["w3"] + params["b3"], 0.0)
    y = h @ params["w4"] + params["b4"]
    return jnp.where(y > 0.0, y, 0.01 * y)


if __name__ == "__main__":
    key = jax.random.PRNGKey(0)
    key, kx = jax.random.split(key)

    B = 200   # small, deliberately NOT a multiple of the tile -> exercises padding
    x = jax.random.normal(kx, (B, FEAT), jnp.float32)
    params = init_params(key)

    out = nn_final_forward(x, params)
    out = jax.block_until_ready(out)

    ref = reference_forward(x, params)
    assert out.shape == (B, FEAT)
    assert jnp.allclose(out, ref, atol=2e-5, rtol=2e-5), \
        float(jnp.max(jnp.abs(out - ref)))

    print("KERNEL_OK")
</pallas_src>

<mosaic_0001>
module attributes {stable_mosaic.version = 11 : i64} {
  func.func @_mlp_kernel(%arg0: i32, %arg1: memref<16x128xf32, #tpu.memory_space<vmem>>, %arg2: memref<128x128xf32, #tpu.memory_space<vmem>>, %arg3: memref<1x128xf32, #tpu.memory_space<vmem>>, %arg4: memref<128x2048xf32, #tpu.memory_space<vmem>>, %arg5: memref<1x2048xf32, #tpu.memory_space<vmem>>, %arg6: memref<2048x512xf32, #tpu.memory_space<vmem>>, %arg7: memref<1x512xf32, #tpu.memory_space<vmem>>, %arg8: memref<512x128xf32, #tpu.memory_space<vmem>>, %arg9: memref<1x128xf32, #tpu.memory_space<vmem>>, %arg10: memref<16x128xf32, #tpu.memory_space<vmem>>) attributes {dimension_semantics = [#tpu.dimension_semantics<parallel>], iteration_bounds = array<i64: 1>, scalar_prefetch = 0 : i64, scratch_operands = 0 : i64, tpu.core_type = #tpu.core_type<tc>, window_params = [{transform_indices = @transform_0, window_bounds = array<i64: 16, 128>}, {pipeline_mode = #tpu.pipeline_mode<synchronous>, transform_indices = @transform_1, window_bounds = array<i64: 128, 128>}, {pipeline_mode = #tpu.pipeline_mode<synchronous>, transform_indices = @transform_2, window_bounds = array<i64: 1, 128>}, {pipeline_mode = #tpu.pipeline_mode<synchronous>, transform_indices = @transform_3, window_bounds = array<i64: 128, 2048>}, {pipeline_mode = #tpu.pipeline_mode<synchronous>, transform_indices = @transform_4, window_bounds = array<i64: 1, 2048>}, {pipeline_mode = #tpu.pipeline_mode<synchronous>, transform_indices = @transform_5, window_bounds = array<i64: 2048, 512>}, {pipeline_mode = #tpu.pipeline_mode<synchronous>, transform_indices = @transform_6, window_bounds = array<i64: 1, 512>}, {pipeline_mode = #tpu.pipeline_mode<synchronous>, transform_indices = @transform_7, window_bounds = array<i64: 512, 128>}, {pipeline_mode = #tpu.pipeline_mode<synchronous>, transform_indices = @transform_8, window_bounds = array<i64: 1, 128>}, {transform_indices = @transform_9, window_bounds = array<i64: 16, 128>}]} {
    %c0 = arith.constant 0 : index
    %c0_0 = arith.constant 0 : index
    %0 = vector.load %arg1[%c0, %c0_0] : memref<16x128xf32, #tpu.memory_space<vmem>>, vector<16x128xf32>
    %c0_1 = arith.constant 0 : index
    %c0_2 = arith.constant 0 : index
    %1 = vector.load %arg2[%c0_1, %c0_2] : memref<128x128xf32, #tpu.memory_space<vmem>>, vector<128x128xf32>
    %cst = arith.constant dense<0.000000e+00> : vector<16x128xf32>
    %2 = tpu.matmul %0, %1, %cst {dimension_numbers = #tpu.dot_dimension_numbers<[1], [0], [0], [1], [0, 0, 1, 1], [], []>} : vector<16x128xf32>, vector<128x128xf32>, vector<16x128xf32> -> vector<16x128xf32>
    %c0_3 = arith.constant 0 : index
    %c0_4 = arith.constant 0 : index
    %3 = vector.load %arg3[%c0_3, %c0_4] : memref<1x128xf32, #tpu.memory_space<vmem>>, vector<1x128xf32>
    %4 = vector.broadcast %3 : vector<1x128xf32> to vector<16x128xf32>
    %5 = arith.addf %2, %4 : vector<16x128xf32>
    %cst_5 = arith.constant 0.000000e+00 : f32
    %6 = vector.broadcast %cst_5 : f32 to vector<16x128xf32>
    %7 = arith.maximumf %5, %6 : vector<16x128xf32>
    %c0_6 = arith.constant 0 : index
    %c0_7 = arith.constant 0 : index
    %8 = vector.load %arg4[%c0_6, %c0_7] : memref<128x2048xf32, #tpu.memory_space<vmem>>, vector<128x2048xf32>
    %cst_8 = arith.constant dense<0.000000e+00> : vector<16x2048xf32>
    %9 = tpu.matmul %7, %8, %cst_8 {dimension_numbers = #tpu.dot_dimension_numbers<[1], [0], [0], [1], [0, 0, 1, 1], [], []>} : vector<16x128xf32>, vector<128x2048xf32>, vector<16x2048xf32> -> vector<16x2048xf32>
    %c0_9 = arith.constant 0 : index
    %c0_10 = arith.constant 0 : index
    %10 = vector.load %arg5[%c0_9, %c0_10] : memref<1x2048xf32, #tpu.memory_space<vmem>>, vector<1x2048xf32>
    %11 = vector.broadcast %10 : vector<1x2048xf32> to vector<16x2048xf32>
    %12 = arith.addf %9, %11 : vector<16x2048xf32>
    %cst_11 = arith.constant 0.000000e+00 : f32
    %13 = vector.broadcast %cst_11 : f32 to vector<16x2048xf32>
    %14 = arith.maximumf %12, %13 : vector<16x2048xf32>
    %c0_12 = arith.constant 0 : index
    %c0_13 = arith.constant 0 : index
    %15 = vector.load %arg6[%c0_12, %c0_13] : memref<2048x512xf32, #tpu.memory_space<vmem>>, vector<2048x512xf32>
    %cst_14 = arith.constant dense<0.000000e+00> : vector<16x512xf32>
    %16 = tpu.matmul %14, %15, %cst_14 {dimension_numbers = #tpu.dot_dimension_numbers<[1], [0], [0], [1], [0, 0, 1, 1], [], []>} : vector<16x2048xf32>, vector<2048x512xf32>, vector<16x512xf32> -> vector<16x512xf32>
    %c0_15 = arith.constant 0 : index
    %c0_16 = arith.constant 0 : index
    %17 = vector.load %arg7[%c0_15, %c0_16] : memref<1x512xf32, #tpu.memory_space<vmem>>, vector<1x512xf32>
    %18 = vector.broadcast %17 : vector<1x512xf32> to vector<16x512xf32>
    %19 = arith.addf %16, %18 : vector<16x512xf32>
    %cst_17 = arith.constant 0.000000e+00 : f32
    %20 = vector.broadcast %cst_17 : f32 to vector<16x512xf32>
    %21 = arith.maximumf %19, %20 : vector<16x512xf32>
    %c0_18 = arith.constant 0 : index
    %c0_19 = arith.constant 0 : index
    %22 = vector.load %arg8[%c0_18, %c0_19] : memref<512x128xf32, #tpu.memory_space<vmem>>, vector<512x128xf32>
    %cst_20 = arith.constant dense<0.000000e+00> : vector<16x128xf32>
    %23 = tpu.matmul %21, %22, %cst_20 {dimension_numbers = #tpu.dot_dimension_numbers<[1], [0], [0], [1], [0, 0, 1, 1], [], []>} : vector<16x512xf32>, vector<512x128xf32>, vector<16x128xf32> -> vector<16x128xf32>
    %c0_21 = arith.constant 0 : index
    %c0_22 = arith.constant 0 : index
    %24 = vector.load %arg9[%c0_21, %c0_22] : memref<1x128xf32, #tpu.memory_space<vmem>>, vector<1x128xf32>
    %25 = vector.broadcast %24 : vector<1x128xf32> to vector<16x128xf32>
    %26 = arith.addf %23, %25 : vector<16x128xf32>
    %cst_23 = arith.constant 0.000000e+00 : f32
    %27 = vector.broadcast %cst_23 : f32 to vector<16x128xf32>
    %28 = arith.cmpf ogt, %26, %27 : vector<16x128xf32>
    %cst_24 = arith.constant 0.00999999977 : f32
    %29 = vector.broadcast %cst_24 : f32 to vector<16x128xf32>
    %30 = arith.mulf %29, %26 : vector<16x128xf32>
    %31 = arith.select %28, %26, %30 : vector<16x128xi1>, vector<16x128xf32>
    %c0_25 = arith.constant 0 : index
    %c0_26 = arith.constant 0 : index
    %32 = vector.load %arg10[%c0_25, %c0_26] : memref<16x128xf32, #tpu.memory_space<vmem>>, vector<16x128xf32>
    tpu.vector_store %arg10[%c0_25, %c0_26], %31 {strides = array<i32>} : memref<16x128xf32, #tpu.memory_space<vmem>>, vector<16x128xf32>,
    return
  }
  func.func @transform_0(%arg0: i32) -> (i32, i32) {
    %c0_i32 = arith.constant 0 : i32
    %c0_i32_0 = arith.constant 0 : i32
    return %arg0, %c0_i32 : i32, i32
  }
  func.func @transform_1(%arg0: i32) -> (i32, i32) {
    %c0_i32 = arith.constant 0 : i32
    %c0_i32_0 = arith.constant 0 : i32
    %c0_i32_1 = arith.constant 0 : i32
    return %c0_i32, %c0_i32_0 : i32, i32
  }
  func.func @transform_2(%arg0: i32) -> (i32, i32) {
    %c0_i32 = arith.constant 0 : i32
    %c0_i32_0 = arith.constant 0 : i32
    %c0_i32_1 = arith.constant 0 : i32
    return %c0_i32, %c0_i32_0 : i32, i32
  }
  func.func @transform_3(%arg0: i32) -> (i32, i32) {
    %c0_i32 = arith.constant 0 : i32
    %c0_i32_0 = arith.constant 0 : i32
    %c0_i32_1 = arith.constant 0 : i32
    return %c0_i32, %c0_i32_0 : i32, i32
  }
  func.func @transform_4(%arg0: i32) -> (i32, i32) {
    %c0_i32 = arith.constant 0 : i32
    %c0_i32_0 = arith.constant 0 : i32
    %c0_i32_1 = arith.constant 0 : i32
    return %c0_i32, %c0_i32_0 : i32, i32
  }
  func.func @transform_5(%arg0: i32) -> (i32, i32) {
    %c0_i32 = arith.constant 0 : i32
    %c0_i32_0 = arith.constant 0 : i32
    %c0_i32_1 = arith.constant 0 : i32
    return %c0_i32, %c0_i32_0 : i32, i32
  }
  func.func @transform_6(%arg0: i32) -> (i32, i32) {
    %c0_i32 = arith.constant 0 : i32
    %c0_i32_0 = arith.constant 0 : i32
    %c0_i32_1 = arith.constant 0 : i32
    return %c0_i32, %c0_i32_0 : i32, i32
  }
  func.func @transform_7(%arg0: i32) -> (i32, i32) {
    %c0_i32 = arith.constant 0 : i32
    %c0_i32_0 = arith.constant 0 : i32
    %c0_i32_1 = arith.constant 0 : i32
    return %c0_i32, %c0_i32_0 : i32, i32
  }
  func.func @transform_8(%arg0: i32) -> (i32, i32) {
    %c0_i32 = arith.constant 0 : i32
    %c0_i32_0 = arith.constant 0 : i32
    %c0_i32_1 = arith.constant 0 : i32
    return %c0_i32, %c0_i32_0 : i32, i32
  }
  func.func @transform_9(%arg0: i32) -> (i32, i32) {
    %c0_i32 = arith.constant 0 : i32
    %c0_i32_0 = arith.constant 0 : i32
    return %arg0, %c0_i32 : i32, i32
  }
}

</mosaic_0001>

<llo_original>
// kernel: tpu_custom_call.1
$region0: #{tpu_custom_call.1}
  #allocation0 [shape = 'u32[]', space=smem, size = 0x4, offset = 0x4, fixed_abs, tag = 'smem constant byte address 0x4 - core index']
  #allocation1 [shape = 'u32[72,128]{1,0:T(1,128)}', space=vmem, size = 0x9000, scoped, tag = 'internal scratch']
  %s0 = inlined_call_operand.hbm [shape: f32[16,128], index: 0, kind: input, shape index: {}]
  %s1 = inlined_call_operand.hbm [shape: f32[128,128], index: 1, kind: input, shape index: {}]
  %s2 = inlined_call_operand.hbm [shape: f32[1,128], index: 2, kind: input, shape index: {}]
  %s3 = inlined_call_operand.hbm [shape: f32[128,2048], index: 3, kind: input, shape index: {}]
  %s4 = inlined_call_operand.hbm [shape: f32[1,2048], index: 4, kind: input, shape index: {}]
  %s5 = inlined_call_operand.hbm [shape: f32[2048,512], index: 5, kind: input, shape index: {}]
  %s6 = inlined_call_operand.hbm [shape: f32[1,512], index: 6, kind: input, shape index: {}]
  %s7 = inlined_call_operand.hbm [shape: f32[512,128], index: 7, kind: input, shape index: {}]
  %s8 = inlined_call_operand.hbm [shape: f32[1,128], index: 8, kind: input, shape index: {}]
  %s9 = inlined_call_operand.hbm [shape: f32[16,128], index: 9, kind: output, shape index: {}]
  %s10 = sld [smem:[#allocation0]]
  $region82: #{tpu_custom_call.1} parent=0
    _
  %s12 = ssub.s32 1, %s10
  %s13 = scalar_select 0, %s12, %s10
  $region1: #{tpu_custom_call.1} parent=0
    #allocation2 [shape = 'u8[8192]{0}', space=vmem, size = 0x2000, scoped, tag = 'input window, operand 0, single buffered']
    #allocation3 [shape = 's32[1]{0}', space=sflag, size = 0x4, scoped, tag = 'scoped memory for tpu_custom_call.1']
    #allocation4 [shape = 's32[1]{0}', space=sflag, size = 0x4, scoped, tag = 'scoped memory for tpu_custom_call.1']
    #allocation5 [shape = 'u8[65536]{0}', space=vmem, size = 0x10000, scoped, tag = 'input window, operand 1, single buffered']
    #allocation6 [shape = 's32[1]{0}', space=sflag, size = 0x4, scoped, tag = 'scoped memory for tpu_custom_call.1']
    #allocation7 [shape = 'u8[512]{0}', space=vmem, size = 0x400, scoped, tag = 'input window, operand 2, single buffered']
    #allocation8 [shape = 'u8[1048576]{0}', space=vmem, size = 0x100000, scoped, tag = 'input window, operand 3, single buffered']
    #allocation9 [shape = 's32[1]{0}', space=sflag, size = 0x4, scoped, tag = 'scoped memory for tpu_custom_call.1']
    #allocation10 [shape = 'u8[8192]{0}', space=vmem, size = 0x2000, scoped, tag = 'input window, operand 4, single buffered']
    #allocation11 [shape = 'u8[4194304]{0}', space=vmem, size = 0x400000, scoped, tag = 'input window, operand 5, single buffered']
    #allocation12 [shape = 's32[1]{0}', space=sflag, size = 0x4, scoped, tag = 'scoped memory for tpu_custom_call.1']
    #allocation13 [shape = 'u8[2048]{0}', space=vmem, size = 0x800, scoped, tag = 'input window, operand 6, single buffered']
    #allocation14 [shape = 'u8[262144]{0}', space=vmem, size = 0x40000, scoped, tag = 'input window, operand 7, single buffered']
    #allocation15 [shape = 's32[1]{0}', space=sflag, size = 0x4, scoped, tag = 'scoped memory for tpu_custom_call.1']
    #allocation16 [shape = 'u8[512]{0}', space=vmem, size = 0x400, scoped, tag = 'input window, operand 8, single buffered']
    #allocation17 [shape = 'u8[8192]{0}', space=vmem, size = 0x2000, scoped, tag = 'output window, operand 0, single buffered']
    %14 = vsyncpa [#allocation3], 0
    %15 = vsyncpa [#allocation6], 0
    %16 = vsyncpa [#allocation9], 0
    %17 = vsyncpa [#allocation12], 0
    %18 = vsyncpa [#allocation15], 0
    %19 = vsyncpa [#allocation4], 0
    // Predicated region
    $region2: #{tpu_custom_call.1} parent=1 // pred_check
      _
    $region3: #{tpu_custom_call.1} parent=1 // pred_check_branch
      %21 = sbr.rel (0) target = $region5
    $region4: #{tpu_custom_call.1} parent=1 // pred_region
      %23 = vsyncadd [#allocation3], 0
      %s24 = sshll.u32 %s0, 4
      %s25 = int_to_ptr.hbm [resolvable:$true] %s24
      %s26 = sshll.u32 [#allocation2], 4
      %s27 = int_to_ptr.vmem [resolvable:$true] %s26
      %32 = dma.hbm_to_vmem [thread:$0]  %s25, 256, %s27, [#allocation3], 128, 128, 8
    $region5: #{tpu_custom_call.1} parent=1 // pred_fallthru
      _
    // Predicated region
    $region6: #{tpu_custom_call.1} parent=1 // pred_check
      _
    $region7: #{tpu_custom_call.1} parent=1 // pred_check_branch
      %34 = sbr.rel (0) target = $region9
    $region8: #{tpu_custom_call.1} parent=1 // pred_region
      %36 = vsyncadd [#allocation6], 0
      %s37 = sshll.u32 %s1, 4
      %s38 = int_to_ptr.hbm [resolvable:$true] %s37
      %s39 = sshll.u32 [#allocation5], 4
      %s40 = int_to_ptr.vmem [resolvable:$true] %s39
      %45 = dma.hbm_to_vmem [thread:$0]  %s38, 2048, %s40, [#allocation6], 128, 128, 8
    $region9: #{tpu_custom_call.1} parent=1 // pred_fallthru
      _
    // Predicated region
    $region10: #{tpu_custom_call.1} parent=1 // pred_check
      _
    $region11: #{tpu_custom_call.1} parent=1 // pred_check_branch
      %47 = sbr.rel (0) target = $region13
    $region12: #{tpu_custom_call.1} parent=1 // pred_region
      %49 = vsyncadd [#allocation6], 0
      %s51 = sshll.u32 %s2, 4
      %s52 = int_to_ptr.hbm [resolvable:$true] %s51
      %s53 = sshll.u32 [#allocation7], 4
      %s54 = int_to_ptr.vmem [resolvable:$true] %s53
      %56 = dma.hbm_to_vmem [thread:$0]  %s52, 16, %s54, [#allocation6]
    $region13: #{tpu_custom_call.1} parent=1 // pred_fallthru
      _
    // Predicated region
    $region14: #{tpu_custom_call.1} parent=1 // pred_check
      _
    $region15: #{tpu_custom_call.1} parent=1 // pred_check_branch
      %58 = sbr.rel (0) target = $region17
    $region16: #{tpu_custom_call.1} parent=1 // pred_region
      %60 = vsyncadd [#allocation9], 0
      %s61 = sshll.u32 %s3, 4
      %s62 = int_to_ptr.hbm [resolvable:$true] %s61
      %s63 = sshll.u32 [#allocation8], 4
      %s64 = int_to_ptr.vmem [resolvable:$true] %s63
      %69 = dma.hbm_to_vmem [thread:$0]  %s62, 32768, %s64, [#allocation9], 2048, 2048, 128
    $region17: #{tpu_custom_call.1} parent=1 // pred_fallthru
      _
    // Predicated region
    $region18: #{tpu_custom_call.1} parent=1 // pred_check
      _
    $region19: #{tpu_custom_call.1} parent=1 // pred_check_branch
      %71 = sbr.rel (0) target = $region21
    $region20: #{tpu_custom_call.1} parent=1 // pred_region
      %73 = vsyncadd [#allocation9], 0
      %s75 = sshll.u32 %s4, 4
      %s76 = int_to_ptr.hbm [resolvable:$true] %s75
      %s77 = sshll.u32 [#allocation10], 4
      %s78 = int_to_ptr.vmem [resolvable:$true] %s77
      %80 = dma.hbm_to_vmem [thread:$0]  %s76, 256, %s78, [#allocation9]
    $region21: #{tpu_custom_call.1} parent=1 // pred_fallthru
      _
    // Predicated region
    $region22: #{tpu_custom_call.1} parent=1 // pred_check
      _
    $region23: #{tpu_custom_call.1} parent=1 // pred_check_branch
      %82 = sbr.rel (0) target = $region25
    $region24: #{tpu_custom_call.1} parent=1 // pred_region
      %84 = vsyncadd [#allocation12], 0
      %s85 = sshll.u32 %s5, 4
      %s86 = int_to_ptr.hbm [resolvable:$true] %s85
      %s87 = sshll.u32 [#allocation11], 4
      %s88 = int_to_ptr.vmem [resolvable:$true] %s87
      %93 = dma.hbm_to_vmem [thread:$0]  %s86, 131072, %s88, [#allocation12], 512, 512, 32
    $region25: #{tpu_custom_call.1} parent=1 // pred_fallthru
      _
    // Predicated region
    $region26: #{tpu_custom_call.1} parent=1 // pred_check
      _
    $region27: #{tpu_custom_call.1} parent=1 // pred_check_branch
      %95 = sbr.rel (0) target = $region29
    $region28: #{tpu_custom_call.1} parent=1 // pred_region
      %97 = vsyncadd [#allocation12], 0
      %s99 = sshll.u32 %s6, 4
      %s100 = int_to_ptr.hbm [resolvable:$true] %s99
      %s101 = sshll.u32 [#allocation13], 4
      %s102 = int_to_ptr.vmem [resolvable:$true] %s101
      %104 = dma.hbm_to_vmem [thread:$0]  %s100, 64, %s102, [#allocation12]
    $region29: #{tpu_custom_call.1} parent=1 // pred_fallthru
      _
    // Predicated region
    $region30: #{tpu_custom_call.1} parent=1 // pred_check
      _
    $region31: #{tpu_custom_call.1} parent=1 // pred_check_branch
      %106 = sbr.rel (0) target = $region33
    $region32: #{tpu_custom_call.1} parent=1 // pred_region
      %108 = vsyncadd [#allocation15], 0
      %s109 = sshll.u32 %s7, 4
      %s110 = int_to_ptr.hbm [resolvable:$true] %s109
      %s111 = sshll.u32 [#allocation14], 4
      %s112 = int_to_ptr.vmem [resolvable:$true] %s111
      %117 = dma.hbm_to_vmem [thread:$0]  %s110, 8192, %s112, [#allocation15], 128, 128, 8
    $region33: #{tpu_custom_call.1} parent=1 // pred_fallthru
      _
    // Predicated region
    $region34: #{tpu_custom_call.1} parent=1 // pred_check
      _
    $region35: #{tpu_custom_call.1} parent=1 // pred_check_branch
      %119 = sbr.rel (0) target = $region37
    $region36: #{tpu_custom_call.1} parent=1 // pred_region
      %121 = vsyncadd [#allocation15], 0
      %s123 = sshll.u32 %s8, 4
      %s124 = int_to_ptr.hbm [resolvable:$true] %s123
      %s125 = sshll.u32 [#allocation16], 4
      %s126 = int_to_ptr.vmem [resolvable:$true] %s125
      %128 = dma.hbm_to_vmem [thread:$0]  %s124, 16, %s126, [#allocation15]
    $region37: #{tpu_custom_call.1} parent=1 // pred_fallthru
      _
    // Predicated region
    $region38: #{tpu_custom_call.1} parent=1 // pred_check
      _
    $region39: #{tpu_custom_call.1} parent=1 // pred_check_branch
      %130 = sbr.rel (0) target = $region41
    $region40: #{tpu_custom_call.1} parent=1 // pred_region
      %132 = dma.done [#allocation3], 256
    $region41: #{tpu_custom_call.1} parent=1 // pred_fallthru
      _
    // Predicated region
    $region42: #{tpu_custom_call.1} parent=1 // pred_check
      _
    $region43: #{tpu_custom_call.1} parent=1 // pred_check_branch
      %134 = sbr.rel (0) target = $region45
    $region44: #{tpu_custom_call.1} parent=1 // pred_region
      %136 = dma.done [#allocation6], 2048
    $region45: #{tpu_custom_call.1} parent=1 // pred_fallthru
      _
    // Predicated region
    $region46: #{tpu_custom_call.1} parent=1 // pred_check
      _
    $region47: #{tpu_custom_call.1} parent=1 // pred_check_branch
      %138 = sbr.rel (0) target = $region49
    $region48: #{tpu_custom_call.1} parent=1 // pred_region
      %140 = dma.done [#allocation6], 16
    $region49: #{tpu_custom_call.1} parent=1 // pred_fallthru
      _
    // Predicated region
    $region50: #{tpu_custom_call.1} parent=1 // pred_check
      _
    $region51: #{tpu_custom_call.1} parent=1 // pred_check_branch
      %142 = sbr.rel (0) target = $region53
    $region52: #{tpu_custom_call.1} parent=1 // pred_region
      %144 = dma.done [#allocation9], 32768
    $region53: #{tpu_custom_call.1} parent=1 // pred_fallthru
      _
    // Predicated region
    $region54: #{tpu_custom_call.1} parent=1 // pred_check
      _
    $region55: #{tpu_custom_call.1} parent=1 // pred_check_branch
      %146 = sbr.rel (0) target = $region57
    $region56: #{tpu_custom_call.1} parent=1 // pred_region
      %148 = dma.done [#allocation9], 256
    $region57: #{tpu_custom_call.1} parent=1 // pred_fallthru
      _
    // Predicated region
    $region58: #{tpu_custom_call.1} parent=1 // pred_check
      _
    $region59: #{tpu_custom_call.1} parent=1 // pred_check_branch
      %150 = sbr.rel (0) target = $region61
    $region60: #{tpu_custom_call.1} parent=1 // pred_region
      %152 = dma.done [#allocation12], 131072
    $region61: #{tpu_custom_call.1} parent=1 // pred_fallthru
      _
    // Predicated region
    $region62: #{tpu_custom_call.1} parent=1 // pred_check
      _
    $region63: #{tpu_custom_call.1} parent=1 // pred_check_branch
      %154 = sbr.rel (0) target = $region65
    $region64: #{tpu_custom_call.1} parent=1 // pred_region
      %156 = dma.done [#allocation12], 64
    $region65: #{tpu_custom_call.1} parent=1 // pred_fallthru
      _
    // Predicated region
    $region66: #{tpu_custom_call.1} parent=1 // pred_check
      _
    $region67: #{tpu_custom_call.1} parent=1 // pred_check_branch
      %158 = sbr.rel (0) target = $region69
    $region68: #{tpu_custom_call.1} parent=1 // pred_region
      %160 = dma.done [#allocation15], 8192
    $region69: #{tpu_custom_call.1} parent=1 // pred_fallthru
      _
    // Predicated region
    $region70: #{tpu_custom_call.1} parent=1 // pred_check
      _
    $region71: #{tpu_custom_call.1} parent=1 // pred_check_branch
      %162 = sbr.rel (0) target = $region73
    $region72: #{tpu_custom_call.1} parent=1 // pred_region
      %164 = dma.done [#allocation15], 16
    $region73: #{tpu_custom_call.1} parent=1 // pred_fallthru
      _
    %v165 = vld [vmem:[#allocation2] sm:$0xff]
    %v166 = vld [vmem:[#allocation2 + $0x8] sm:$0xff]
    %v167 = vld [vmem:[#allocation5] sm:$0xff]
    %v168 = vld [vmem:[#allocation5 + $0x8] sm:$0xff]
    %v169 = vld [vmem:[#allocation5 + $0x10] sm:$0xff]
    %v170 = vld [vmem:[#allocation5 + $0x18] sm:$0xff]
    %v171 = vld [vmem:[#allocation5 + $0x20] sm:$0xff]
    %v172 = vld [vmem:[#allocation5 + $0x28] sm:$0xff]
    %v173 = vld [vmem:[#allocation5 + $0x30] sm:$0xff]
    %v174 = vld [vmem:[#allocation5 + $0x38] sm:$0xff]
    %v175 = vld [vmem:[#allocation5 + $0x40] sm:$0xff]
    %v176 = vld [vmem:[#allocation5 + $0x48] sm:$0xff]
    %v177 = vld [vmem:[#allocation5 + $0x50] sm:$0xff]
    %v178 = vld [vmem:[#allocation5 + $0x58] sm:$0xff]
    %v179 = vld [vmem:[#allocation5 + $0x60] sm:$0xff]
    %v180 = vld [vmem:[#allocation5 + $0x68] sm:$0xff]
    %v181 = vld [vmem:[#allocation5 + $0x70] sm:$0xff]
    %v182 = vld [vmem:[#allocation5 + $0x78] sm:$0xff]
    %v183 = vld [vmem:[#allocation7] sm:$0x1]
    %v185 = vperm.slane %v183, 0
    %187 = vmatpush.msra.mxu0 %v182
    %188 = vmatpush.msra.mxu0 %v181
    %189 = vmatpush.msra.mxu0 %v180
    %190 = vmatpush.msra.mxu0 %v179
    %191 = vmatpush.msra.mxu0 %v178
    %192 = vmatpush.msra.mxu0 %v177
    %193 = vmatpush.msra.mxu0 %v176
    %194 = vmatpush.msra.mxu0 %v175
    %195 = vmatpush.msra.mxu0 %v174
    %196 = vmatpush.msra.mxu0 %v173
    %197 = vmatpush.msra.mxu0 %v172
    %198 = vmatpush.msra.mxu0 %v171
    %199 = vmatpush.msra.mxu0 %v170
    %200 = vmatpush.msra.mxu0 %v169
    %201 = vmatpush.msra.mxu0 %v168
    %202 = vmatpush.msra.mxu0 %v167
    %203 = vmatmul.f32.gmra.mxu0 %v165
    %v204 = vpop.f32.mrf.mxu0
    %v205 = vadd.f32 %v185, %v204
    %206 = vmatmul.f32.gmra.mxu0 %v166
    %v207 = vpop.f32.mrf.mxu0
    %v208 = vadd.f32 %v185, %v207
    %209 = vdwg.mxu0
    %v210 = vmax.f32 %v205, 0.0
    %v211 = vmax.f32 %v208, 0.0
    %v212 = vld [vmem:[#allocation8] sm:$0xff]
    %v213 = vld [vmem:[#allocation8 + $0x8] sm:$0xff]
    %v214 = vld [vmem:[#allocation8 + $0x10] sm:$0xff]
    %v215 = vld [vmem:[#allocation8 + $0x18] sm:$0xff]
    %v216 = vld [vmem:[#allocation8 + $0x20] sm:$0xff]
    %v217 = vld [vmem:[#allocation8 + $0x28] sm:$0xff]
    %v218 = vld [vmem:[#allocation8 + $0x30] sm:$0xff]
    %v219 = vld [vmem:[#allocation8 + $0x38] sm:$0xff]
    %v220 = vld [vmem:[#allocation8 + $0x40] sm:$0xff]
    %v221 = vld [vmem:[#allocation8 + $0x48] sm:$0xff]
    %v222 = vld [vmem:[#allocation8 + $0x50] sm:$0xff]
    %v223 = vld [vmem:[#allocation8 + $0x58] sm:$0xff]
    %v224 = vld [vmem:[#allocation8 + $0x60] sm:$0xff]
    %v225 = vld [vmem:[#allocation8 + $0x68] sm:$0xff]
    %v226 = vld [vmem:[#allocation8 + $0x70] sm:$0xff]
    %v227 = vld [vmem:[#allocation8 + $0x78] sm:$0xff]
    %v228 = vld [vmem:[#allocation8 + $0x80] sm:$0xff]
    %v229 = vld [vmem:[#allocation8 + $0x88] sm:$0xff]
    %v230 = vld [vmem:[#allocation8 + $0x90] sm:$0xff]
    %v231 = vld [vmem:[#allocation8 + $0x98] sm:$0xff]
    %v232 = vld [vmem:[#allocation8 + $0xa0] sm:$0xff]
    %v233 = vld [vmem:[#allocation8 + $0xa8] sm:$0xff]
    %v234 = vld [vmem:[#allocation8 + $0xb0] sm:$0xff]
    %v235 = vld [vmem:[#allocation8 + $0xb8] sm:$0xff]
    %v236 = vld [vmem:[#allocation8 + $0xc0] sm:$0xff]
    %v237 = vld [vmem:[#allocation8 + $0xc8] sm:$0xff]
    %v238 = vld [vmem:[#allocation8 + $0xd0] sm:$0xff]
    %v239 = vld [vmem:[#allocation8 + $0xd8] sm:$0xff]
    %v240 = vld [vmem:[#allocation8 + $0xe0] sm:$0xff]
    %v241 = vld [vmem:[#allocation8 + $0xe8] sm:$0xff]
    %v242 = vld [vmem:[#allocation8 + $0xf0] sm:$0xff]
    %v243 = vld [vmem:[#allocation8 + $0xf8] sm:$0xff]
    %v244 = vld [vmem:[#allocation8 + $0x100] sm:$0xff]
    %v245 = vld [vmem:[#allocation8 + $0x108] sm:$0xff]
    %v246 = vld [vmem:[#allocation8 + $0x110] sm:$0xff]
    %v247 = vld [vmem:[#allocation8 + $0x118] sm:$0xff]
    %v248 = vld [vmem:[#allocation8 + $0x120] sm:$0xff]
    %v249 = vld [vmem:[#allocation8 + $0x128] sm:$0xff]
    %v250 = vld [vmem:[#allocation8 + $0x130] sm:$0xff]
    %v251 = vld [vmem:[#allocation8 + $0x138] sm:$0xff]
    %v252 = vld [vmem:[#allocation8 + $0x140] sm:$0xff]
    %v253 = vld [vmem:[#allocation8 + $0x148] sm:$0xff]
    %v254 = vld [vmem:[#allocation8 + $0x150] sm:$0xff]
    %v255 = vld [vmem:[#allocation8 + $0x158] sm:$0xff]
    %v256 = vld [vmem:[#allocation8 + $0x160] sm:$0xff]
    %v257 = vld [vmem:[#allocation8 + $0x168] sm:$0xff]
    %v258 = vld [vmem:[#allocation8 + $0x170] sm:$0xff]
    %v259 = vld [vmem:[#allocation8 + $0x178] sm:$0xff]
    %v260 = vld [vmem:[#allocation8 + $0x180] sm:$0xff]
    %v261 = vld [vmem:[#allocation8 + $0x188] sm:$0xff]
    %v262 = vld [vmem:[#allocation8 + $0x190] sm:$0xff]
    %v263 = vld [vmem:[#allocation8 + $0x198] sm:$0xff]
    %v264 = vld [vmem:[#allocation8 + $0x1a0] sm:$0xff]
    %v265 = vld [vmem:[#allocation8 + $0x1a8] sm:$0xff]
    %v266 = vld [vmem:[#allocation8 + $0x1b0] sm:$0xff]
    %v267 = vld [vmem:[#allocation8 + $0x1b8] sm:$0xff]
    %v268 = vld [vmem:[#allocation8 + $0x1c0] sm:$0xff]
    %v269 = vld [vmem:[#allocation8 + $0x1c8] sm:$0xff]
    %v270 = vld [vmem:[#allocation8 + $0x1d0] sm:$0xff]
    %v271 = vld [vmem:[#allocation8 + $0x1d8] sm:$0xff]
    %v272 = vld [vmem:[#allocation8 + $0x1e0] sm:$0xff]
    %v273 = vld [vmem:[#allocation8 + $0x1e8] sm:$0xff]
    %v274 = vld [vmem:[#allocation8 + $0x1f0] sm:$0xff]
    %v275 = vld [vmem:[#allocation8 + $0x1f8] sm:$0xff]
    %v276 = vld [vmem:[#allocation8 + $0x200] sm:$0xff]
    %v277 = vld [vmem:[#allocation8 + $0x208] sm:$0xff]
    %v278 = vld [vmem:[#allocation8 + $0x210] sm:$0xff]
    %v279 = vld [vmem:[#allocation8 + $0x218] sm:$0xff]
    %v280 = vld [vmem:[#allocation8 + $0x220] sm:$0xff]
    %v281 = vld [vmem:[#allocation8 + $0x228] sm:$0xff]
    %v282 = vld [vmem:[#allocation8 + $0x230] sm:$0xff]
    %v283 = vld [vmem:[#allocation8 + $0x238] sm:$0xff]
    %v284 = vld [vmem:[#allocation8 + $0x240] sm:$0xff]
    %v285 = vld [vmem:[#allocation8 + $0x248] sm:$0xff]
    %v286 = vld [vmem:[#allocation8 + $0x250] sm:$0xff]
    %v287 = vld [vmem:[#allocation8 + $0x258] sm:$0xff]
    %v288 = vld [vmem:[#allocation8 + $0x260] sm:$0xff]
    %v289 = vld [vmem:[#allocation8 + $0x268] sm:$0xff]
    %v290 = vld [vmem:[#allocation8 + $0x270] sm:$0xff]
    %v291 = vld [vmem:[#allocation8 + $0x278] sm:$0xff]
    %v292 = vld [vmem:[#allocation8 + $0x280] sm:$0xff]
    %v293 = vld [vmem:[#allocation8 + $0x288] sm:$0xff]
    %v294 = vld [vmem:[#allocation8 + $0x290] sm:$0xff]
    %v295 = vld [vmem:[#allocation8 + $0x298] sm:$0xff]
    %v296 = vld [vmem:[#allocation8 + $0x2a0] sm:$0xff]
    %v297 = vld [vmem:[#allocation8 + $0x2a8] sm:$0xff]
    %v298 = vld [vmem:[#allocation8 + $0x2b0] sm:$0xff]
    %v299 = vld [vmem:[#allocation8 + $0x2b8] sm:$0xff]
    %v300 = vld [vmem:[#allocation8 + $0x2c0] sm:$0xff]
    %v301 = vld [vmem:[#allocation8 + $0x2c8] sm:$0xff]
    %v302 = vld [vmem:[#allocation8 + $0x2d0] sm:$0xff]
    %v303 = vld [vmem:[#allocation8 + $0x2d8] sm:$0xff]
    %v304 = vld [vmem:[#allocation8 + $0x2e0] sm:$0xff]
    %v305 = vld [vmem:[#allocation8 + $0x2e8] sm:$0xff]
    %v306 = vld [vmem:[#allocation8 + $0x2f0] sm:$0xff]
    %v307 = vld [vmem:[#allocation8 + $0x2f8] sm:$0xff]
    %v308 = vld [vmem:[#allocation8 + $0x300] sm:$0xff]
    %v309 = vld [vmem:[#allocation8 + $0x308] sm:$0xff]
    %v310 = vld [vmem:[#allocation8 + $0x310] sm:$0xff]
    %v311 = vld [vmem:[#allocation8 + $0x318] sm:$0xff]
    %v312 = vld [vmem:[#allocation8 + $0x320] sm:$0xff]
    %v313 = vld [vmem:[#allocation8 + $0x328] sm:$0xff]
    %v314 = vld [vmem:[#allocation8 + $0x330] sm:$0xff]
    %v315 = vld [vmem:[#allocation8 + $0x338] sm:$0xff]
    %v316 = vld [vmem:[#allocation8 + $0x340] sm:$0xff]
    %v317 = vld [vmem:[#allocation8 + $0x348] sm:$0xff]
    %v318 = vld [vmem:[#allocation8 + $0x350] sm:$0xff]
    %v319 = vld [vmem:[#allocation8 + $0x358] sm:$0xff]
    %v320 = vld [vmem:[#allocation8 + $0x360] sm:$0xff]
    %v321 = vld [vmem:[#allocation8 + $0x368] sm:$0xff]
    %v322 = vld [vmem:[#allocation8 + $0x370] sm:$0xff]
    %v323 = vld [vmem:[#allocation8 + $0x378] sm:$0xff]
    %v324 = vld [vmem:[#allocation8 + $0x380] sm:$0xff]
    %v325 = vld [vmem:[#allocation8 + $0x388] sm:$0xff]
    %v326 = vld [vmem:[#allocation8 + $0x390] sm:$0xff]
    %v327 = vld [vmem:[#allocation8 + $0x398] sm:$0xff]
    %v328 = vld [vmem:[#allocation8 + $0x3a0] sm:$0xff]
    %v329 = vld [vmem:[#allocation8 + $0x3a8] sm:$0xff]
    %v330 = vld [vmem:[#allocation8 + $0x3b0] sm:$0xff]
    %v331 = vld [vmem:[#allocation8 + $0x3b8] sm:$0xff]
    %v332 = vld [vmem:[#allocation8 + $0x3c0] sm:$0xff]
    %v333 = vld [vmem:[#allocation8 + $0x3c8] sm:$0xff]
    %v334 = vld [vmem:[#allocation8 + $0x3d0] sm:$0xff]
    %v335 = vld [vmem:[#allocation8 + $0x3d8] sm:$0xff]
    %v336 = vld [vmem:[#allocation8 + $0x3e0] sm:$0xff]
    %v337 = vld [vmem:[#allocation8 + $0x3e8] sm:$0xff]
    %v338 = vld [vmem:[#allocation8 + $0x3f0] sm:$0xff]
    %v339 = vld [vmem:[#allocation8 + $0x3f8] sm:$0xff]
    %v340 = vld [vmem:[#allocation8 + $0x400] sm:$0xff]
    %v341 = vld [vmem:[#allocation8 + $0x408] sm:$0xff]
    %v342 = vld [vmem:[#allocation8 + $0x410] sm:$0xff]
    %v343 = vld [vmem:[#allocation8 + $0x418] sm:$0xff]
    %v344 = vld [vmem:[#allocation8 + $0x420] sm:$0xff]
    %v345 = vld [vmem:[#allocation8 + $0x428] sm:$0xff]
    %v346 = vld [vmem:[#allocation8 + $0x430] sm:$0xff]
    %v347 = vld [vmem:[#allocation8 + $0x438] sm:$0xff]
    %v348 = vld [vmem:[#allocation8 + $0x440] sm:$0xff]
    %v349 = vld [vmem:[#allocation8 + $0x448] sm:$0xff]
    %v350 = vld [vmem:[#allocation8 + $0x450] sm:$0xff]
    %v351 = vld [vmem:[#allocation8 + $0x458] sm:$0xff]
    %v352 = vld [vmem:[#allocation8 + $0x460] sm:$0xff]
    %v353 = vld [vmem:[#allocation8 + $0x468] sm:$0xff]
    %v354 = vld [vmem:[#allocation8 + $0x470] sm:$0xff]
    %v355 = vld [vmem:[#allocation8 + $0x478] sm:$0xff]
    %v356 = vld [vmem:[#allocation8 + $0x480] sm:$0xff]
    %v357 = vld [vmem:[#allocation8 + $0x488] sm:$0xff]
    %v358 = vld [vmem:[#allocation8 + $0x490] sm:$0xff]
    %v359 = vld [vmem:[#allocation8 + $0x498] sm:$0xff]
    %v360 = vld [vmem:[#allocation8 + $0x4a0] sm:$0xff]
    %v361 = vld [vmem:[#allocation8 + $0x4a8] sm:$0xff]
    %v362 = vld [vmem:[#allocation8 + $0x4b0] sm:$0xff]
    %v363 = vld [vmem:[#allocation8 + $0x4b8] sm:$0xff]
    %v364 = vld [vmem:[#allocation8 + $0x4c0] sm:$0xff]
    %v365 = vld [vmem:[#allocation8 + $0x4c8] sm:$0xff]
    %v366 = vld [vmem:[#allocation8 + $0x4d0] sm:$0xff]
    %v367 = vld [vmem:[#allocation8 + $0x4d8] sm:$0xff]
    %v368 = vld [vmem:[#allocation8 + $0x4e0] sm:$0xff]
    %v369 = vld [vmem:[#allocation8 + $0x4e8] sm:$0xff]
    %v370 = vld [vmem:[#allocation8 + $0x4f0] sm:$0xff]
    %v371 = vld [vmem:[#allocation8 + $0x4f8] sm:$0xff]
    %v372 = vld [vmem:[#allocation8 + $0x500] sm:$0xff]
    %v373 = vld [vmem:[#allocation8 + $0x508] sm:$0xff]
    %v374 = vld [vmem:[#allocation8 + $0x510] sm:$0xff]
    %v375 = vld [vmem:[#allocation8 + $0x518] sm:$0xff]
    %v376 = vld [vmem:[#allocation8 + $0x520] sm:$0xff]
    %v377 = vld [vmem:[#allocation8 + $0x528] sm:$0xff]
    %v378 = vld [vmem:[#allocation8 + $0x530] sm:$0xff]
    %v379 = vld [vmem:[#allocation8 + $0x538] sm:$0xff]
    %v380 = vld [vmem:[#allocation8 + $0x540] sm:$0xff]
    %v381 = vld [vmem:[#allocation8 + $0x548] sm:$0xff]
    %v382 = vld [vmem:[#allocation8 + $0x550] sm:$0xff]
    %v383 = vld [vmem:[#allocation8 + $0x558] sm:$0xff]
    %v384 = vld [vmem:[#allocation8 + $0x560] sm:$0xff]
    %v385 = vld [vmem:[#allocation8 + $0x568] sm:$0xff]
    %v386 = vld [vmem:[#allocation8 + $0x570] sm:$0xff]
    %v387 = vld [vmem:[#allocation8 + $0x578] sm:$0xff]
    %v388 = vld [vmem:[#allocation8 + $0x580] sm:$0xff]
    %v389 = vld [vmem:[#allocation8 + $0x588] sm:$0xff]
    %v390 = vld [vmem:[#allocation8 + $0x590] sm:$0xff]
    %v391 = vld [vmem:[#allocation8 + $0x598] sm:$0xff]
    %v392 = vld [vmem:[#allocation8 + $0x5a0] sm:$0xff]
    %v393 = vld [vmem:[#allocation8 + $0x5a8] sm:$0xff]
    %v394 = vld [vmem:[#allocation8 + $0x5b0] sm:$0xff]
    %v395 = vld [vmem:[#allocation8 + $0x5b8] sm:$0xff]
    %v396 = vld [vmem:[#allocation8 + $0x5c0] sm:$0xff]
    %v397 = vld [vmem:[#allocation8 + $0x5c8] sm:$0xff]
    %v398 = vld [vmem:[#allocation8 + $0x5d0] sm:$0xff]
    %v399 = vld [vmem:[#allocation8 + $0x5d8] sm:$0xff]
    %v400 = vld [vmem:[#allocation8 + $0x5e0] sm:$0xff]
    %v401 = vld [vmem:[#allocation8 + $0x5e8] sm:$0xff]
    %v402 = vld [vmem:[#allocation8 + $0x5f0] sm:$0xff]
    %v403 = vld [vmem:[#allocation8 + $0x5f8] sm:$0xff]
    %v404 = vld [vmem:[#allocation8 + $0x600] sm:$0xff]
    %v405 = vld [vmem:[#allocation8 + $0x608] sm:$0xff]
    %v406 = vld [vmem:[#allocation8 + $0x610] sm:$0xff]
    %v407 = vld [vmem:[#allocation8 + $0x618] sm:$0xff]
    %v408 = vld [vmem:[#allocation8 + $0x620] sm:$0xff]
    %v409 = vld [vmem:[#allocation8 + $0x628] sm:$0xff]
    %v410 = vld [vmem:[#allocation8 + $0x630] sm:$0xff]
    %v411 = vld [vmem:[#allocation8 + $0x638] sm:$0xff]
    %v412 = vld [vmem:[#allocation8 + $0x640] sm:$0xff]
    %v413 = vld [vmem:[#allocation8 + $0x648] sm:$0xff]
    %v414 = vld [vmem:[#allocation8 + $0x650] sm:$0xff]
    %v415 = vld [vmem:[#allocation8 + $0x658] sm:$0xff]
    %v416 = vld [vmem:[#allocation8 + $0x660] sm:$0xff]
    %v417 = vld [vmem:[#allocation8 + $0x668] sm:$0xff]
    %v418 = vld [vmem:[#allocation8 + $0x670] sm:$0xff]
    %v419 = vld [vmem:[#allocation8 + $0x678] sm:$0xff]
    %v420 = vld [vmem:[#allocation8 + $0x680] sm:$0xff]
    %v421 = vld [vmem:[#allocation8 + $0x688] sm:$0xff]
    %v422 = vld [vmem:[#allocation8 + $0x690] sm:$0xff]
    %v423 = vld [vmem:[#allocation8 + $0x698] sm:$0xff]
    %v424 = vld [vmem:[#allocation8 + $0x6a0] sm:$0xff]
    %v425 = vld [vmem:[#allocation8 + $0x6a8] sm:$0xff]
    %v426 = vld [vmem:[#allocation8 + $0x6b0] sm:$0xff]
    %v427 = vld [vmem:[#allocation8 + $0x6b8] sm:$0xff]
    %v428 = vld [vmem:[#allocation8 + $0x6c0] sm:$0xff]
    %v429 = vld [vmem:[#allocation8 + $0x6c8] sm:$0xff]
    %v430 = vld [vmem:[#allocation8 + $0x6d0] sm:$0xff]
    %v431 = vld [vmem:[#allocation8 + $0x6d8] sm:$0xff]
    %v432 = vld [vmem:[#allocation8 + $0x6e0] sm:$0xff]
    %v433 = vld [vmem:[#allocation8 + $0x6e8] sm:$0xff]
    %v434 = vld [vmem:[#allocation8 + $0x6f0] sm:$0xff]
    %v435 = vld [vmem:[#allocation8 + $0x6f8] sm:$0xff]
    %v436 = vld [vmem:[#allocation8 + $0x700] sm:$0xff]
    %v437 = vld [vmem:[#allocation8 + $0x708] sm:$0xff]
    %v438 = vld [vmem:[#allocation8 + $0x710] sm:$0xff]
    %v439 = vld [vmem:[#allocation8 + $0x718] sm:$0xff]
    %v440 = vld [vmem:[#allocation8 + $0x720] sm:$0xff]
    %v441 = vld [vmem:[#allocation8 + $0x728] sm:$0xff]
    %v442 = vld [vmem:[#allocation8 + $0x730] sm:$0xff]
    %v443 = vld [vmem:[#allocation8 + $0x738] sm:$0xff]
    %v444 = vld [vmem:[#allocation8 + $0x740] sm:$0xff]
    %v445 = vld [vmem:[#allocation8 + $0x748] sm:$0xff]
    %v446 = vld [vmem:[#allocation8 + $0x750] sm:$0xff]
    %v447 = vld [vmem:[#allocation8 + $0x758] sm:$0xff]
    %v448 = vld [vmem:[#allocation8 + $0x760] sm:$0xff]
    %v449 = vld [vmem:[#allocation8 + $0x768] sm:$0xff]
    %v450 = vld [vmem:[#allocation8 + $0x770] sm:$0xff]
    %v451 = vld [vmem:[#allocation8 + $0x778] sm:$0xff]
    %v452 = vld [vmem:[#allocation8 + $0x780] sm:$0xff]
    %v453 = vld [vmem:[#allocation8 + $0x788] sm:$0xff]
    %v454 = vld [vmem:[#allocation8 + $0x790] sm:$0xff]
    %v455 = vld [vmem:[#allocation8 + $0x798] sm:$0xff]
    %v456 = vld [vmem:[#allocation8 + $0x7a0] sm:$0xff]
    %v457 = vld [vmem:[#allocation8 + $0x7a8] sm:$0xff]
    %v458 = vld [vmem:[#allocation8 + $0x7b0] sm:$0xff]
    %v459 = vld [vmem:[#allocation8 + $0x7b8] sm:$0xff]
    %v460 = vld [vmem:[#allocation8 + $0x7c0] sm:$0xff]
    %v461 = vld [vmem:[#allocation8 + $0x7c8] sm:$0xff]
    %v462 = vld [vmem:[#allocation8 + $0x7d0] sm:$0xff]
    %v463 = vld [vmem:[#allocation8 + $0x7d8] sm:$0xff]
    %v464 = vld [vmem:[#allocation8 + $0x7e0] sm:$0xff]
    %v465 = vld [vmem:[#allocation8 + $0x7e8] sm:$0xff]
    %v466 = vld [vmem:[#allocation8 + $0x7f0] sm:$0xff]
    %v467 = vld [vmem:[#allocation8 + $0x7f8] sm:$0xff]
    %v468 = vld [vmem:[#allocation10] sm:$0xff]
    %v469 = vld [vmem:[#allocation10 + $0x8] sm:$0xff]
    %v472 = vperm.slane %v468, 0
    %v473 = vperm.slane %v468, 1
    %v474 = vperm.slane %v468, 2
    %v475 = vperm.slane %v468, 3
    %v476 = vperm.slane %v468, 4
    %v477 = vperm.slane %v468, 5
    %v478 = vperm.slane %v468, 6
    %v479 = vperm.slane %v468, 7
    %v480 = vperm.slane %v469, 0
    %v481 = vperm.slane %v469, 1
    %v482 = vperm.slane %v469, 2
    %v483 = vperm.slane %v469, 3
    %v484 = vperm.slane %v469, 4
    %v485 = vperm.slane %v469, 5
    %v486 = vperm.slane %v469, 6
    %v487 = vperm.slane %v469, 7
    %504 = vmatpush.msra.mxu0 %v452
    %505 = vmatpush.msra.mxu0 %v436
    %506 = vmatpush.msra.mxu0 %v420
    %507 = vmatpush.msra.mxu0 %v404
    %508 = vmatpush.msra.mxu0 %v388
    %509 = vmatpush.msra.mxu0 %v372
    %510 = vmatpush.msra.mxu0 %v356
    %511 = vmatpush.msra.mxu0 %v340
    %512 = vmatpush.msra.mxu0 %v324
    %513 = vmatpush.msra.mxu0 %v308
    %514 = vmatpush.msra.mxu0 %v292
    %515 = vmatpush.msra.mxu0 %v276
    %516 = vmatpush.msra.mxu0 %v260
    %517 = vmatpush.msra.mxu0 %v244
    %518 = vmatpush.msra.mxu0 %v228
    %519 = vmatpush.msra.mxu0 %v212
    %520 = vmatmul.f32.gmra.mxu0 %v210
    %v521 = vpop.f32.mrf.mxu0
    %v522 = vadd.f32 %v472, %v521
    %523 = vmatmul.f32.gmra.mxu0 %v211
    %v524 = vpop.f32.mrf.mxu0
    %v525 = vadd.f32 %v472, %v524
    %526 = vdwg.mxu0
    %527 = vmatpush.msra.mxu0 %v453
    %528 = vmatpush.msra.mxu0 %v437
    %529 = vmatpush.msra.mxu0 %v421
    %530 = vmatpush.msra.mxu0 %v405
    %531 = vmatpush.msra.mxu0 %v389
    %532 = vmatpush.msra.mxu0 %v373
    %533 = vmatpush.msra.mxu0 %v357
    %534 = vmatpush.msra.mxu0 %v341
    %535 = vmatpush.msra.mxu0 %v325
    %536 = vmatpush.msra.mxu0 %v309
    %537 = vmatpush.msra.mxu0 %v293
    %538 = vmatpush.msra.mxu0 %v277
    %539 = vmatpush.msra.mxu0 %v261
    %540 = vmatpush.msra.mxu0 %v245
    %541 = vmatpush.msra.mxu0 %v229
    %542 = vmatpush.msra.mxu0 %v213
    %543 = vmatmul.f32.gmra.mxu0 %v210
    %v544 = vpop.f32.mrf.mxu0
    %v545 = vadd.f32 %v473, %v544
    %546 = vmatmul.f32.gmra.mxu0 %v211
    %v547 = vpop.f32.mrf.mxu0
    %v548 = vadd.f32 %v473, %v547
    %549 = vdwg.mxu0
    %550 = vmatpush.msra.mxu0 %v454
    %551 = vmatpush.msra.mxu0 %v438
    %552 = vmatpush.msra.mxu0 %v422
    %553 = vmatpush.msra.mxu0 %v406
    %554 = vmatpush.msra.mxu0 %v390
    %555 = vmatpush.msra.mxu0 %v374
    %556 = vmatpush.msra.mxu0 %v358
    %557 = vmatpush.msra.mxu0 %v342
    %558 = vmatpush.msra.mxu0 %v326
    %559 = vmatpush.msra.mxu0 %v310
    %560 = vmatpush.msra.mxu0 %v294
    %561 = vmatpush.msra.mxu0 %v278
    %562 = vmatpush.msra.mxu0 %v262
    %563 = vmatpush.msra.mxu0 %v246
    %564 = vmatpush.msra.mxu0 %v230
    %565 = vmatpush.msra.mxu0 %v214
    %566 = vmatmul.f32.gmra.mxu0 %v210
    %v567 = vpop.f32.mrf.mxu0
    %v568 = vadd.f32 %v474, %v567
    %569 = vmatmul.f32.gmra.mxu0 %v211
    %v570 = vpop.f32.mrf.mxu0
    %v571 = vadd.f32 %v474, %v570
    %572 = vdwg.mxu0
    %573 = vmatpush.msra.mxu0 %v455
    %574 = vmatpush.msra.mxu0 %v439
    %575 = vmatpush.msra.mxu0 %v423
    %576 = vmatpush.msra.mxu0 %v407
    %577 = vmatpush.msra.mxu0 %v391
    %578 = vmatpush.msra.mxu0 %v375
    %579 = vmatpush.msra.mxu0 %v359
    %580 = vmatpush.msra.mxu0 %v343
    %581 = vmatpush.msra.mxu0 %v327
    %582 = vmatpush.msra.mxu0 %v311
    %583 = vmatpush.msra.mxu0 %v295
    %584 = vmatpush.msra.mxu0 %v279
    %585 = vmatpush.msra.mxu0 %v263
    %586 = vmatpush.msra.mxu0 %v247
    %587 = vmatpush.msra.mxu0 %v231
    %588 = vmatpush.msra.mxu0 %v215
    %589 = vmatmul.f32.gmra.mxu0 %v210
    %v590 = vpop.f32.mrf.mxu0
    %v591 = vadd.f32 %v475, %v590
    %592 = vmatmul.f32.gmra.mxu0 %v211
    %v593 = vpop.f32.mrf.mxu0
    %v594 = vadd.f32 %v475, %v593
    %595 = vdwg.mxu0
    %596 = vmatpush.msra.mxu0 %v456
    %597 = vmatpush.msra.mxu0 %v440
    %598 = vmatpush.msra.mxu0 %v424
    %599 = vmatpush.msra.mxu0 %v408
    %600 = vmatpush.msra.mxu0 %v392
    %601 = vmatpush.msra.mxu0 %v376
    %602 = vmatpush.msra.mxu0 %v360
    %603 = vmatpush.msra.mxu0 %v344
    %604 = vmatpush.msra.mxu0 %v328
    %605 = vmatpush.msra.mxu0 %v312
    %606 = vmatpush.msra.mxu0 %v296
    %607 = vmatpush.msra.mxu0 %v280
    %608 = vmatpush.msra.mxu0 %v264
    %609 = vmatpush.msra.mxu0 %v248
    %610 = vmatpush.msra.mxu0 %v232
    %611 = vmatpush.msra.mxu0 %v216
    %612 = vmatmul.f32.gmra.mxu0 %v210
    %v613 = vpop.f32.mrf.mxu0
    %v614 = vadd.f32 %v476, %v613
    %615 = vmatmul.f32.gmra.mxu0 %v211
    %v616 = vpop.f32.mrf.mxu0
    %v617 = vadd.f32 %v476, %v616
    %618 = vdwg.mxu0
    %619 = vmatpush.msra.mxu0 %v457
    %620 = vmatpush.msra.mxu0 %v441
    %621 = vmatpush.msra.mxu0 %v425
    %622 = vmatpush.msra.mxu0 %v409
    %623 = vmatpush.msra.mxu0 %v393
    %624 = vmatpush.msra.mxu0 %v377
    %625 = vmatpush.msra.mxu0 %v361
    %626 = vmatpush.msra.mxu0 %v345
    %627 = vmatpush.msra.mxu0 %v329
    %628 = vmatpush.msra.mxu0 %v313
    %629 = vmatpush.msra.mxu0 %v297
    %630 = vmatpush.msra.mxu0 %v281
    %631 = vmatpush.msra.mxu0 %v265
    %632 = vmatpush.msra.mxu0 %v249
    %633 = vmatpush.msra.mxu0 %v233
    %634 = vmatpush.msra.mxu0 %v217
    %635 = vmatmul.f32.gmra.mxu0 %v210
    %v636 = vpop.f32.mrf.mxu0
    %v637 = vadd.f32 %v477, %v636
    %638 = vmatmul.f32.gmra.mxu0 %v211
    %v639 = vpop.f32.mrf.mxu0
    %v640 = vadd.f32 %v477, %v639
    %641 = vdwg.mxu0
    %642 = vmatpush.msra.mxu0 %v458
    %643 = vmatpush.msra.mxu0 %v442
    %644 = vmatpush.msra.mxu0 %v426
    %645 = vmatpush.msra.mxu0 %v410
    %646 = vmatpush.msra.mxu0 %v394
    %647 = vmatpush.msra.mxu0 %v378
    %648 = vmatpush.msra.mxu0 %v362
    %649 = vmatpush.msra.mxu0 %v346
    %650 = vmatpush.msra.mxu0 %v330
    %651 = vmatpush.msra.mxu0 %v314
    %652 = vmatpush.msra.mxu0 %v298
    %653 = vmatpush.msra.mxu0 %v282
    %654 = vmatpush.msra.mxu0 %v266
    %655 = vmatpush.msra.mxu0 %v250
    %656 = vmatpush.msra.mxu0 %v234
    %657 = vmatpush.msra.mxu0 %v218
    %658 = vmatmul.f32.gmra.mxu0 %v210
    %v659 = vpop.f32.mrf.mxu0
    %v660 = vadd.f32 %v478, %v659
    %661 = vmatmul.f32.gmra.mxu0 %v211
    %v662 = vpop.f32.mrf.mxu0
    %v663 = vadd.f32 %v478, %v662
    %664 = vdwg.mxu0
    %665 = vmatpush.msra.mxu0 %v459
    %666 = vmatpush.msra.mxu0 %v443
    %667 = vmatpush.msra.mxu0 %v427
    %668 = vmatpush.msra.mxu0 %v411
    %669 = vmatpush.msra.mxu0 %v395
    %670 = vmatpush.msra.mxu0 %v379
    %671 = vmatpush.msra.mxu0 %v363
    %672 = vmatpush.msra.mxu0 %v347
    %673 = vmatpush.msra.mxu0 %v331
    %674 = vmatpush.msra.mxu0 %v315
    %675 = vmatpush.msra.mxu0 %v299
    %676 = vmatpush.msra.mxu0 %v283
    %677 = vmatpush.msra.mxu0 %v267
    %678 = vmatpush.msra.mxu0 %v251
    %679 = vmatpush.msra.mxu0 %v235
    %680 = vmatpush.msra.mxu0 %v219
    %681 = vmatmul.f32.gmra.mxu0 %v210
    %v682 = vpop.f32.mrf.mxu0
    %v683 = vadd.f32 %v479, %v682
    %684 = vmatmul.f32.gmra.mxu0 %v211
    %v685 = vpop.f32.mrf.mxu0
    %v686 = vadd.f32 %v479, %v685
    %687 = vdwg.mxu0
    %688 = vmatpush.msra.mxu0 %v460
    %689 = vmatpush.msra.mxu0 %v444
    %690 = vmatpush.msra.mxu0 %v428
    %691 = vmatpush.msra.mxu0 %v412
    %692 = vmatpush.msra.mxu0 %v396
    %693 = vmatpush.msra.mxu0 %v380
    %694 = vmatpush.msra.mxu0 %v364
    %695 = vmatpush.msra.mxu0 %v348
    %696 = vmatpush.msra.mxu0 %v332
    %697 = vmatpush.msra.mxu0 %v316
    %698 = vmatpush.msra.mxu0 %v300
    %699 = vmatpush.msra.mxu0 %v284
    %700 = vmatpush.msra.mxu0 %v268
    %701 = vmatpush.msra.mxu0 %v252
    %702 = vmatpush.msra.mxu0 %v236
    %703 = vmatpush.msra.mxu0 %v220
    %704 = vmatmul.f32.gmra.mxu0 %v210
    %v705 = vpop.f32.mrf.mxu0
    %v706 = vadd.f32 %v480, %v705
    %707 = vmatmul.f32.gmra.mxu0 %v211
    %v708 = vpop.f32.mrf.mxu0
    %v709 = vadd.f32 %v480, %v708
    %710 = vdwg.mxu0
    %711 = vmatpush.msra.mxu0 %v461
    %712 = vmatpush.msra.mxu0 %v445
    %713 = vmatpush.msra.mxu0 %v429
    %714 = vmatpush.msra.mxu0 %v413
    %715 = vmatpush.msra.mxu0 %v397
    %716 = vmatpush.msra.mxu0 %v381
    %717 = vmatpush.msra.mxu0 %v365
    %718 = vmatpush.msra.mxu0 %v349
    %719 = vmatpush.msra.mxu0 %v333
    %720 = vmatpush.msra.mxu0 %v317
    %721 = vmatpush.msra.mxu0 %v301
    %722 = vmatpush.msra.mxu0 %v285
    %723 = vmatpush.msra.mxu0 %v269
    %724 = vmatpush.msra.mxu0 %v253
    %725 = vmatpush.msra.mxu0 %v237
    %726 = vmatpush.msra.mxu0 %v221
    %727 = vmatmul.f32.gmra.mxu0 %v210
    %v728 = vpop.f32.mrf.mxu0
    %v729 = vadd.f32 %v481, %v728
    %730 = vmatmul.f32.gmra.mxu0 %v211
    %v731 = vpop.f32.mrf.mxu0
    %v732 = vadd.f32 %v481, %v731
    %733 = vdwg.mxu0
    %734 = vmatpush.msra.mxu0 %v462
    %735 = vmatpush.msra.mxu0 %v446
    %736 = vmatpush.msra.mxu0 %v430
    %737 = vmatpush.msra.mxu0 %v414
    %738 = vmatpush.msra.mxu0 %v398
    %739 = vmatpush.msra.mxu0 %v382
    %740 = vmatpush.msra.mxu0 %v366
    %741 = vmatpush.msra.mxu0 %v350
    %742 = vmatpush.msra.mxu0 %v334
    %743 = vmatpush.msra.mxu0 %v318
    %744 = vmatpush.msra.mxu0 %v302
    %745 = vmatpush.msra.mxu0 %v286
    %746 = vmatpush.msra.mxu0 %v270
    %747 = vmatpush.msra.mxu0 %v254
    %748 = vmatpush.msra.mxu0 %v238
    %749 = vmatpush.msra.mxu0 %v222
    %750 = vmatmul.f32.gmra.mxu0 %v210
    %v751 = vpop.f32.mrf.mxu0
    %v752 = vadd.f32 %v482, %v751
    %753 = vmatmul.f32.gmra.mxu0 %v211
    %v754 = vpop.f32.mrf.mxu0
    %v755 = vadd.f32 %v482, %v754
    %756 = vdwg.mxu0
    %757 = vmatpush.msra.mxu0 %v463
    %758 = vmatpush.msra.mxu0 %v447
    %759 = vmatpush.msra.mxu0 %v431
    %760 = vmatpush.msra.mxu0 %v415
    %761 = vmatpush.msra.mxu0 %v399
    %762 = vmatpush.msra.mxu0 %v383
    %763 = vmatpush.msra.mxu0 %v367
    %764 = vmatpush.msra.mxu0 %v351
    %765 = vmatpush.msra.mxu0 %v335
    %766 = vmatpush.msra.mxu0 %v319
    %767 = vmatpush.msra.mxu0 %v303
    %768 = vmatpush.msra.mxu0 %v287
    %769 = vmatpush.msra.mxu0 %v271
    %770 = vmatpush.msra.mxu0 %v255
    %771 = vmatpush.msra.mxu0 %v239
    %772 = vmatpush.msra.mxu0 %v223
    %773 = vmatmul.f32.gmra.mxu0 %v210
    %v774 = vpop.f32.mrf.mxu0
    %v775 = vadd.f32 %v483, %v774
    %776 = vmatmul.f32.gmra.mxu0 %v211
    %v777 = vpop.f32.mrf.mxu0
    %v778 = vadd.f32 %v483, %v777
    %779 = vdwg.mxu0
    %780 = vmatpush.msra.mxu0 %v464
    %781 = vmatpush.msra.mxu0 %v448
    %782 = vmatpush.msra.mxu0 %v432
    %783 = vmatpush.msra.mxu0 %v416
    %784 = vmatpush.msra.mxu0 %v400
    %785 = vmatpush.msra.mxu0 %v384
    %786 = vmatpush.msra.mxu0 %v368
    %787 = vmatpush.msra.mxu0 %v352
    %788 = vmatpush.msra.mxu0 %v336
    %789 = vmatpush.msra.mxu0 %v320
    %790 = vmatpush.msra.mxu0 %v304
    %791 = vmatpush.msra.mxu0 %v288
    %792 = vmatpush.msra.mxu0 %v272
    %793 = vmatpush.msra.mxu0 %v256
    %794 = vmatpush.msra.mxu0 %v240
    %795 = vmatpush.msra.mxu0 %v224
    %796 = vmatmul.f32.gmra.mxu0 %v210
    %v797 = vpop.f32.mrf.mxu0
    %v798 = vadd.f32 %v484, %v797
    %799 = vmatmul.f32.gmra.mxu0 %v211
    %v800 = vpop.f32.mrf.mxu0
    %v801 = vadd.f32 %v484, %v800
    %802 = vdwg.mxu0
    %803 = vmatpush.msra.mxu0 %v465
    %804 = vmatpush.msra.mxu0 %v449
    %805 = vmatpush.msra.mxu0 %v433
    %806 = vmatpush.msra.mxu0 %v417
    %807 = vmatpush.msra.mxu0 %v401
    %808 = vmatpush.msra.mxu0 %v385
    %809 = vmatpush.msra.mxu0 %v369
    %810 = vmatpush.msra.mxu0 %v353
    %811 = vmatpush.msra.mxu0 %v337
    %812 = vmatpush.msra.mxu0 %v321
    %813 = vmatpush.msra.mxu0 %v305
    %814 = vmatpush.msra.mxu0 %v289
    %815 = vmatpush.msra.mxu0 %v273
    %816 = vmatpush.msra.mxu0 %v257
    %817 = vmatpush.msra.mxu0 %v241
    %818 = vmatpush.msra.mxu0 %v225
    %819 = vmatmul.f32.gmra.mxu0 %v210
    %v820 = vpop.f32.mrf.mxu0
    %v821 = vadd.f32 %v485, %v820
    %822 = vmatmul.f32.gmra.mxu0 %v211
    %v823 = vpop.f32.mrf.mxu0
    %v824 = vadd.f32 %v485, %v823
    %825 = vdwg.mxu0
    %826 = vmatpush.msra.mxu0 %v466
    %827 = vmatpush.msra.mxu0 %v450
    %828 = vmatpush.msra.mxu0 %v434
    %829 = vmatpush.msra.mxu0 %v418
    %830 = vmatpush.msra.mxu0 %v402
    %831 = vmatpush.msra.mxu0 %v386
    %832 = vmatpush.msra.mxu0 %v370
    %833 = vmatpush.msra.mxu0 %v354
    %834 = vmatpush.msra.mxu0 %v338
    %835 = vmatpush.msra.mxu0 %v322
    %836 = vmatpush.msra.mxu0 %v306
    %837 = vmatpush.msra.mxu0 %v290
    %838 = vmatpush.msra.mxu0 %v274
    %839 = vmatpush.msra.mxu0 %v258
    %840 = vmatpush.msra.mxu0 %v242
    %841 = vmatpush.msra.mxu0 %v226
    %842 = vmatmul.f32.gmra.mxu0 %v210
    %v843 = vpop.f32.mrf.mxu0
    %v844 = vadd.f32 %v486, %v843
    %845 = vmatmul.f32.gmra.mxu0 %v211
    %v846 = vpop.f32.mrf.mxu0
    %v847 = vadd.f32 %v486, %v846
    %848 = vdwg.mxu0
    %849 = vmatpush.msra.mxu0 %v467
    %850 = vmatpush.msra.mxu0 %v451
    %851 = vmatpush.msra.mxu0 %v435
    %852 = vmatpush.msra.mxu0 %v419
    %853 = vmatpush.msra.mxu0 %v403
    %854 = vmatpush.msra.mxu0 %v387
    %855 = vmatpush.msra.mxu0 %v371
    %856 = vmatpush.msra.mxu0 %v355
    %857 = vmatpush.msra.mxu0 %v339
    %858 = vmatpush.msra.mxu0 %v323
    %859 = vmatpush.msra.mxu0 %v307
    %860 = vmatpush.msra.mxu0 %v291
    %861 = vmatpush.msra.mxu0 %v275
    %862 = vmatpush.msra.mxu0 %v259
    %863 = vmatpush.msra.mxu0 %v243
    %864 = vmatpush.msra.mxu0 %v227
    %865 = vmatmul.f32.gmra.mxu0 %v210
    %v866 = vpop.f32.mrf.mxu0
    %v867 = vadd.f32 %v487, %v866
    %868 = vmatmul.f32.gmra.mxu0 %v211
    %v869 = vpop.f32.mrf.mxu0
    %v870 = vadd.f32 %v487, %v869
    %871 = vdwg.mxu0
    %v872 = vmax.f32 %v522, 0.0
    %v873 = vmax.f32 %v545, 0.0
    %v874 = vmax.f32 %v568, 0.0
    %v875 = vmax.f32 %v591, 0.0
    %v876 = vmax.f32 %v614, 0.0
    %v877 = vmax.f32 %v637, 0.0
    %v878 = vmax.f32 %v660, 0.0
    %v879 = vmax.f32 %v683, 0.0
    %v880 = vmax.f32 %v706, 0.0
    %v881 = vmax.f32 %v729, 0.0
    %v882 = vmax.f32 %v752, 0.0
    %v883 = vmax.f32 %v775, 0.0
    %v884 = vmax.f32 %v798, 0.0
    %v885 = vmax.f32 %v821, 0.0
    %v886 = vmax.f32 %v844, 0.0
    %v887 = vmax.f32 %v867, 0.0
    %v888 = vmax.f32 %v525, 0.0
    %v889 = vmax.f32 %v548, 0.0
    %v890 = vmax.f32 %v571, 0.0
    %v891 = vmax.f32 %v594, 0.0
    %v892 = vmax.f32 %v617, 0.0
    %v893 = vmax.f32 %v640, 0.0
    %v894 = vmax.f32 %v663, 0.0
    %v895 = vmax.f32 %v686, 0.0
    %v896 = vmax.f32 %v709, 0.0
    %v897 = vmax.f32 %v732, 0.0
    %v898 = vmax.f32 %v755, 0.0
    %v899 = vmax.f32 %v778, 0.0
    %v900 = vmax.f32 %v801, 0.0
    %v901 = vmax.f32 %v824, 0.0
    %v902 = vmax.f32 %v847, 0.0
    %v903 = vmax.f32 %v870, 0.0
    %v904 = vld [vmem:[#allocation11] sm:$0xff]
    %v905 = vld [vmem:[#allocation11 + $0x8] sm:$0xff]
    %v906 = vld [vmem:[#allocation11 + $0x10] sm:$0xff]
    %v907 = vld [vmem:[#allocation11 + $0x18] sm:$0xff]
    %v908 = vld [vmem:[#allocation11 + $0x20] sm:$0xff]
    %v909 = vld [vmem:[#allocation11 + $0x28] sm:$0xff]
    %v910 = vld [vmem:[#allocation11 + $0x30] sm:$0xff]
    %v911 = vld [vmem:[#allocation11 + $0x38] sm:$0xff]
    %v912 = vld [vmem:[#allocation11 + $0x40] sm:$0xff]
    %v913 = vld [vmem:[#allocation11 + $0x48] sm:$0xff]
    %v914 = vld [vmem:[#allocation11 + $0x50] sm:$0xff]
    %v915 = vld [vmem:[#allocation11 + $0x58] sm:$0xff]
    %v916 = vld [vmem:[#allocation11 + $0x60] sm:$0xff]
    %v917 = vld [vmem:[#allocation11 + $0x68] sm:$0xff]
    %v918 = vld [vmem:[#allocation11 + $0x70] sm:$0xff]
    %v919 = vld [vmem:[#allocation11 + $0x78] sm:$0xff]
    %v920 = vld [vmem:[#allocation11 + $0x80] sm:$0xff]
    %v921 = vld [vmem:[#allocation11 + $0x88] sm:$0xff]
    %v922 = vld [vmem:[#allocation11 + $0x90] sm:$0xff]
    %v923 = vld [vmem:[#allocation11 + $0x98] sm:$0xff]
    %v924 = vld [vmem:[#allocation11 + $0xa0] sm:$0xff]
    %v925 = vld [vmem:[#allocation11 + $0xa8] sm:$0xff]
    %v926 = vld [vmem:[#allocation11 + $0xb0] sm:$0xff]
    %v927 = vld [vmem:[#allocation11 + $0xb8] sm:$0xff]
    %v928 = vld [vmem:[#allocation11 + $0xc0] sm:$0xff]
    %v929 = vld [vmem:[#allocation11 + $0xc8] sm:$0xff]
    %v930 = vld [vmem:[#allocation11 + $0xd0] sm:$0xff]
    %v931 = vld [vmem:[#allocation11 + $0xd8] sm:$0xff]
    %v932 = vld [vmem:[#allocation11 + $0xe0] sm:$0xff]
    %v933 = vld [vmem:[#allocation11 + $0xe8] sm:$0xff]
    %v934 = vld [vmem:[#allocation11 + $0xf0] sm:$0xff]
    %v935 = vld [vmem:[#allocation11 + $0xf8] sm:$0xff]
    %v936 = vld [vmem:[#allocation11 + $0x100] sm:$0xff]
    %v937 = vld [vmem:[#allocation11 + $0x108] sm:$0xff]
    %v938 = vld [vmem:[#allocation11 + $0x110] sm:$0xff]
    %v939 = vld [vmem:[#allocation11 + $0x118] sm:$0xff]
    %v940 = vld [vmem:[#allocation11 + $0x120] sm:$0xff]
    %v941 = vld [vmem:[#allocation11 + $0x128] sm:$0xff]
    %v942 = vld [vmem:[#allocation11 + $0x130] sm:$0xff]
    %v943 = vld [vmem:[#allocation11 + $0x138] sm:$0xff]
    %v944 = vld [vmem:[#allocation11 + $0x140] sm:$0xff]
    %v945 = vld [vmem:[#allocation11 + $0x148] sm:$0xff]
    %v946 = vld [vmem:[#allocation11 + $0x150] sm:$0xff]
    %v947 = vld [vmem:[#allocation11 + $0x158] sm:$0xff]
    %v948 = vld [vmem:[#allocation11 + $0x160] sm:$0xff]
    %v949 = vld [vmem:[#allocation11 + $0x168] sm:$0xff]
    %v950 = vld [vmem:[#allocation11 + $0x170] sm:$0xff]
    %v951 = vld [vmem:[#allocation11 + $0x178] sm:$0xff]
    %v952 = vld [vmem:[#allocation11 + $0x180] sm:$0xff]
    %v953 = vld [vmem:[#allocation11 + $0x188] sm:$0xff]
    %v954 = vld [vmem:[#allocation11 + $0x190] sm:$0xff]
    %v955 = vld [vmem:[#allocation11 + $0x198] sm:$0xff]
    %v956 = vld [vmem:[#allocation11 + $0x1a0] sm:$0xff]
    %v957 = vld [vmem:[#allocation11 + $0x1a8] sm:$0xff]
    %v958 = vld [vmem:[#allocation11 + $0x1b0] sm:$0xff]
    %v959 = vld [vmem:[#allocation11 + $0x1b8] sm:$0xff]
    %v960 = vld [vmem:[#allocation11 + $0x1c0] sm:$0xff]
    %v961 = vld [vmem:[#allocation11 + $0x1c8] sm:$0xff]
    %v962 = vld [vmem:[#allocation11 + $0x1d0] sm:$0xff]
    %v963 = vld [vmem:[#allocation11 + $0x1d8] sm:$0xff]
    %v964 = vld [vmem:[#allocation11 + $0x1e0] sm:$0xff]
    %v965 = vld [vmem:[#allocation11 + $0x1e8] sm:$0xff]
    %v966 = vld [vmem:[#allocation11 + $0x1f0] sm:$0xff]
    %v967 = vld [vmem:[#allocation11 + $0x1f8] sm:$0xff]
    %v968 = vld [vmem:[#allocation11 + $0x200] sm:$0xff]
    %v969 = vld [vmem:[#allocation11 + $0x208] sm:$0xff]
    %v970 = vld [vmem:[#allocation11 + $0x210] sm:$0xff]
    %v971 = vld [vmem:[#allocation11 + $0x218] sm:$0xff]
    %v972 = vld [vmem:[#allocation11 + $0x220] sm:$0xff]
    %v973 = vld [vmem:[#allocation11 + $0x228] sm:$0xff]
    %v974 = vld [vmem:[#allocation11 + $0x230] sm:$0xff]
    %v975 = vld [vmem:[#allocation11 + $0x238] sm:$0xff]
    %v976 = vld [vmem:[#allocation11 + $0x240] sm:$0xff]
    %v977 = vld [vmem:[#allocation11 + $0x248] sm:$0xff]
    %v978 = vld [vmem:[#allocation11 + $0x250] sm:$0xff]
    %v979 = vld [vmem:[#allocation11 + $0x258] sm:$0xff]
    %v980 = vld [vmem:[#allocation11 + $0x260] sm:$0xff]
    %v981 = vld [vmem:[#allocation11 + $0x268] sm:$0xff]
    %v982 = vld [vmem:[#allocation11 + $0x270] sm:$0xff]
    %v983 = vld [vmem:[#allocation11 + $0x278] sm:$0xff]
    %v984 = vld [vmem:[#allocation11 + $0x280] sm:$0xff]
    %v985 = vld [vmem:[#allocation11 + $0x288] sm:$0xff]
    %v986 = vld [vmem:[#allocation11 + $0x290] sm:$0xff]
    %v987 = vld [vmem:[#allocation11 + $0x298] sm:$0xff]
    %v988 = vld [vmem:[#allocation11 + $0x2a0] sm:$0xff]
    %v989 = vld [vmem:[#allocation11 + $0x2a8] sm:$0xff]
    %v990 = vld [vmem:[#allocation11 + $0x2b0] sm:$0xff]
    %v991 = vld [vmem:[#allocation11 + $0x2b8] sm:$0xff]
    %v992 = vld [vmem:[#allocation11 + $0x2c0] sm:$0xff]
    %v993 = vld [vmem:[#allocation11 + $0x2c8] sm:$0xff]
    %v994 = vld [vmem:[#allocation11 + $0x2d0] sm:$0xff]
    %v995 = vld [vmem:[#allocation11 + $0x2d8] sm:$0xff]
    %v996 = vld [vmem:[#allocation11 + $0x2e0] sm:$0xff]
    %v997 = vld [vmem:[#allocation11 + $0x2e8] sm:$0xff]
    %v998 = vld [vmem:[#allocation11 + $0x2f0] sm:$0xff]
    %v999 = vld [vmem:[#allocation11 + $0x2f8] sm:$0xff]
    %v1000 = vld [vmem:[#allocation11 + $0x300] sm:$0xff]
    %v1001 = vld [vmem:[#allocation11 + $0x308] sm:$0xff]
    %v1002 = vld [vmem:[#allocation11 + $0x310] sm:$0xff]
    %v1003 = vld [vmem:[#allocation11 + $0x318] sm:$0xff]
    %v1004 = vld [vmem:[#allocation11 + $0x320] sm:$0xff]
    %v1005 = vld [vmem:[#allocation11 + $0x328] sm:$0xff]
    %v1006 = vld [vmem:[#allocation11 + $0x330] sm:$0xff]
    %v1007 = vld [vmem:[#allocation11 + $0x338] sm:$0xff]
    %v1008 = vld [vmem:[#allocation11 + $0x340] sm:$0xff]
    %v1009 = vld [vmem:[#allocation11 + $0x348] sm:$0xff]
    %v1010 = vld [vmem:[#allocation11 + $0x350] sm:$0xff]
    %v1011 = vld [vmem:[#allocation11 + $0x358] sm:$0xff]
    %v1012 = vld [vmem:[#allocation11 + $0x360] sm:$0xff]
    %v1013 = vld [vmem:[#allocation11 + $0x368] sm:$0xff]
    %v1014 = vld [vmem:[#allocation11 + $0x370] sm:$0xff]
    %v1015 = vld [vmem:[#allocation11 + $0x378] sm:$0xff]
    %v1016 = vld [vmem:[#allocation11 + $0x380] sm:$0xff]
    %v1017 = vld [vmem:[#allocation11 + $0x388] sm:$0xff]
    %v1018 = vld [vmem:[#allocation11 + $0x390] sm:$0xff]
    %v1019 = vld [vmem:[#allocation11 + $0x398] sm:$0xff]
    %v1020 = vld [vmem:[#allocation11 + $0x3a0] sm:$0xff]
    %v1021 = vld [vmem:[#allocation11 + $0x3a8] sm:$0xff]
    %v1022 = vld [vmem:[#allocation11 + $0x3b0] sm:$0xff]
    %v1023 = vld [vmem:[#allocation11 + $0x3b8] sm:$0xff]
    %v1024 = vld [vmem:[#allocation11 + $0x3c0] sm:$0xff]
    %v1025 = vld [vmem:[#allocation11 + $0x3c8] sm:$0xff]
    %v1026 = vld [vmem:[#allocation11 + $0x3d0] sm:$0xff]
    %v1027 = vld [vmem:[#allocation11 + $0x3d8] sm:$0xff]
    %v1028 = vld [vmem:[#allocation11 + $0x3e0] sm:$0xff]
    %v1029 = vld [vmem:[#allocation11 + $0x3e8] sm:$0xff]
    %v1030 = vld [vmem:[#allocation11 + $0x3f0] sm:$0xff]
    %v1031 = vld [vmem:[#allocation11 + $0x3f8] sm:$0xff]
    %v1032 = vld [vmem:[#allocation11 + $0x400] sm:$0xff]
    %v1033 = vld [vmem:[#allocation11 + $0x408] sm:$0xff]
    %v1034 = vld [vmem:[#allocation11 + $0x410] sm:$0xff]
    %v1035 = vld [vmem:[#allocation11 + $0x418] sm:$0xff]
    %v1036 = vld [vmem:[#allocation11 + $0x420] sm:$0xff]
    %v1037 = vld [vmem:[#allocation11 + $0x428] sm:$0xff]
    %v1038 = vld [vmem:[#allocation11 + $0x430] sm:$0xff]
    %v1039 = vld [vmem:[#allocation11 + $0x438] sm:$0xff]
    %v1040 = vld [vmem:[#allocation11 + $0x440] sm:$0xff]
    %v1041 = vld [vmem:[#allocation11 + $0x448] sm:$0xff]
    %v1042 = vld [vmem:[#allocation11 + $0x450] sm:$0xff]
    %v1043 = vld [vmem:[#allocation11 + $0x458] sm:$0xff]
    %v1044 = vld [vmem:[#allocation11 + $0x460] sm:$0xff]
    %v1045 = vld [vmem:[#allocation11 + $0x468] sm:$0xff]
    %v1046 = vld [vmem:[#allocation11 + $0x470] sm:$0xff]
    %v1047 = vld [vmem:[#allocation11 + $0x478] sm:$0xff]
    %v1048 = vld [vmem:[#allocation11 + $0x480] sm:$0xff]
    %v1049 = vld [vmem:[#allocation11 + $0x488] sm:$0xff]
    %v1050 = vld [vmem:[#allocation11 + $0x490] sm:$0xff]
    %v1051 = vld [vmem:[#allocation11 + $0x498] sm:$0xff]
    %v1052 = vld [vmem:[#allocation11 + $0x4a0] sm:$0xff]
    %v1053 = vld [vmem:[#allocation11 + $0x4a8] sm:$0xff]
    %v1054 = vld [vmem:[#allocation11 + $0x4b0] sm:$0xff]
    %v1055 = vld [vmem:[#allocation11 + $0x4b8] sm:$0xff]
    %v1056 = vld [vmem:[#allocation11 + $0x4c0] sm:$0xff]
    %v1057 = vld [vmem:[#allocation11 + $0x4c8] sm:$0xff]
    %v1058 = vld [vmem:[#allocation11 + $0x4d0] sm:$0xff]
    %v1059 = vld [vmem:[#allocation11 + $0x4d8] sm:$0xff]
    %v1060 = vld [vmem:[#allocation11 + $0x4e0] sm:$0xff]
    %v1061 = vld [vmem:[#allocation11 + $0x4e8] sm:$0xff]
    %v1062 = vld [vmem:[#allocation11 + $0x4f0] sm:$0xff]
    %v1063 = vld [vmem:[#allocation11 + $0x4f8] sm:$0xff]
    %v1064 = vld [vmem:[#allocation11 + $0x500] sm:$0xff]
    %v1065 = vld [vmem:[#allocation11 + $0x508] sm:$0xff]
    %v1066 = vld [vmem:[#allocation11 + $0x510] sm:$0xff]
    %v1067 = vld [vmem:[#allocation11 + $0x518] sm:$0xff]
    %v1068 = vld [vmem:[#allocation11 + $0x520] sm:$0xff]
    %v1069 = vld [vmem:[#allocation11 + $0x528] sm:$0xff]
    %v1070 = vld [vmem:[#allocation11 + $0x530] sm:$0xff]
    %v1071 = vld [vmem:[#allocation11 + $0x538] sm:$0xff]
    %v1072 = vld [vmem:[#allocation11 + $0x540] sm:$0xff]
    %v1073 = vld [vmem:[#allocation11 + $0x548] sm:$0xff]
    %v1074 = vld [vmem:[#allocation11 + $0x550] sm:$0xff]
    %v1075 = vld [vmem:[#allocation11 + $0x558] sm:$0xff]
    %v1076 = vld [vmem:[#allocation11 + $0x560] sm:$0xff]
    %v1077 = vld [vmem:[#allocation11 + $0x568] sm:$0xff]
    %v1078 = vld [vmem:[#allocation11 + $0x570] sm:$0xff]
    %v1079 = vld [vmem:[#allocation11 + $0x578] sm:$0xff]
    %v1080 = vld [vmem:[#allocation11 + $0x580] sm:$0xff]
    %v1081 = vld [vmem:[#allocation11 + $0x588] sm:$0xff]
    %v1082 = vld [vmem:[#allocation11 + $0x590] sm:$0xff]
    %v1083 = vld [vmem:[#allocation11 + $0x598] sm:$0xff]
    %v1084 = vld [vmem:[#allocation11 + $0x5a0] sm:$0xff]
    %v1085 = vld [vmem:[#allocation11 + $0x5a8] sm:$0xff]
    %v1086 = vld [vmem:[#allocation11 + $0x5b0] sm:$0xff]
    %v1087 = vld [vmem:[#allocation11 + $0x5b8] sm:$0xff]
    %v1088 = vld [vmem:[#allocation11 + $0x5c0] sm:$0xff]
    %v1089 = vld [vmem:[#allocation11 + $0x5c8] sm:$0xff]
    %v1090 = vld [vmem:[#allocation11 + $0x5d0] sm:$0xff]
    %v1091 = vld [vmem:[#allocation11 + $0x5d8] sm:$0xff]
    %v1092 = vld [vmem:[#allocation11 + $0x5e0] sm:$0xff]
    %v1093 = vld [vmem:[#allocation11 + $0x5e8] sm:$0xff]
    %v1094 = vld [vmem:[#allocation11 + $0x5f0] sm:$0xff]
    %v1095 = vld [vmem:[#allocation11 + $0x5f8] sm:$0xff]
    %v1096 = vld [vmem:[#allocation11 + $0x600] sm:$0xff]
    %v1097 = vld [vmem:[#allocation11 + $0x608] sm:$0xff]
    %v1098 = vld [vmem:[#allocation11 + $0x610] sm:$0xff]
    %v1099 = vld [vmem:[#allocation11 + $0x618] sm:$0xff]
    %v1100 = vld [vmem:[#allocation11 + $0x620] sm:$0xff]
    %v1101 = vld [vmem:[#allocation11 + $0x628] sm:$0xff]
    %v1102 = vld [vmem:[#allocation11 + $0x630] sm:$0xff]
    %v1103 = vld [vmem:[#allocation11 + $0x638] sm:$0xff]
    %v1104 = vld [vmem:[#allocation11 + $0x640] sm:$0xff]
    %v1105 = vld [vmem:[#allocation11 + $0x648] sm:$0xff]
    %v1106 = vld [vmem:[#allocation11 + $0x650] sm:$0xff]
    %v1107 = vld [vmem:[#allocation11 + $0x658] sm:$0xff]
    %v1108 = vld [vmem:[#allocation11 + $0x660] sm:$0xff]
    %v1109 = vld [vmem:[#allocation11 + $0x668] sm:$0xff]
    %v1110 = vld [vmem:[#allocation11 + $0x670] sm:$0xff]
    %v1111 = vld [vmem:[#allocation11 + $0x678] sm:$0xff]
    %v1112 = vld [vmem:[#allocation11 + $0x680] sm:$0xff]
    %v1113 = vld [vmem:[#allocation11 + $0x688] sm:$0xff]
    %v1114 = vld [vmem:[#allocation11 + $0x690] sm:$0xff]
    %v1115 = vld [vmem:[#allocation11 + $0x698] sm:$0xff]
    %v1116 = vld [vmem:[#allocation11 + $0x6a0] sm:$0xff]
    %v1117 = vld [vmem:[#allocation11 + $0x6a8] sm:$0xff]
    %v1118 = vld [vmem:[#allocation11 + $0x6b0] sm:$0xff]
    %v1119 = vld [vmem:[#allocation11 + $0x6b8] sm:$0xff]
    %v1120 = vld [vmem:[#allocation11 + $0x6c0] sm:$0xff]
    %v1121 = vld [vmem:[#allocation11 + $0x6c8] sm:$0xff]
    %v1122 = vld [vmem:[#allocation11 + $0x6d0] sm:$0xff]
    %v1123 = vld [vmem:[#allocation11 + $0x6d8] sm:$0xff]
    %v1124 = vld [vmem:[#allocation11 + $0x6e0] sm:$0xff]
    %v1125 = vld [vmem:[#allocation11 + $0x6e8] sm:$0xff]
    %v1126 = vld [vmem:[#allocation11 + $0x6f0] sm:$0xff]
    %v1127 = vld [vmem:[#allocation11 + $0x6f8] sm:$0xff]
    %v1128 = vld [vmem:[#allocation11 + $0x700] sm:$0xff]
    %v1129 = vld [vmem:[#allocation11 + $0x708] sm:$0xff]
    %v1130 = vld [vmem:[#allocation11 + $0x710] sm:$0xff]
    %v1131 = vld [vmem:[#allocation11 + $0x718] sm:$0xff]
    %v1132 = vld [vmem:[#allocation11 + $0x720] sm:$0xff]
    %v1133 = vld [vmem:[#allocation11 + $0x728] sm:$0xff]
    %v1134 = vld [vmem:[#allocation11 + $0x730] sm:$0xff]
    %v1135 = vld [vmem:[#allocation11 + $0x738] sm:$0xff]
    %v1136 = vld [vmem:[#allocation11 + $0x740] sm:$0xff]
    %v1137 = vld [vmem:[#allocation11 + $0x748] sm:$0xff]
    %v1138 = vld [vmem:[#allocation11 + $0x750] sm:$0xff]
    %v1139 = vld [vmem:[#allocation11 + $0x758] sm:$0xff]
    %v1140 = vld [vmem:[#allocation11 + $0x760] sm:$0xff]
    %v1141 = vld [vmem:[#allocation11 + $0x768] sm:$0xff]
    %v1142 = vld [vmem:[#allocation11 + $0x770] sm:$0xff]
    %v1143 = vld [vmem:[#allocation11 + $0x778] sm:$0xff]
    %v1144 = vld [vmem:[#allocation11 + $0x780] sm:$0xff]
    %v1145 = vld [vmem:[#allocation11 + $0x788] sm:$0xff]
    %v1146 = vld [vmem:[#allocation11 + $0x790] sm:$0xff]
    %v1147 = vld [vmem:[#allocation11 + $0x798] sm:$0xff]
    %v1148 = vld [vmem:[#allocation11 + $0x7a0] sm:$0xff]
    %v1149 = vld [vmem:[#allocation11 + $0x7a8] sm:$0xff]
    %v1150 = vld [vmem:[#allocation11 + $0x7b0] sm:$0xff]
    %v1151 = vld [vmem:[#allocation11 + $0x7b8] sm:$0xff]
    %v1152 = vld [vmem:[#allocation11 + $0x7c0] sm:$0xff]
    %v1153 = vld [vmem:[#allocation11 + $0x7c8] sm:$0xff]
    %v1154 = vld [vmem:[#allocation11 + $0x7d0] sm:$0xff]
    %v1155 = vld [vmem:[#allocation11 + $0x7d8] sm:$0xff]
    %v1156 = vld [vmem:[#allocation11 + $0x7e0] sm:$0xff]
    %v1157 = vld [vmem:[#allocation11 + $0x7e8] sm:$0xff]
    %v1158 = vld [vmem:[#allocation11 + $0x7f0] sm:$0xff]
    %v1159 = vld [vmem:[#allocation11 + $0x7f8] sm:$0xff]
    %v1160 = vld [vmem:[#allocation11 + $0x800] sm:$0xff]
    %v1161 = vld [vmem:[#allocation11 + $0x808] sm:$0xff]
    %v1162 = vld [vmem:[#allocation11 + $0x810] sm:$0xff]
    %v1163 = vld [vmem:[#allocation11 + $0x818] sm:$0xff]
    %v1164 = vld [vmem:[#allocation11 + $0x820] sm:$0xff]
    %v1165 = vld [vmem:[#allocation11 + $0x828] sm:$0xff]
    %v1166 = vld [vmem:[#allocation11 + $0x830] sm:$0xff]
    %v1167 = vld [vmem:[#allocation11 + $0x838] sm:$0xff]
    %v1168 = vld [vmem:[#allocation11 + $0x840] sm:$0xff]
    %v1169 = vld [vmem:[#allocation11 + $0x848] sm:$0xff]
    %v1170 = vld [vmem:[#allocation11 + $0x850] sm:$0xff]
    %v1171 = vld [vmem:[#allocation11 + $0x858] sm:$0xff]
    %v1172 = vld [vmem:[#allocation11 + $0x860] sm:$0xff]
    %v1173 = vld [vmem:[#allocation11 + $0x868] sm:$0xff]
    %v1174 = vld [vmem:[#allocation11 + $0x870] sm:$0xff]
    %v1175 = vld [vmem:[#allocation11 + $0x878] sm:$0xff]
    %v1176 = vld [vmem:[#allocation11 + $0x880] sm:$0xff]
    %v1177 = vld [vmem:[#allocation11 + $0x888] sm:$0xff]
    %v1178 = vld [vmem:[#allocation11 + $0x890] sm:$0xff]
    %v1179 = vld [vmem:[#allocation11 + $0x898] sm:$0xff]
    %v1180 = vld [vmem:[#allocation11 + $0x8a0] sm:$0xff]
    %v1181 = vld [vmem:[#allocation11 + $0x8a8] sm:$0xff]
    %v1182 = vld [vmem:[#allocation11 + $0x8b0] sm:$0xff]
    %v1183 = vld [vmem:[#allocation11 + $0x8b8] sm:$0xff]
    %v1184 = vld [vmem:[#allocation11 + $0x8c0] sm:$0xff]
    %v1185 = vld [vmem:[#allocation11 + $0x8c8] sm:$0xff]
    %v1186 = vld [vmem:[#allocation11 + $0x8d0] sm:$0xff]
    %v1187 = vld [vmem:[#allocation11 + $0x8d8] sm:$0xff]
    %v1188 = vld [vmem:[#allocation11 + $0x8e0] sm:$0xff]
    %v1189 = vld [vmem:[#allocation11 + $0x8e8] sm:$0xff]
    %v1190 = vld [vmem:[#allocation11 + $0x8f0] sm:$0xff]
    %v1191 = vld [vmem:[#allocation11 + $0x8f8] sm:$0xff]
    %v1192 = vld [vmem:[#allocation11 + $0x900] sm:$0xff]
    %v1193 = vld [vmem:[#allocation11 + $0x908] sm:$0xff]
    %v1194 = vld [vmem:[#allocation11 + $0x910] sm:$0xff]
    %v1195 = vld [vmem:[#allocation11 + $0x918] sm:$0xff]
    %v1196 = vld [vmem:[#allocation11 + $0x920] sm:$0xff]
    %v1197 = vld [vmem:[#allocation11 + $0x928] sm:$0xff]
    %v1198 = vld [vmem:[#allocation11 + $0x930] sm:$0xff]
    %v1199 = vld [vmem:[#allocation11 + $0x938] sm:$0xff]
    %v1200 = vld [vmem:[#allocation11 + $0x940] sm:$0xff]
    %v1201 = vld [vmem:[#allocation11 + $0x948] sm:$0xff]
    %v1202 = vld [vmem:[#allocation11 + $0x950] sm:$0xff]
    %v1203 = vld [vmem:[#allocation11 + $0x958] sm:$0xff]
    %v1204 = vld [vmem:[#allocation11 + $0x960] sm:$0xff]
    %v1205 = vld [vmem:[#allocation11 + $0x968] sm:$0xff]
    %v1206 = vld [vmem:[#allocation11 + $0x970] sm:$0xff]
    %v1207 = vld [vmem:[#allocation11 + $0x978] sm:$0xff]
    %v1208 = vld [vmem:[#allocation11 + $0x980] sm:$0xff]
    %v1209 = vld [vmem:[#allocation11 + $0x988] sm:$0xff]
    %v1210 = vld [vmem:[#allocation11 + $0x990] sm:$0xff]
    %v1211 = vld [vmem:[#allocation11 + $0x998] sm:$0xff]
    %v1212 = vld [vmem:[#allocation11 + $0x9a0] sm:$0xff]
    %v1213 = vld [vmem:[#allocation11 + $0x9a8] sm:$0xff]
    %v1214 = vld [vmem:[#allocation11 + $0x9b0] sm:$0xff]
    %v1215 = vld [vmem:[#allocation11 + $0x9b8] sm:$0xff]
    %v1216 = vld [vmem:[#allocation11 + $0x9c0] sm:$0xff]
    %v1217 = vld [vmem:[#allocation11 + $0x9c8] sm:$0xff]
    %v1218 = vld [vmem:[#allocation11 + $0x9d0] sm:$0xff]
    %v1219 = vld [vmem:[#allocation11 + $0x9d8] sm:$0xff]
    %v1220 = vld [vmem:[#allocation11 + $0x9e0] sm:$0xff]
    %v1221 = vld [vmem:[#allocation11 + $0x9e8] sm:$0xff]
    %v1222 = vld [vmem:[#allocation11 + $0x9f0] sm:$0xff]
    %v1223 = vld [vmem:[#allocation11 + $0x9f8] sm:$0xff]
    %v1224 = vld [vmem:[#allocation11 + $0xa00] sm:$0xff]
    %v1225 = vld [vmem:[#allocation11 + $0xa08] sm:$0xff]
    %v1226 = vld [vmem:[#allocation11 + $0xa10] sm:$0xff]
    %v1227 = vld [vmem:[#allocation11 + $0xa18] sm:$0xff]
    %v1228 = vld [vmem:[#allocation11 + $0xa20] sm:$0xff]
    %v1229 = vld [vmem:[#allocation11 + $0xa28] sm:$0xff]
    %v1230 = vld [vmem:[#allocation11 + $0xa30] sm:$0xff]
    %v1231 = vld [vmem:[#allocation11 + $0xa38] sm:$0xff]
    %v1232 = vld [vmem:[#allocation11 + $0xa40] sm:$0xff]
    %v1233 = vld [vmem:[#allocation11 + $0xa48] sm:$0xff]
    %v1234 = vld [vmem:[#allocation11 + $0xa50] sm:$0xff]
    %v1235 = vld [vmem:[#allocation11 + $0xa58] sm:$0xff]
    %v1236 = vld [vmem:[#allocation11 + $0xa60] sm:$0xff]
    %v1237 = vld [vmem:[#allocation11 + $0xa68] sm:$0xff]
    %v1238 = vld [vmem:[#allocation11 + $0xa70] sm:$0xff]
    %v1239 = vld [vmem:[#allocation11 + $0xa78] sm:$0xff]
    %v1240 = vld [vmem:[#allocation11 + $0xa80] sm:$0xff]
    %v1241 = vld [vmem:[#allocation11 + $0xa88] sm:$0xff]
    %v1242 = vld [vmem:[#allocation11 + $0xa90] sm:$0xff]
    %v1243 = vld [vmem:[#allocation11 + $0xa98] sm:$0xff]
    %v1244 = vld [vmem:[#allocation11 + $0xaa0] sm:$0xff]
    %v1245 = vld [vmem:[#allocation11 + $0xaa8] sm:$0xff]
    %v1246 = vld [vmem:[#allocation11 + $0xab0] sm:$0xff]
    %v1247 = vld [vmem:[#allocation11 + $0xab8] sm:$0xff]
    %v1248 = vld [vmem:[#allocation11 + $0xac0] sm:$0xff]
    %v1249 = vld [vmem:[#allocation11 + $0xac8] sm:$0xff]
    %v1250 = vld [vmem:[#allocation11 + $0xad0] sm:$0xff]
    %v1251 = vld [vmem:[#allocation11 + $0xad8] sm:$0xff]
    %v1252 = vld [vmem:[#allocation11 + $0xae0] sm:$0xff]
    %v1253 = vld [vmem:[#allocation11 + $0xae8] sm:$0xff]
    %v1254 = vld [vmem:[#allocation11 + $0xaf0] sm:$0xff]
    %v1255 = vld [vmem:[#allocation11 + $0xaf8] sm:$0xff]
    %v1256 = vld [vmem:[#allocation11 + $0xb00] sm:$0xff]
    %v1257 = vld [vmem:[#allocation11 + $0xb08] sm:$0xff]
    %v1258 = vld [vmem:[#allocation11 + $0xb10] sm:$0xff]
    %v1259 = vld [vmem:[#allocation11 + $0xb18] sm:$0xff]
    %v1260 = vld [vmem:[#allocation11 + $0xb20] sm:$0xff]
    %v1261 = vld [vmem:[#allocation11 + $0xb28] sm:$0xff]
    %v1262 = vld [vmem:[#allocation11 + $0xb30] sm:$0xff]
    %v1263 = vld [vmem:[#allocation11 + $0xb38] sm:$0xff]
    %v1264 = vld [vmem:[#allocation11 + $0xb40] sm:$0xff]
    %v1265 = vld [vmem:[#allocation11 + $0xb48] sm:$0xff]
    %v1266 = vld [vmem:[#allocation11 + $0xb50] sm:$0xff]
    %v1267 = vld [vmem:[#allocation11 + $0xb58] sm:$0xff]
    %v1268 = vld [vmem:[#allocation11 + $0xb60] sm:$0xff]
    %v1269 = vld [vmem:[#allocation11 + $0xb68] sm:$0xff]
    %v1270 = vld [vmem:[#allocation11 + $0xb70] sm:$0xff]
    %v1271 = vld [vmem:[#allocation11 + $0xb78] sm:$0xff]
    %v1272 = vld [vmem:[#allocation11 + $0xb80] sm:$0xff]
    %v1273 = vld [vmem:[#allocation11 + $0xb88] sm:$0xff]
    %v1274 = vld [vmem:[#allocation11 + $0xb90] sm:$0xff]
    %v1275 = vld [vmem:[#allocation11 + $0xb98] sm:$0xff]
    %v1276 = vld [vmem:[#allocation11 + $0xba0] sm:$0xff]
    %v1277 = vld [vmem:[#allocation11 + $0xba8] sm:$0xff]
    %v1278 = vld [vmem:[#allocation11 + $0xbb0] sm:$0xff]
    %v1279 = vld [vmem:[#allocation11 + $0xbb8] sm:$0xff]
    %v1280 = vld [vmem:[#allocation11 + $0xbc0] sm:$0xff]
    %v1281 = vld [vmem:[#allocation11 + $0xbc8] sm:$0xff]
    %v1282 = vld [vmem:[#allocation11 + $0xbd0] sm:$0xff]
    %v1283 = vld [vmem:[#allocation11 + $0xbd8] sm:$0xff]
    %v1284 = vld [vmem:[#allocation11 + $0xbe0] sm:$0xff]
    %v1285 = vld [vmem:[#allocation11 + $0xbe8] sm:$0xff]
    %v1286 = vld [vmem:[#allocation11 + $0xbf0] sm:$0xff]
    %v1287 = vld [vmem:[#allocation11 + $0xbf8] sm:$0xff]
    %v1288 = vld [vmem:[#allocation11 + $0xc00] sm:$0xff]
    %v1289 = vld [vmem:[#allocation11 + $0xc08] sm:$0xff]
    %v1290 = vld [vmem:[#allocation11 + $0xc10] sm:$0xff]
    %v1291 = vld [vmem:[#allocation11 + $0xc18] sm:$0xff]
    %v1292 = vld [vmem:[#allocation11 + $0xc20] sm:$0xff]
    %v1293 = vld [vmem:[#allocation11 + $0xc28] sm:$0xff]
    %v1294 = vld [vmem:[#allocation11 + $0xc30] sm:$0xff]
    %v1295 = vld [vmem:[#allocation11 + $0xc38] sm:$0xff]
    %v1296 = vld [vmem:[#allocation11 + $0xc40] sm:$0xff]
    %v1297 = vld [vmem:[#allocation11 + $0xc48] sm:$0xff]
    %v1298 = vld [vmem:[#allocation11 + $0xc50] sm:$0xff]
    %v1299 = vld [vmem:[#allocation11 + $0xc58] sm:$0xff]
    %v1300 = vld [vmem:[#allocation11 + $0xc60] sm:$0xff]
    %v1301 = vld [vmem:[#allocation11 + $0xc68] sm:$0xff]
    %v1302 = vld [vmem:[#allocation11 + $0xc70] sm:$0xff]
    %v1303 = vld [vmem:[#allocation11 + $0xc78] sm:$0xff]
    %v1304 = vld [vmem:[#allocation11 + $0xc80] sm:$0xff]
    %v1305 = vld [vmem:[#allocation11 + $0xc88] sm:$0xff]
    %v1306 = vld [vmem:[#allocation11 + $0xc90] sm:$0xff]
    %v1307 = vld [vmem:[#allocation11 + $0xc98] sm:$0xff]
    %v1308 = vld [vmem:[#allocation11 + $0xca0] sm:$0xff]
    %v1309 = vld [vmem:[#allocation11 + $0xca8] sm:$0xff]
    %v1310 = vld [vmem:[#allocation11 + $0xcb0] sm:$0xff]
    %v1311 = vld [vmem:[#allocation11 + $0xcb8] sm:$0xff]
    %v1312 = vld [vmem:[#allocation11 + $0xcc0] sm:$0xff]
    %v1313 = vld [vmem:[#allocation11 + $0xcc8] sm:$0xff]
    %v1314 = vld [vmem:[#allocation11 + $0xcd0] sm:$0xff]
    %v1315 = vld [vmem:[#allocation11 + $0xcd8] sm:$0xff]
    %v1316 = vld [vmem:[#allocation11 + $0xce0] sm:$0xff]
    %v1317 = vld [vmem:[#allocation11 + $0xce8] sm:$0xff]
    %v1318 = vld [vmem:[#allocation11 + $0xcf0] sm:$0xff]
    %v1319 = vld [vmem:[#allocation11 + $0xcf8] sm:$0xff]
    %v1320 = vld [vmem:[#allocation11 + $0xd00] sm:$0xff]
    %v1321 = vld [vmem:[#allocation11 + $0xd08] sm:$0xff]
    %v1322 = vld [vmem:[#allocation11 + $0xd10] sm:$0xff]
    %v1323 = vld [vmem:[#allocation11 + $0xd18] sm:$0xff]
    %v1324 = vld [vmem:[#allocation11 + $0xd20] sm:$0xff]
    %v1325 = vld [vmem:[#allocation11 + $0xd28] sm:$0xff]
    %v1326 = vld [vmem:[#allocation11 + $0xd30] sm:$0xff]
    %v1327 = vld [vmem:[#allocation11 + $0xd38] sm:$0xff]
    %v1328 = vld [vmem:[#allocation11 + $0xd40] sm:$0xff]
    %v1329 = vld [vmem:[#allocation11 + $0xd48] sm:$0xff]
    %v1330 = vld [vmem:[#allocation11 + $0xd50] sm:$0xff]
    %v1331 = vld [vmem:[#allocation11 + $0xd58] sm:$0xff]
    %v1332 = vld [vmem:[#allocation11 + $0xd60] sm:$0xff]
    %v1333 = vld [vmem:[#allocation11 + $0xd68] sm:$0xff]
    %v1334 = vld [vmem:[#allocation11 + $0xd70] sm:$0xff]
    %v1335 = vld [vmem:[#allocation11 + $0xd78] sm:$0xff]
    %v1336 = vld [vmem:[#allocation11 + $0xd80] sm:$0xff]
    %v1337 = vld [vmem:[#allocation11 + $0xd88] sm:$0xff]
    %v1338 = vld [vmem:[#allocation11 + $0xd90] sm:$0xff]
    %v1339 = vld [vmem:[#allocation11 + $0xd98] sm:$0xff]
    %v1340 = vld [vmem:[#allocation11 + $0xda0] sm:$0xff]
    %v1341 = vld [vmem:[#allocation11 + $0xda8] sm:$0xff]
    %v1342 = vld [vmem:[#allocation11 + $0xdb0] sm:$0xff]
    %v1343 = vld [vmem:[#allocation11 + $0xdb8] sm:$0xff]
    %v1344 = vld [vmem:[#allocation11 + $0xdc0] sm:$0xff]
    %v1345 = vld [vmem:[#allocation11 + $0xdc8] sm:$0xff]
    %v1346 = vld [vmem:[#allocation11 + $0xdd0] sm:$0xff]
    %v1347 = vld [vmem:[#allocation11 + $0xdd8] sm:$0xff]
    %v1348 = vld [vmem:[#allocation11 + $0xde0] sm:$0xff]
    %v1349 = vld [vmem:[#allocation11 + $0xde8] sm:$0xff]
    %v1350 = vld [vmem:[#allocation11 + $0xdf0] sm:$0xff]
    %v1351 = vld [vmem:[#allocation11 + $0xdf8] sm:$0xff]
    %v1352 = vld [vmem:[#allocation11 + $0xe00] sm:$0xff]
    %v1353 = vld [vmem:[#allocation11 + $0xe08] sm:$0xff]
    %v1354 = vld [vmem:[#allocation11 + $0xe10] sm:$0xff]
    %v1355 = vld [vmem:[#allocation11 + $0xe18] sm:$0xff]
    %v1356 = vld [vmem:[#allocation11 + $0xe20] sm:$0xff]
    %v1357 = vld [vmem:[#allocation11 + $0xe28] sm:$0xff]
    %v1358 = vld [vmem:[#allocation11 + $0xe30] sm:$0xff]
    %v1359 = vld [vmem:[#allocation11 + $0xe38] sm:$0xff]
    %v1360 = vld [vmem:[#allocation11 + $0xe40] sm:$0xff]
    %v1361 = vld [vmem:[#allocation11 + $0xe48] sm:$0xff]
    %v1362 = vld [vmem:[#allocation11 + $0xe50] sm:$0xff]
    %v1363 = vld [vmem:[#allocation11 + $0xe58] sm:$0xff]
    %v1364 = vld [vmem:[#allocation11 + $0xe60] sm:$0xff]
    %v1365 = vld [vmem:[#allocation11 + $0xe68] sm:$0xff]
    %v1366 = vld [vmem:[#allocation11 + $0xe70] sm:$0xff]
    %v1367 = vld [vmem:[#allocation11 + $0xe78] sm:$0xff]
    %v1368 = vld [vmem:[#allocation11 + $0xe80] sm:$0xff]
    %v1369 = vld [vmem:[#allocation11 + $0xe88] sm:$0xff]
    %v1370 = vld [vmem:[#allocation11 + $0xe90] sm:$0xff]
    %v1371 = vld [vmem:[#allocation11 + $0xe98] sm:$0xff]
    %v1372 = vld [vmem:[#allocation11 + $0xea0] sm:$0xff]
    %v1373 = vld [vmem:[#allocation11 + $0xea8] sm:$0xff]
    %v1374 = vld [vmem:[#allocation11 + $0xeb0] sm:$0xff]
    %v1375 = vld [vmem:[#allocation11 + $0xeb8] sm:$0xff]
    %v1376 = vld [vmem:[#allocation11 + $0xec0] sm:$0xff]
    %v1377 = vld [vmem:[#allocation11 + $0xec8] sm:$0xff]
    %v1378 = vld [vmem:[#allocation11 + $0xed0] sm:$0xff]
    %v1379 = vld [vmem:[#allocation11 + $0xed8] sm:$0xff]
    %v1380 = vld [vmem:[#allocation11 + $0xee0] sm:$0xff]
    %v1381 = vld [vmem:[#allocation11 + $0xee8] sm:$0xff]
    %v1382 = vld [vmem:[#allocation11 + $0xef0] sm:$0xff]
    %v1383 = vld [vmem:[#allocation11 + $0xef8] sm:$0xff]
    %v1384 = vld [vmem:[#allocation11 + $0xf00] sm:$0xff]
    %v1385 = vld [vmem:[#allocation11 + $0xf08] sm:$0xff]
    %v1386 = vld [vmem:[#allocation11 + $0xf10] sm:$0xff]
    %v1387 = vld [vmem:[#allocation11 + $0xf18] sm:$0xff]
    %v1388 = vld [vmem:[#allocation11 + $0xf20] sm:$0xff]
    %v1389 = vld [vmem:[#allocation11 + $0xf28] sm:$0xff]
    %v1390 = vld [vmem:[#allocation11 + $0xf30] sm:$0xff]
    %v1391 = vld [vmem:[#allocation11 + $0xf38] sm:$0xff]
    %v1392 = vld [vmem:[#allocation11 + $0xf40] sm:$0xff]
    %v1393 = vld [vmem:[#allocation11 + $0xf48] sm:$0xff]
    %v1394 = vld [vmem:[#allocation11 + $0xf50] sm:$0xff]
    %v1395 = vld [vmem:[#allocation11 + $0xf58] sm:$0xff]
    %v1396 = vld [vmem:[#allocation11 + $0xf60] sm:$0xff]
    %v1397 = vld [vmem:[#allocation11 + $0xf68] sm:$0xff]
    %v1398 = vld [vmem:[#allocation11 + $0xf70] sm:$0xff]
    %v1399 = vld [vmem:[#allocation11 + $0xf78] sm:$0xff]
    %v1400 = vld [vmem:[#allocation11 + $0xf80] sm:$0xff]
    %v1401 = vld [vmem:[#allocation11 + $0xf88] sm:$0xff]
    %v1402 = vld [vmem:[#allocation11 + $0xf90] sm:$0xff]
    %v1403 = vld [vmem:[#allocation11 + $0xf98] sm:$0xff]
    %v1404 = vld [vmem:[#allocation11 + $0xfa0] sm:$0xff]
    %v1405 = vld [vmem:[#allocation11 + $0xfa8] sm:$0xff]
    %v1406 = vld [vmem:[#allocation11 + $0xfb0] sm:$0xff]
    %v1407 = vld [vmem:[#allocation11 + $0xfb8] sm:$0xff]
    %v1408 = vld [vmem:[#allocation11 + $0xfc0] sm:$0xff]
    %v1409 = vld [vmem:[#allocation11 + $0xfc8] sm:$0xff]
    %v1410 = vld [vmem:[#allocation11 + $0xfd0] sm:$0xff]
    %v1411 = vld [vmem:[#allocation11 + $0xfd8] sm:$0xff]
    %v1412 = vld [vmem:[#allocation11 + $0xfe0] sm:$0xff]
    %v1413 = vld [vmem:[#allocation11 + $0xfe8] sm:$0xff]
    %v1414 = vld [vmem:[#allocation11 + $0xff0] sm:$0xff]
    %v1415 = vld [vmem:[#allocation11 + $0xff8] sm:$0xff]
    %v1416 = vld [vmem:[#allocation11 + $0x1000] sm:$0xff]
    %v1417 = vld [vmem:[#allocation11 + $0x1008] sm:$0xff]
    %v1418 = vld [vmem:[#allocation11 + $0x1010] sm:$0xff]
    %v1419 = vld [vmem:[#allocation11 + $0x1018] sm:$0xff]
    %v1420 = vld [vmem:[#allocation11 + $0x1020] sm:$0xff]
    %v1421 = vld [vmem:[#allocation11 + $0x1028] sm:$0xff]
    %v1422 = vld [vmem:[#allocation11 + $0x1030] sm:$0xff]
    %v1423 = vld [vmem:[#allocation11 + $0x1038] sm:$0xff]
    %v1424 = vld [vmem:[#allocation11 + $0x1040] sm:$0xff]
    %v1425 = vld [vmem:[#allocation11 + $0x1048] sm:$0xff]
    %v1426 = vld [vmem:[#allocation11 + $0x1050] sm:$0xff]
    %v1427 = vld [vmem:[#allocation11 + $0x1058] sm:$0xff]
    %v1428 = vld [vmem:[#allocation11 + $0x1060] sm:$0xff]
    %v1429 = vld [vmem:[#allocation11 + $0x1068] sm:$0xff]
    %v1430 = vld [vmem:[#allocation11 + $0x1070] sm:$0xff]
    %v1431 = vld [vmem:[#allocation11 + $0x1078] sm:$0xff]
    %v1432 = vld [vmem:[#allocation11 + $0x1080] sm:$0xff]
    %v1433 = vld [vmem:[#allocation11 + $0x1088] sm:$0xff]
    %v1434 = vld [vmem:[#allocation11 + $0x1090] sm:$0xff]
    %v1435 = vld [vmem:[#allocation11 + $0x1098] sm:$0xff]
    %v1436 = vld [vmem:[#allocation11 + $0x10a0] sm:$0xff]
    %v1437 = vld [vmem:[#allocation11 + $0x10a8] sm:$0xff]
    %v1438 = vld [vmem:[#allocation11 + $0x10b0] sm:$0xff]
    %v1439 = vld [vmem:[#allocation11 + $0x10b8] sm:$0xff]
    %v1440 = vld [vmem:[#allocation11 + $0x10c0] sm:$0xff]
    %v1441 = vld [vmem:[#allocation11 + $0x10c8] sm:$0xff]
    %v1442 = vld [vmem:[#allocation11 + $0x10d0] sm:$0xff]
    %v1443 = vld [vmem:[#allocation11 + $0x10d8] sm:$0xff]
    %v1444 = vld [vmem:[#allocation11 + $0x10e0] sm:$0xff]
    %v1445 = vld [vmem:[#allocation11 + $0x10e8] sm:$0xff]
    %v1446 = vld [vmem:[#allocation11 + $0x10f0] sm:$0xff]
    %v1447 = vld [vmem:[#allocation11 + $0x10f8] sm:$0xff]
    %v1448 = vld [vmem:[#allocation11 + $0x1100] sm:$0xff]
    %v1449 = vld [vmem:[#allocation11 + $0x1108] sm:$0xff]
    %v1450 = vld [vmem:[#allocation11 + $0x1110] sm:$0xff]
    %v1451 = vld [vmem:[#allocation11 + $0x1118] sm:$0xff]
    %v1452 = vld [vmem:[#allocation11 + $0x1120] sm:$0xff]
    %v1453 = vld [vmem:[#allocation11 + $0x1128] sm:$0xff]
    %v1454 = vld [vmem:[#allocation11 + $0x1130] sm:$0xff]
    %v1455 = vld [vmem:[#allocation11 + $0x1138] sm:$0xff]
    %v1456 = vld [vmem:[#allocation11 + $0x1140] sm:$0xff]
    %v1457 = vld [vmem:[#allocation11 + $0x1148] sm:$0xff]
    %v1458 = vld [vmem:[#allocation11 + $0x1150] sm:$0xff]
    %v1459 = vld [vmem:[#allocation11 + $0x1158] sm:$0xff]
    %v1460 = vld [vmem:[#allocation11 + $0x1160] sm:$0xff]
    %v1461 = vld [vmem:[#allocation11 + $0x1168] sm:$0xff]
    %v1462 = vld [vmem:[#allocation11 + $0x1170] sm:$0xff]
    %v1463 = vld [vmem:[#allocation11 + $0x1178] sm:$0xff]
    %v1464 = vld [vmem:[#allocation11 + $0x1180] sm:$0xff]
    %v1465 = vld [vmem:[#allocation11 + $0x1188] sm:$0xff]
    %v1466 = vld [vmem:[#allocation11 + $0x1190] sm:$0xff]
    %v1467 = vld [vmem:[#allocation11 + $0x1198] sm:$0xff]
    %v1468 = vld [vmem:[#allocation11 + $0x11a0] sm:$0xff]
    %v1469 = vld [vmem:[#allocation11 + $0x11a8] sm:$0xff]
    %v1470 = vld [vmem:[#allocation11 + $0x11b0] sm:$0xff]
    %v1471 = vld [vmem:[#allocation11 + $0x11b8] sm:$0xff]
    %v1472 = vld [vmem:[#allocation11 + $0x11c0] sm:$0xff]
    %v1473 = vld [vmem:[#allocation11 + $0x11c8] sm:$0xff]
    %v1474 = vld [vmem:[#allocation11 + $0x11d0] sm:$0xff]
    %v1475 = vld [vmem:[#allocation11 + $0x11d8] sm:$0xff]
    %v1476 = vld [vmem:[#allocation11 + $0x11e0] sm:$0xff]
    %v1477 = vld [vmem:[#allocation11 + $0x11e8] sm:$0xff]
    %v1478 = vld [vmem:[#allocation11 + $0x11f0] sm:$0xff]
    %v1479 = vld [vmem:[#allocation11 + $0x11f8] sm:$0xff]
    %v1480 = vld [vmem:[#allocation11 + $0x1200] sm:$0xff]
    %v1481 = vld [vmem:[#allocation11 + $0x1208] sm:$0xff]
    %v1482 = vld [vmem:[#allocation11 + $0x1210] sm:$0xff]
    %v1483 = vld [vmem:[#allocation11 + $0x1218] sm:$0xff]
    %v1484 = vld [vmem:[#allocation11 + $0x1220] sm:$0xff]
    %v1485 = vld [vmem:[#allocation11 + $0x1228] sm:$0xff]
    %v1486 = vld [vmem:[#allocation11 + $0x1230] sm:$0xff]
    %v1487 = vld [vmem:[#allocation11 + $0x1238] sm:$0xff]
    %v1488 = vld [vmem:[#allocation11 + $0x1240] sm:$0xff]
    %v1489 = vld [vmem:[#allocation11 + $0x1248] sm:$0xff]
    %v1490 = vld [vmem:[#allocation11 + $0x1250] sm:$0xff]
    %v1491 = vld [vmem:[#allocation11 + $0x1258] sm:$0xff]
    %v1492 = vld [vmem:[#allocation11 + $0x1260] sm:$0xff]
    %v1493 = vld [vmem:[#allocation11 + $0x1268] sm:$0xff]
    %v1494 = vld [vmem:[#allocation11 + $0x1270] sm:$0xff]
    %v1495 = vld [vmem:[#allocation11 + $0x1278] sm:$0xff]
    %v1496 = vld [vmem:[#allocation11 + $0x1280] sm:$0xff]
    %v1497 = vld [vmem:[#allocation11 + $0x1288] sm:$0xff]
    %v1498 = vld [vmem:[#allocation11 + $0x1290] sm:$0xff]
    %v1499 = vld [vmem:[#allocation11 + $0x1298] sm:$0xff]
    %v1500 = vld [vmem:[#allocation11 + $0x12a0] sm:$0xff]
    %v1501 = vld [vmem:[#allocation11 + $0x12a8] sm:$0xff]
    %v1502 = vld [vmem:[#allocation11 + $0x12b0] sm:$0xff]
    %v1503 = vld [vmem:[#allocation11 + $0x12b8] sm:$0xff]
    %v1504 = vld [vmem:[#allocation11 + $0x12c0] sm:$0xff]
    %v1505 = vld [vmem:[#allocation11 + $0x12c8] sm:$0xff]
    %v1506 = vld [vmem:[#allocation11 + $0x12d0] sm:$0xff]
    %v1507 = vld [vmem:[#allocation11 + $0x12d8] sm:$0xff]
    %v1508 = vld [vmem:[#allocation11 + $0x12e0] sm:$0xff]
    %v1509 = vld [vmem:[#allocation11 + $0x12e8] sm:$0xff]
    %v1510 = vld [vmem:[#allocation11 + $0x12f0] sm:$0xff]
    %v1511 = vld [vmem:[#allocation11 + $0x12f8] sm:$0xff]
    %v1512 = vld [vmem:[#allocation11 + $0x1300] sm:$0xff]
    %v1513 = vld [vmem:[#allocation11 + $0x1308] sm:$0xff]
    %v1514 = vld [vmem:[#allocation11 + $0x1310] sm:$0xff]
    %v1515 = vld [vmem:[#allocation11 + $0x1318] sm:$0xff]
    %v1516 = vld [vmem:[#allocation11 + $0x1320] sm:$0xff]
    %v1517 = vld [vmem:[#allocation11 + $0x1328] sm:$0xff]
    %v1518 = vld [vmem:[#allocation11 + $0x1330] sm:$0xff]
    %v1519 = vld [vmem:[#allocation11 + $0x1338] sm:$0xff]
    %v1520 = vld [vmem:[#allocation11 + $0x1340] sm:$0xff]
    %v1521 = vld [vmem:[#allocation11 + $0x1348] sm:$0xff]
    %v1522 = vld [vmem:[#allocation11 + $0x1350] sm:$0xff]
    %v1523 = vld [vmem:[#allocation11 + $0x1358] sm:$0xff]
    %v1524 = vld [vmem:[#allocation11 + $0x1360] sm:$0xff]
    %v1525 = vld [vmem:[#allocation11 + $0x1368] sm:$0xff]
    %v1526 = vld [vmem:[#allocation11 + $0x1370] sm:$0xff]
    %v1527 = vld [vmem:[#allocation11 + $0x1378] sm:$0xff]
    %v1528 = vld [vmem:[#allocation11 + $0x1380] sm:$0xff]
    %v1529 = vld [vmem:[#allocation11 + $0x1388] sm:$0xff]
    %v1530 = vld [vmem:[#allocation11 + $0x1390] sm:$0xff]
    %v1531 = vld [vmem:[#allocation11 + $0x1398] sm:$0xff]
    %v1532 = vld [vmem:[#allocation11 + $0x13a0] sm:$0xff]
    %v1533 = vld [vmem:[#allocation11 + $0x13a8] sm:$0xff]
    %v1534 = vld [vmem:[#allocation11 + $0x13b0] sm:$0xff]
    %v1535 = vld [vmem:[#allocation11 + $0x13b8] sm:$0xff]
    %v1536 = vld [vmem:[#allocation11 + $0x13c0] sm:$0xff]
    %v1537 = vld [vmem:[#allocation11 + $0x13c8] sm:$0xff]
    %v1538 = vld [vmem:[#allocation11 + $0x13d0] sm:$0xff]
    %v1539 = vld [vmem:[#allocation11 + $0x13d8] sm:$0xff]
    %v1540 = vld [vmem:[#allocation11 + $0x13e0] sm:$0xff]
    %v1541 = vld [vmem:[#allocation11 + $0x13e8] sm:$0xff]
    %v1542 = vld [vmem:[#allocation11 + $0x13f0] sm:$0xff]
    %v1543 = vld [vmem:[#allocation11 + $0x13f8] sm:$0xff]
    %v1544 = vld [vmem:[#allocation11 + $0x1400] sm:$0xff]
    %v1545 = vld [vmem:[#allocation11 + $0x1408] sm:$0xff]
    %v1546 = vld [vmem:[#allocation11 + $0x1410] sm:$0xff]
    %v1547 = vld [vmem:[#allocation11 + $0x1418] sm:$0xff]
    %v1548 = vld [vmem:[#allocation11 + $0x1420] sm:$0xff]
    %v1549 = vld [vmem:[#allocation11 + $0x1428] sm:$0xff]
    %v1550 = vld [vmem:[#allocation11 + $0x1430] sm:$0xff]
    %v1551 = vld [vmem:[#allocation11 + $0x1438] sm:$0xff]
    %v1552 = vld [vmem:[#allocation11 + $0x1440] sm:$0xff]
    %v1553 = vld [vmem:[#allocation11 + $0x1448] sm:$0xff]
    %v1554 = vld [vmem:[#allocation11 + $0x1450] sm:$0xff]
    %v1555 = vld [vmem:[#allocation11 + $0x1458] sm:$0xff]
    %v1556 = vld [vmem:[#allocation11 + $0x1460] sm:$0xff]
    %v1557 = vld [vmem:[#allocation11 + $0x1468] sm:$0xff]
    %v1558 = vld [vmem:[#allocation11 + $0x1470] sm:$0xff]
    %v1559 = vld [vmem:[#allocation11 + $0x1478] sm:$0xff]
    %v1560 = vld [vmem:[#allocation11 + $0x1480] sm:$0xff]
    %v1561 = vld [vmem:[#allocation11 + $0x1488] sm:$0xff]
    %v1562 = vld [vmem:[#allocation11 + $0x1490] sm:$0xff]
    %v1563 = vld [vmem:[#allocation11 + $0x1498] sm:$0xff]
    %v1564 = vld [vmem:[#allocation11 + $0x14a0] sm:$0xff]
    %v1565 = vld [vmem:[#allocation11 + $0x14a8] sm:$0xff]
    %v1566 = vld [vmem:[#allocation11 + $0x14b0] sm:$0xff]
    %v1567 = vld [vmem:[#allocation11 + $0x14b8] sm:$0xff]
    %v1568 = vld [vmem:[#allocation11 + $0x14c0] sm:$0xff]
    %v1569 = vld [vmem:[#allocation11 + $0x14c8] sm:$0xff]
    %v1570 = vld [vmem:[#allocation11 + $0x14d0] sm:$0xff]
    %v1571 = vld [vmem:[#allocation11 + $0x14d8] sm:$0xff]
    %v1572 = vld [vmem:[#allocation11 + $0x14e0] sm:$0xff]
    %v1573 = vld [vmem:[#allocation11 + $0x14e8] sm:$0xff]
    %v1574 = vld [vmem:[#allocation11 + $0x14f0] sm:$0xff]
    %v1575 = vld [vmem:[#allocation11 + $0x14f8] sm:$0xff]
    %v1576 = vld [vmem:[#allocation11 + $0x1500] sm:$0xff]
    %v1577 = vld [vmem:[#allocation11 + $0x1508] sm:$0xff]
    %v1578 = vld [vmem:[#allocation11 + $0x1510] sm:$0xff]
    %v1579 = vld [vmem:[#allocation11 + $0x1518] sm:$0xff]
    %v1580 = vld [vmem:[#allocation11 + $0x1520] sm:$0xff]
    %v1581 = vld [vmem:[#allocation11 + $0x1528] sm:$0xff]
    %v1582 = vld [vmem:[#allocation11 + $0x1530] sm:$0xff]
    %v1583 = vld [vmem:[#allocation11 + $0x1538] sm:$0xff]
    %v1584 = vld [vmem:[#allocation11 + $0x1540] sm:$0xff]
    %v1585 = vld [vmem:[#allocation11 + $0x1548] sm:$0xff]
    %v1586 = vld [vmem:[#allocation11 + $0x1550] sm:$0xff]
    %v1587 = vld [vmem:[#allocation11 + $0x1558] sm:$0xff]
    %v1588 = vld [vmem:[#allocation11 + $0x1560] sm:$0xff]
    %v1589 = vld [vmem:[#allocation11 + $0x1568] sm:$0xff]
    %v1590 = vld [vmem:[#allocation11 + $0x1570] sm:$0xff]
    %v1591 = vld [vmem:[#allocation11 + $0x1578] sm:$0xff]
    %v1592 = vld [vmem:[#allocation11 + $0x1580] sm:$0xff]
    %v1593 = vld [vmem:[#allocation11 + $0x1588] sm:$0xff]
    %v1594 = vld [vmem:[#allocation11 + $0x1590] sm:$0xff]
    %v1595 = vld [vmem:[#allocation11 + $0x1598] sm:$0xff]
    %v1596 = vld [vmem:[#allocation11 + $0x15a0] sm:$0xff]
    %v1597 = vld [vmem:[#allocation11 + $0x15a8] sm:$0xff]
    %v1598 = vld [vmem:[#allocation11 + $0x15b0] sm:$0xff]
    %v1599 = vld [vmem:[#allocation11 + $0x15b8] sm:$0xff]
    %v1600 = vld [vmem:[#allocation11 + $0x15c0] sm:$0xff]
    %v1601 = vld [vmem:[#allocation11 + $0x15c8] sm:$0xff]
    %v1602 = vld [vmem:[#allocation11 + $0x15d0] sm:$0xff]
    %v1603 = vld [vmem:[#allocation11 + $0x15d8] sm:$0xff]
    %v1604 = vld [vmem:[#allocation11 + $0x15e0] sm:$0xff]
    %v1605 = vld [vmem:[#allocation11 + $0x15e8] sm:$0xff]
    %v1606 = vld [vmem:[#allocation11 + $0x15f0] sm:$0xff]
    %v1607 = vld [vmem:[#allocation11 + $0x15f8] sm:$0xff]
    %v1608 = vld [vmem:[#allocation11 + $0x1600] sm:$0xff]
    %v1609 = vld [vmem:[#allocation11 + $0x1608] sm:$0xff]
    %v1610 = vld [vmem:[#allocation11 + $0x1610] sm:$0xff]
    %v1611 = vld [vmem:[#allocation11 + $0x1618] sm:$0xff]
    %v1612 = vld [vmem:[#allocation11 + $0x1620] sm:$0xff]
    %v1613 = vld [vmem:[#allocation11 + $0x1628] sm:$0xff]
    %v1614 = vld [vmem:[#allocation11 + $0x1630] sm:$0xff]
    %v1615 = vld [vmem:[#allocation11 + $0x1638] sm:$0xff]
    %v1616 = vld [vmem:[#allocation11 + $0x1640] sm:$0xff]
    %v1617 = vld [vmem:[#allocation11 + $0x1648] sm:$0xff]
    %v1618 = vld [vmem:[#allocation11 + $0x1650] sm:$0xff]
    %v1619 = vld [vmem:[#allocation11 + $0x1658] sm:$0xff]
    %v1620 = vld [vmem:[#allocation11 + $0x1660] sm:$0xff]
    %v1621 = vld [vmem:[#allocation11 + $0x1668] sm:$0xff]
    %v1622 = vld [vmem:[#allocation11 + $0x1670] sm:$0xff]
    %v1623 = vld [vmem:[#allocation11 + $0x1678] sm:$0xff]
    %v1624 = vld [vmem:[#allocation11 + $0x1680] sm:$0xff]
    %v1625 = vld [vmem:[#allocation11 + $0x1688] sm:$0xff]
    %v1626 = vld [vmem:[#allocation11 + $0x1690] sm:$0xff]
    %v1627 = vld [vmem:[#allocation11 + $0x1698] sm:$0xff]
    %v1628 = vld [vmem:[#allocation11 + $0x16a0] sm:$0xff]
    %v1629 = vld [vmem:[#allocation11 + $0x16a8] sm:$0xff]
    %v1630 = vld [vmem:[#allocation11 + $0x16b0] sm:$0xff]
    %v1631 = vld [vmem:[#allocation11 + $0x16b8] sm:$0xff]
    %v1632 = vld [vmem:[#allocation11 + $0x16c0] sm:$0xff]
    %v1633 = vld [vmem:[#allocation11 + $0x16c8] sm:$0xff]
    %v1634 = vld [vmem:[#allocation11 + $0x16d0] sm:$0xff]
    %v1635 = vld [vmem:[#allocation11 + $0x16d8] sm:$0xff]
    %v1636 = vld [vmem:[#allocation11 + $0x16e0] sm:$0xff]
    %v1637 = vld [vmem:[#allocation11 + $0x16e8] sm:$0xff]
    %v1638 = vld [vmem:[#allocation11 + $0x16f0] sm:$0xff]
    %v1639 = vld [vmem:[#allocation11 + $0x16f8] sm:$0xff]
    %v1640 = vld [vmem:[#allocation11 + $0x1700] sm:$0xff]
    %v1641 = vld [vmem:[#allocation11 + $0x1708] sm:$0xff]
    %v1642 = vld [vmem:[#allocation11 + $0x1710] sm:$0xff]
    %v1643 = vld [vmem:[#allocation11 + $0x1718] sm:$0xff]
    %v1644 = vld [vmem:[#allocation11 + $0x1720] sm:$0xff]
    %v1645 = vld [vmem:[#allocation11 + $0x1728] sm:$0xff]
    %v1646 = vld [vmem:[#allocation11 + $0x1730] sm:$0xff]
    %v1647 = vld [vmem:[#allocation11 + $0x1738] sm:$0xff]
    %v1648 = vld [vmem:[#allocation11 + $0x1740] sm:$0xff]
    %v1649 = vld [vmem:[#allocation11 + $0x1748] sm:$0xff]
    %v1650 = vld [vmem:[#allocation11 + $0x1750] sm:$0xff]
    %v1651 = vld [vmem:[#allocation11 + $0x1758] sm:$0xff]
    %v1652 = vld [vmem:[#allocation11 + $0x1760] sm:$0xff]
    %v1653 = vld [vmem:[#allocation11 + $0x1768] sm:$0xff]
    %v1654 = vld [vmem:[#allocation11 + $0x1770] sm:$0xff]
    %v1655 = vld [vmem:[#allocation11 + $0x1778] sm:$0xff]
    %v1656 = vld [vmem:[#allocation11 + $0x1780] sm:$0xff]
    %v1657 = vld [vmem:[#allocation11 + $0x1788] sm:$0xff]
    %v1658 = vld [vmem:[#allocation11 + $0x1790] sm:$0xff]
    %v1659 = vld [vmem:[#allocation11 + $0x1798] sm:$0xff]
    %v1660 = vld [vmem:[#allocation11 + $0x17a0] sm:$0xff]
    %v1661 = vld [vmem:[#allocation11 + $0x17a8] sm:$0xff]
    %v1662 = vld [vmem:[#allocation11 + $0x17b0] sm:$0xff]
    %v1663 = vld [vmem:[#allocation11 + $0x17b8] sm:$0xff]
    %v1664 = vld [vmem:[#allocation11 + $0x17c0] sm:$0xff]
    %v1665 = vld [vmem:[#allocation11 + $0x17c8] sm:$0xff]
    %v1666 = vld [vmem:[#allocation11 + $0x17d0] sm:$0xff]
    %v1667 = vld [vmem:[#allocation11 + $0x17d8] sm:$0xff]
    %v1668 = vld [vmem:[#allocation11 + $0x17e0] sm:$0xff]
    %v1669 = vld [vmem:[#allocation11 + $0x17e8] sm:$0xff]
    %v1670 = vld [vmem:[#allocation11 + $0x17f0] sm:$0xff]
    %v1671 = vld [vmem:[#allocation11 + $0x17f8] sm:$0xff]
    %v1672 = vld [vmem:[#allocation11 + $0x1800] sm:$0xff]
    %v1673 = vld [vmem:[#allocation11 + $0x1808] sm:$0xff]
    %v1674 = vld [vmem:[#allocation11 + $0x1810] sm:$0xff]
    %v1675 = vld [vmem:[#allocation11 + $0x1818] sm:$0xff]
    %v1676 = vld [vmem:[#allocation11 + $0x1820] sm:$0xff]
    %v1677 = vld [vmem:[#allocation11 + $0x1828] sm:$0xff]
    %v1678 = vld [vmem:[#allocation11 + $0x1830] sm:$0xff]
    %v1679 = vld [vmem:[#allocation11 + $0x1838] sm:$0xff]
    %v1680 = vld [vmem:[#allocation11 + $0x1840] sm:$0xff]
    %v1681 = vld [vmem:[#allocation11 + $0x1848] sm:$0xff]
    %v1682 = vld [vmem:[#allocation11 + $0x1850] sm:$0xff]
    %v1683 = vld [vmem:[#allocation11 + $0x1858] sm:$0xff]
    %v1684 = vld [vmem:[#allocation11 + $0x1860] sm:$0xff]
    %v1685 = vld [vmem:[#allocation11 + $0x1868] sm:$0xff]
    %v1686 = vld [vmem:[#allocation11 + $0x1870] sm:$0xff]
    %v1687 = vld [vmem:[#allocation11 + $0x1878] sm:$0xff]
    %v1688 = vld [vmem:[#allocation11 + $0x1880] sm:$0xff]
    %v1689 = vld [vmem:[#allocation11 + $0x1888] sm:$0xff]
    %v1690 = vld [vmem:[#allocation11 + $0x1890] sm:$0xff]
    %v1691 = vld [vmem:[#allocation11 + $0x1898] sm:$0xff]
    %v1692 = vld [vmem:[#allocation11 + $0x18a0] sm:$0xff]
    %v1693 = vld [vmem:[#allocation11 + $0x18a8] sm:$0xff]
    %v1694 = vld [vmem:[#allocation11 + $0x18b0] sm:$0xff]
    %v1695 = vld [vmem:[#allocation11 + $0x18b8] sm:$0xff]
    %v1696 = vld [vmem:[#allocation11 + $0x18c0] sm:$0xff]
    %v1697 = vld [vmem:[#allocation11 + $0x18c8] sm:$0xff]
    %v1698 = vld [vmem:[#allocation11 + $0x18d0] sm:$0xff]
    %v1699 = vld [vmem:[#allocation11 + $0x18d8] sm:$0xff]
    %v1700 = vld [vmem:[#allocation11 + $0x18e0] sm:$0xff]
    %v1701 = vld [vmem:[#allocation11 + $0x18e8] sm:$0xff]
    %v1702 = vld [vmem:[#allocation11 + $0x18f0] sm:$0xff]
    %v1703 = vld [vmem:[#allocation11 + $0x18f8] sm:$0xff]
    %v1704 = vld [vmem:[#allocation11 + $0x1900] sm:$0xff]
    %v1705 = vld [vmem:[#allocation11 + $0x1908] sm:$0xff]
    %v1706 = vld [vmem:[#allocation11 + $0x1910] sm:$0xff]
    %v1707 = vld [vmem:[#allocation11 + $0x1918] sm:$0xff]
    %v1708 = vld [vmem:[#allocation11 + $0x1920] sm:$0xff]
    %v1709 = vld [vmem:[#allocation11 + $0x1928] sm:$0xff]
    %v1710 = vld [vmem:[#allocation11 + $0x1930] sm:$0xff]
    %v1711 = vld [vmem:[#allocation11 + $0x1938] sm:$0xff]
    %v1712 = vld [vmem:[#allocation11 + $0x1940] sm:$0xff]
    %v1713 = vld [vmem:[#allocation11 + $0x1948] sm:$0xff]
    %v1714 = vld [vmem:[#allocation11 + $0x1950] sm:$0xff]
    %v1715 = vld [vmem:[#allocation11 + $0x1958] sm:$0xff]
    %v1716 = vld [vmem:[#allocation11 + $0x1960] sm:$0xff]
    %v1717 = vld [vmem:[#allocation11 + $0x1968] sm:$0xff]
    %v1718 = vld [vmem:[#allocation11 + $0x1970] sm:$0xff]
    %v1719 = vld [vmem:[#allocation11 + $0x1978] sm:$0xff]
    %v1720 = vld [vmem:[#allocation11 + $0x1980] sm:$0xff]
    %v1721 = vld [vmem:[#allocation11 + $0x1988] sm:$0xff]
    %v1722 = vld [vmem:[#allocation11 + $0x1990] sm:$0xff]
    %v1723 = vld [vmem:[#allocation11 + $0x1998] sm:$0xff]
    %v1724 = vld [vmem:[#allocation11 + $0x19a0] sm:$0xff]
    %v1725 = vld [vmem:[#allocation11 + $0x19a8] sm:$0xff]
    %v1726 = vld [vmem:[#allocation11 + $0x19b0] sm:$0xff]
    %v1727 = vld [vmem:[#allocation11 + $0x19b8] sm:$0xff]
    %v1728 = vld [vmem:[#allocation11 + $0x19c0] sm:$0xff]
    %v1729 = vld [vmem:[#allocation11 + $0x19c8] sm:$0xff]
    %v1730 = vld [vmem:[#allocation11 + $0x19d0] sm:$0xff]
    %v1731 = vld [vmem:[#allocation11 + $0x19d8] sm:$0xff]
    %v1732 = vld [vmem:[#allocation11 + $0x19e0] sm:$0xff]
    %v1733 = vld [vmem:[#allocation11 + $0x19e8] sm:$0xff]
    %v1734 = vld [vmem:[#allocation11 + $0x19f0] sm:$0xff]
    %v1735 = vld [vmem:[#allocation11 + $0x19f8] sm:$0xff]
    %v1736 = vld [vmem:[#allocation11 + $0x1a00] sm:$0xff]
    %v1737 = vld [vmem:[#allocation11 + $0x1a08] sm:$0xff]
    %v1738 = vld [vmem:[#allocation11 + $0x1a10] sm:$0xff]
    %v1739 = vld [vmem:[#allocation11 + $0x1a18] sm:$0xff]
    %v1740 = vld [vmem:[#allocation11 + $0x1a20] sm:$0xff]
    %v1741 = vld [vmem:[#allocation11 + $0x1a28] sm:$0xff]
    %v1742 = vld [vmem:[#allocation11 + $0x1a30] sm:$0xff]
    %v1743 = vld [vmem:[#allocation11 + $0x1a38] sm:$0xff]
    %v1744 = vld [vmem:[#allocation11 + $0x1a40] sm:$0xff]
    %v1745 = vld [vmem:[#allocation11 + $0x1a48] sm:$0xff]
    %v1746 = vld [vmem:[#allocation11 + $0x1a50] sm:$0xff]
    %v1747 = vld [vmem:[#allocation11 + $0x1a58] sm:$0xff]
    %v1748 = vld [vmem:[#allocation11 + $0x1a60] sm:$0xff]
    %v1749 = vld [vmem:[#allocation11 + $0x1a68] sm:$0xff]
    %v1750 = vld [vmem:[#allocation11 + $0x1a70] sm:$0xff]
    %v1751 = vld [vmem:[#allocation11 + $0x1a78] sm:$0xff]
    %v1752 = vld [vmem:[#allocation11 + $0x1a80] sm:$0xff]
    %v1753 = vld [vmem:[#allocation11 + $0x1a88] sm:$0xff]
    %v1754 = vld [vmem:[#allocation11 + $0x1a90] sm:$0xff]
    %v1755 = vld [vmem:[#allocation11 + $0x1a98] sm:$0xff]
    %v1756 = vld [vmem:[#allocation11 + $0x1aa0] sm:$0xff]
    %v1757 = vld [vmem:[#allocation11 + $0x1aa8] sm:$0xff]
    %v1758 = vld [vmem:[#allocation11 + $0x1ab0] sm:$0xff]
    %v1759 = vld [vmem:[#allocation11 + $0x1ab8] sm:$0xff]
    %v1760 = vld [vmem:[#allocation11 + $0x1ac0] sm:$0xff]
    %v1761 = vld [vmem:[#allocation11 + $0x1ac8] sm:$0xff]
    %v1762 = vld [vmem:[#allocation11 + $0x1ad0] sm:$0xff]
    %v1763 = vld [vmem:[#allocation11 + $0x1ad8] sm:$0xff]
    %v1764 = vld [vmem:[#allocation11 + $0x1ae0] sm:$0xff]
    %v1765 = vld [vmem:[#allocation11 + $0x1ae8] sm:$0xff]
    %v1766 = vld [vmem:[#allocation11 + $0x1af0] sm:$0xff]
    %v1767 = vld [vmem:[#allocation11 + $0x1af8] sm:$0xff]
    %v1768 = vld [vmem:[#allocation11 + $0x1b00] sm:$0xff]
    %v1769 = vld [vmem:[#allocation11 + $0x1b08] sm:$0xff]
    %v1770 = vld [vmem:[#allocation11 + $0x1b10] sm:$0xff]
    %v1771 = vld [vmem:[#allocation11 + $0x1b18] sm:$0xff]
    %v1772 = vld [vmem:[#allocation11 + $0x1b20] sm:$0xff]
    %v1773 = vld [vmem:[#allocation11 + $0x1b28] sm:$0xff]
    %v1774 = vld [vmem:[#allocation11 + $0x1b30] sm:$0xff]
    %v1775 = vld [vmem:[#allocation11 + $0x1b38] sm:$0xff]
    %v1776 = vld [vmem:[#allocation11 + $0x1b40] sm:$0xff]
    %v1777 = vld [vmem:[#allocation11 + $0x1b48] sm:$0xff]
    %v1778 = vld [vmem:[#allocation11 + $0x1b50] sm:$0xff]
    %v1779 = vld [vmem:[#allocation11 + $0x1b58] sm:$0xff]
    %v1780 = vld [vmem:[#allocation11 + $0x1b60] sm:$0xff]
    %v1781 = vld [vmem:[#allocation11 + $0x1b68] sm:$0xff]
    %v1782 = vld [vmem:[#allocation11 + $0x1b70] sm:$0xff]
    %v1783 = vld [vmem:[#allocation11 + $0x1b78] sm:$0xff]
    %v1784 = vld [vmem:[#allocation11 + $0x1b80] sm:$0xff]
    %v1785 = vld [vmem:[#allocation11 + $0x1b88] sm:$0xff]
    %v1786 = vld [vmem:[#allocation11 + $0x1b90] sm:$0xff]
    %v1787 = vld [vmem:[#allocation11 + $0x1b98] sm:$0xff]
    %v1788 = vld [vmem:[#allocation11 + $0x1ba0] sm:$0xff]
    %v1789 = vld [vmem:[#allocation11 + $0x1ba8] sm:$0xff]
    %v1790 = vld [vmem:[#allocation11 + $0x1bb0] sm:$0xff]
    %v1791 = vld [vmem:[#allocation11 + $0x1bb8] sm:$0xff]
    %v1792 = vld [vmem:[#allocation11 + $0x1bc0] sm:$0xff]
    %v1793 = vld [vmem:[#allocation11 + $0x1bc8] sm:$0xff]
    %v1794 = vld [vmem:[#allocation11 + $0x1bd0] sm:$0xff]
    %v1795 = vld [vmem:[#allocation11 + $0x1bd8] sm:$0xff]
    %v1796 = vld [vmem:[#allocation11 + $0x1be0] sm:$0xff]
    %v1797 = vld [vmem:[#allocation11 + $0x1be8] sm:$0xff]
    %v1798 = vld [vmem:[#allocation11 + $0x1bf0] sm:$0xff]
    %v1799 = vld [vmem:[#allocation11 + $0x1bf8] sm:$0xff]
    %v1800 = vld [vmem:[#allocation11 + $0x1c00] sm:$0xff]
    %v1801 = vld [vmem:[#allocation11 + $0x1c08] sm:$0xff]
    %v1802 = vld [vmem:[#allocation11 + $0x1c10] sm:$0xff]
    %v1803 = vld [vmem:[#allocation11 + $0x1c18] sm:$0xff]
    %v1804 = vld [vmem:[#allocation11 + $0x1c20] sm:$0xff]
    %v1805 = vld [vmem:[#allocation11 + $0x1c28] sm:$0xff]
    %v1806 = vld [vmem:[#allocation11 + $0x1c30] sm:$0xff]
    %v1807 = vld [vmem:[#allocation11 + $0x1c38] sm:$0xff]
    %v1808 = vld [vmem:[#allocation11 + $0x1c40] sm:$0xff]
    %v1809 = vld [vmem:[#allocation11 + $0x1c48] sm:$0xff]
    %v1810 = vld [vmem:[#allocation11 + $0x1c50] sm:$0xff]
    %v1811 = vld [vmem:[#allocation11 + $0x1c58] sm:$0xff]
    %v1812 = vld [vmem:[#allocation11 + $0x1c60] sm:$0xff]
    %v1813 = vld [vmem:[#allocation11 + $0x1c68] sm:$0xff]
    %v1814 = vld [vmem:[#allocation11 + $0x1c70] sm:$0xff]
    %v1815 = vld [vmem:[#allocation11 + $0x1c78] sm:$0xff]
    %v1816 = vld [vmem:[#allocation11 + $0x1c80] sm:$0xff]
    %v1817 = vld [vmem:[#allocation11 + $0x1c88] sm:$0xff]
    %v1818 = vld [vmem:[#allocation11 + $0x1c90] sm:$0xff]
    %v1819 = vld [vmem:[#allocation11 + $0x1c98] sm:$0xff]
    %v1820 = vld [vmem:[#allocation11 + $0x1ca0] sm:$0xff]
    %v1821 = vld [vmem:[#allocation11 + $0x1ca8] sm:$0xff]
    %v1822 = vld [vmem:[#allocation11 + $0x1cb0] sm:$0xff]
    %v1823 = vld [vmem:[#allocation11 + $0x1cb8] sm:$0xff]
    %v1824 = vld [vmem:[#allocation11 + $0x1cc0] sm:$0xff]
    %v1825 = vld [vmem:[#allocation11 + $0x1cc8] sm:$0xff]
    %v1826 = vld [vmem:[#allocation11 + $0x1cd0] sm:$0xff]
    %v1827 = vld [vmem:[#allocation11 + $0x1cd8] sm:$0xff]
    %v1828 = vld [vmem:[#allocation11 + $0x1ce0] sm:$0xff]
    %v1829 = vld [vmem:[#allocation11 + $0x1ce8] sm:$0xff]
    %v1830 = vld [vmem:[#allocation11 + $0x1cf0] sm:$0xff]
    %v1831 = vld [vmem:[#allocation11 + $0x1cf8] sm:$0xff]
    %v1832 = vld [vmem:[#allocation11 + $0x1d00] sm:$0xff]
    %v1833 = vld [vmem:[#allocation11 + $0x1d08] sm:$0xff]
    %v1834 = vld [vmem:[#allocation11 + $0x1d10] sm:$0xff]
    %v1835 = vld [vmem:[#allocation11 + $0x1d18] sm:$0xff]
    %v1836 = vld [vmem:[#allocation11 + $0x1d20] sm:$0xff]
    %v1837 = vld [vmem:[#allocation11 + $0x1d28] sm:$0xff]
    %v1838 = vld [vmem:[#allocation11 + $0x1d30] sm:$0xff]
    %v1839 = vld [vmem:[#allocation11 + $0x1d38] sm:$0xff]
    %v1840 = vld [vmem:[#allocation11 + $0x1d40] sm:$0xff]
    %v1841 = vld [vmem:[#allocation11 + $0x1d48] sm:$0xff]
    %v1842 = vld [vmem:[#allocation11 + $0x1d50] sm:$0xff]
    %v1843 = vld [vmem:[#allocation11 + $0x1d58] sm:$0xff]
    %v1844 = vld [vmem:[#allocation11 + $0x1d60] sm:$0xff]
    %v1845 = vld [vmem:[#allocation11 + $0x1d68] sm:$0xff]
    %v1846 = vld [vmem:[#allocation11 + $0x1d70] sm:$0xff]
    %v1847 = vld [vmem:[#allocation11 + $0x1d78] sm:$0xff]
    %v1848 = vld [vmem:[#allocation11 + $0x1d80] sm:$0xff]
    %v1849 = vld [vmem:[#allocation11 + $0x1d88] sm:$0xff]
    %v1850 = vld [vmem:[#allocation11 + $0x1d90] sm:$0xff]
    %v1851 = vld [vmem:[#allocation11 + $0x1d98] sm:$0xff]
    %v1852 = vld [vmem:[#allocation11 + $0x1da0] sm:$0xff]
    %v1853 = vld [vmem:[#allocation11 + $0x1da8] sm:$0xff]
    %v1854 = vld [vmem:[#allocation11 + $0x1db0] sm:$0xff]
    %v1855 = vld [vmem:[#allocation11 + $0x1db8] sm:$0xff]
    %v1856 = vld [vmem:[#allocation11 + $0x1dc0] sm:$0xff]
    %v1857 = vld [vmem:[#allocation11 + $0x1dc8] sm:$0xff]
    %v1858 = vld [vmem:[#allocation11 + $0x1dd0] sm:$0xff]
    %v1859 = vld [vmem:[#allocation11 + $0x1dd8] sm:$0xff]
    %v1860 = vld [vmem:[#allocation11 + $0x1de0] sm:$0xff]
    %v1861 = vld [vmem:[#allocation11 + $0x1de8] sm:$0xff]
    %v1862 = vld [vmem:[#allocation11 + $0x1df0] sm:$0xff]
    %v1863 = vld [vmem:[#allocation11 + $0x1df8] sm:$0xff]
    %v1864 = vld [vmem:[#allocation11 + $0x1e00] sm:$0xff]
    %v1865 = vld [vmem:[#allocation11 + $0x1e08] sm:$0xff]
    %v1866 = vld [vmem:[#allocation11 + $0x1e10] sm:$0xff]
    %v1867 = vld [vmem:[#allocation11 + $0x1e18] sm:$0xff]
    %v1868 = vld [vmem:[#allocation11 + $0x1e20] sm:$0xff]
    %v1869 = vld [vmem:[#allocation11 + $0x1e28] sm:$0xff]
    %v1870 = vld [vmem:[#allocation11 + $0x1e30] sm:$0xff]
    %v1871 = vld [vmem:[#allocation11 + $0x1e38] sm:$0xff]
    %v1872 = vld [vmem:[#allocation11 + $0x1e40] sm:$0xff]
    %v1873 = vld [vmem:[#allocation11 + $0x1e48] sm:$0xff]
    %v1874 = vld [vmem:[#allocation11 + $0x1e50] sm:$0xff]
    %v1875 = vld [vmem:[#allocation11 + $0x1e58] sm:$0xff]
    %v1876 = vld [vmem:[#allocation11 + $0x1e60] sm:$0xff]
    %v1877 = vld [vmem:[#allocation11 + $0x1e68] sm:$0xff]
    %v1878 = vld [vmem:[#allocation11 + $0x1e70] sm:$0xff]
    %v1879 = vld [vmem:[#allocation11 + $0x1e78] sm:$0xff]
    %v1880 = vld [vmem:[#allocation11 + $0x1e80] sm:$0xff]
    %v1881 = vld [vmem:[#allocation11 + $0x1e88] sm:$0xff]
    %v1882 = vld [vmem:[#allocation11 + $0x1e90] sm:$0xff]
    %v1883 = vld [vmem:[#allocation11 + $0x1e98] sm:$0xff]
    %v1884 = vld [vmem:[#allocation11 + $0x1ea0] sm:$0xff]
    %v1885 = vld [vmem:[#allocation11 + $0x1ea8] sm:$0xff]
    %v1886 = vld [vmem:[#allocation11 + $0x1eb0] sm:$0xff]
    %v1887 = vld [vmem:[#allocation11 + $0x1eb8] sm:$0xff]
    %v1888 = vld [vmem:[#allocation11 + $0x1ec0] sm:$0xff]
    %v1889 = vld [vmem:[#allocation11 + $0x1ec8] sm:$0xff]
    %v1890 = vld [vmem:[#allocation11 + $0x1ed0] sm:$0xff]
    %v1891 = vld [vmem:[#allocation11 + $0x1ed8] sm:$0xff]
    %v1892 = vld [vmem:[#allocation11 + $0x1ee0] sm:$0xff]
    %v1893 = vld [vmem:[#allocation11 + $0x1ee8] sm:$0xff]
    %v1894 = vld [vmem:[#allocation11 + $0x1ef0] sm:$0xff]
    %v1895 = vld [vmem:[#allocation11 + $0x1ef8] sm:$0xff]
    %v1896 = vld [vmem:[#allocation11 + $0x1f00] sm:$0xff]
    %v1897 = vld [vmem:[#allocation11 + $0x1f08] sm:$0xff]
    %v1898 = vld [vmem:[#allocation11 + $0x1f10] sm:$0xff]
    %v1899 = vld [vmem:[#allocation11 + $0x1f18] sm:$0xff]
    %v1900 = vld [vmem:[#allocation11 + $0x1f20] sm:$0xff]
    %v1901 = vld [vmem:[#allocation11 + $0x1f28] sm:$0xff]
    %v1902 = vld [vmem:[#allocation11 + $0x1f30] sm:$0xff]
    %v1903 = vld [vmem:[#allocation11 + $0x1f38] sm:$0xff]
    %v1904 = vld [vmem:[#allocation11 + $0x1f40] sm:$0xff]
    %v1905 = vld [vmem:[#allocation11 + $0x1f48] sm:$0xff]
    %v1906 = vld [vmem:[#allocation11 + $0x1f50] sm:$0xff]
    %v1907 = vld [vmem:[#allocation11 + $0x1f58] sm:$0xff]
    %v1908 = vld [vmem:[#allocation11 + $0x1f60] sm:$0xff]
    %v1909 = vld [vmem:[#allocation11 + $0x1f68] sm:$0xff]
    %v1910 = vld [vmem:[#allocation11 + $0x1f70] sm:$0xff]
    %v1911 = vld [vmem:[#allocation11 + $0x1f78] sm:$0xff]
    %v1912 = vld [vmem:[#allocation11 + $0x1f80] sm:$0xff]
    %v1913 = vld [vmem:[#allocation11 + $0x1f88] sm:$0xff]
    %v1914 = vld [vmem:[#allocation11 + $0x1f90] sm:$0xff]
    %v1915 = vld [vmem:[#allocation11 + $0x1f98] sm:$0xff]
    %v1916 = vld [vmem:[#allocation11 + $0x1fa0] sm:$0xff]
    %v1917 = vld [vmem:[#allocation11 + $0x1fa8] sm:$0xff]
    %v1918 = vld [vmem:[#allocation11 + $0x1fb0] sm:$0xff]
    %v1919 = vld [vmem:[#allocation11 + $0x1fb8] sm:$0xff]
    %v1920 = vld [vmem:[#allocation11 + $0x1fc0] sm:$0xff]
    %v1921 = vld [vmem:[#allocation11 + $0x1fc8] sm:$0xff]
    %v1922 = vld [vmem:[#allocation11 + $0x1fd0] sm:$0xff]
    %v1923 = vld [vmem:[#allocation11 + $0x1fd8] sm:$0xff]
    %v1924 = vld [vmem:[#allocation11 + $0x1fe0] sm:$0xff]
    %v1925 = vld [vmem:[#allocation11 + $0x1fe8] sm:$0xff]
    %v1926 = vld [vmem:[#allocation11 + $0x1ff0] sm:$0xff]
    %v1927 = vld [vmem:[#allocation11 + $0x1ff8] sm:$0xff]
    %v1928 = vld [vmem:[#allocation13] sm:$0xf]
    %v1930 = vperm.slane %v1928, 0
    %v1931 = vperm.slane %v1928, 1
    %v1932 = vperm.slane %v1928, 2
    %v1933 = vperm.slane %v1928, 3
    %1938 = vmatpush.msra.mxu0 %v964
    %1939 = vmatpush.msra.mxu0 %v960
    %1940 = vmatpush.msra.mxu0 %v956
    %1941 = vmatpush.msra.mxu0 %v952
    %1942 = vmatpush.msra.mxu0 %v948
    %1943 = vmatpush.msra.mxu0 %v944
    %1944 = vmatpush.msra.mxu0 %v940
    %1945 = vmatpush.msra.mxu0 %v936
    %1946 = vmatpush.msra.mxu0 %v932
    %1947 = vmatpush.msra.mxu0 %v928
    %1948 = vmatpush.msra.mxu0 %v924
    %1949 = vmatpush.msra.mxu0 %v920
    %1950 = vmatpush.msra.mxu0 %v916
    %1951 = vmatpush.msra.mxu0 %v912
    %1952 = vmatpush.msra.mxu0 %v908
    %1953 = vmatpush.msra.mxu0 %v904
    %1954 = vmatmul.f32.gmra.mxu0 %v872
    %v1955 = vpop.f32.mrf.mxu0
    %v1956 = vadd.f32 %v1930, %v1955
    %1957 = vmatmul.f32.gmra.mxu0 %v888
    %v1958 = vpop.f32.mrf.mxu0
    %v1959 = vadd.f32 %v1930, %v1958
    %1960 = vdwg.mxu0
    %1961 = vmatpush.msra.mxu0 %v1028
    %1962 = vmatpush.msra.mxu0 %v1024
    %1963 = vmatpush.msra.mxu0 %v1020
    %1964 = vmatpush.msra.mxu0 %v1016
    %1965 = vmatpush.msra.mxu0 %v1012
    %1966 = vmatpush.msra.mxu0 %v1008
    %1967 = vmatpush.msra.mxu0 %v1004
    %1968 = vmatpush.msra.mxu0 %v1000
    %1969 = vmatpush.msra.mxu0 %v996
    %1970 = vmatpush.msra.mxu0 %v992
    %1971 = vmatpush.msra.mxu0 %v988
    %1972 = vmatpush.msra.mxu0 %v984
    %1973 = vmatpush.msra.mxu0 %v980
    %1974 = vmatpush.msra.mxu0 %v976
    %1975 = vmatpush.msra.mxu0 %v972
    %1976 = vmatpush.msra.mxu0 %v968
    %1977 = vmatmul.f32.gmra.mxu0 %v873
    %v1978 = vpop.f32.mrf.mxu0
    %v1979 = vadd.f32 %v1956, %v1978
    %1980 = vmatmul.f32.gmra.mxu0 %v889
    %v1981 = vpop.f32.mrf.mxu0
    %v1982 = vadd.f32 %v1959, %v1981
    %1983 = vdwg.mxu0
    %1984 = vmatpush.msra.mxu0 %v1092
    %1985 = vmatpush.msra.mxu0 %v1088
    %1986 = vmatpush.msra.mxu0 %v1084
    %1987 = vmatpush.msra.mxu0 %v1080
    %1988 = vmatpush.msra.mxu0 %v1076
    %1989 = vmatpush.msra.mxu0 %v1072
    %1990 = vmatpush.msra.mxu0 %v1068
    %1991 = vmatpush.msra.mxu0 %v1064
    %1992 = vmatpush.msra.mxu0 %v1060
    %1993 = vmatpush.msra.mxu0 %v1056
    %1994 = vmatpush.msra.mxu0 %v1052
    %1995 = vmatpush.msra.mxu0 %v1048
    %1996 = vmatpush.msra.mxu0 %v1044
    %1997 = vmatpush.msra.mxu0 %v1040
    %1998 = vmatpush.msra.mxu0 %v1036
    %1999 = vmatpush.msra.mxu0 %v1032
    %2000 = vmatmul.f32.gmra.mxu0 %v874
    %v2001 = vpop.f32.mrf.mxu0
    %v2002 = vadd.f32 %v1979, %v2001
    %2003 = vmatmul.f32.gmra.mxu0 %v890
    %v2004 = vpop.f32.mrf.mxu0
    %v2005 = vadd.f32 %v1982, %v2004
    %2006 = vdwg.mxu0
    %2007 = vmatpush.msra.mxu0 %v1156
    %2008 = vmatpush.msra.mxu0 %v1152
    %2009 = vmatpush.msra.mxu0 %v1148
    %2010 = vmatpush.msra.mxu0 %v1144
    %2011 = vmatpush.msra.mxu0 %v1140
    %2012 = vmatpush.msra.mxu0 %v1136
    %2013 = vmatpush.msra.mxu0 %v1132
    %2014 = vmatpush.msra.mxu0 %v1128
    %2015 = vmatpush.msra.mxu0 %v1124
    %2016 = vmatpush.msra.mxu0 %v1120
    %2017 = vmatpush.msra.mxu0 %v1116
    %2018 = vmatpush.msra.mxu0 %v1112
    %2019 = vmatpush.msra.mxu0 %v1108
    %2020 = vmatpush.msra.mxu0 %v1104
    %2021 = vmatpush.msra.mxu0 %v1100
    %2022 = vmatpush.msra.mxu0 %v1096
    %2023 = vmatmul.f32.gmra.mxu0 %v875
    %v2024 = vpop.f32.mrf.mxu0
    %v2025 = vadd.f32 %v2002, %v2024
    %2026 = vmatmul.f32.gmra.mxu0 %v891
    %v2027 = vpop.f32.mrf.mxu0
    %v2028 = vadd.f32 %v2005, %v2027
    %2029 = vdwg.mxu0
    %2030 = vmatpush.msra.mxu0 %v1220
    %2031 = vmatpush.msra.mxu0 %v1216
    %2032 = vmatpush.msra.mxu0 %v1212
    %2033 = vmatpush.msra.mxu0 %v1208
    %2034 = vmatpush.msra.mxu0 %v1204
    %2035 = vmatpush.msra.mxu0 %v1200
    %2036 = vmatpush.msra.mxu0 %v1196
    %2037 = vmatpush.msra.mxu0 %v1192
    %2038 = vmatpush.msra.mxu0 %v1188
    %2039 = vmatpush.msra.mxu0 %v1184
    %2040 = vmatpush.msra.mxu0 %v1180
    %2041 = vmatpush.msra.mxu0 %v1176
    %2042 = vmatpush.msra.mxu0 %v1172
    %2043 = vmatpush.msra.mxu0 %v1168
    %2044 = vmatpush.msra.mxu0 %v1164
    %2045 = vmatpush.msra.mxu0 %v1160
    %2046 = vmatmul.f32.gmra.mxu0 %v876
    %v2047 = vpop.f32.mrf.mxu0
    %v2048 = vadd.f32 %v2025, %v2047
    %2049 = vmatmul.f32.gmra.mxu0 %v892
    %v2050 = vpop.f32.mrf.mxu0
    %v2051 = vadd.f32 %v2028, %v2050
    %2052 = vdwg.mxu0
    %2053 = vmatpush.msra.mxu0 %v1284
    %2054 = vmatpush.msra.mxu0 %v1280
    %2055 = vmatpush.msra.mxu0 %v1276
    %2056 = vmatpush.msra.mxu0 %v1272
    %2057 = vmatpush.msra.mxu0 %v1268
    %2058 = vmatpush.msra.mxu0 %v1264
    %2059 = vmatpush.msra.mxu0 %v1260
    %2060 = vmatpush.msra.mxu0 %v1256
    %2061 = vmatpush.msra.mxu0 %v1252
    %2062 = vmatpush.msra.mxu0 %v1248
    %2063 = vmatpush.msra.mxu0 %v1244
    %2064 = vmatpush.msra.mxu0 %v1240
    %2065 = vmatpush.msra.mxu0 %v1236
    %2066 = vmatpush.msra.mxu0 %v1232
    %2067 = vmatpush.msra.mxu0 %v1228
    %2068 = vmatpush.msra.mxu0 %v1224
    %2069 = vmatmul.f32.gmra.mxu0 %v877
    %v2070 = vpop.f32.mrf.mxu0
    %v2071 = vadd.f32 %v2048, %v2070
    %2072 = vmatmul.f32.gmra.mxu0 %v893
    %v2073 = vpop.f32.mrf.mxu0
    %v2074 = vadd.f32 %v2051, %v2073
    %2075 = vdwg.mxu0
    %2076 = vmatpush.msra.mxu0 %v1348
    %2077 = vmatpush.msra.mxu0 %v1344
    %2078 = vmatpush.msra.mxu0 %v1340
    %2079 = vmatpush.msra.mxu0 %v1336
    %2080 = vmatpush.msra.mxu0 %v1332
    %2081 = vmatpush.msra.mxu0 %v1328
    %2082 = vmatpush.msra.mxu0 %v1324
    %2083 = vmatpush.msra.mxu0 %v1320
    %2084 = vmatpush.msra.mxu0 %v1316
    %2085 = vmatpush.msra.mxu0 %v1312
    %2086 = vmatpush.msra.mxu0 %v1308
    %2087 = vmatpush.msra.mxu0 %v1304
    %2088 = vmatpush.msra.mxu0 %v1300
    %2089 = vmatpush.msra.mxu0 %v1296
    %2090 = vmatpush.msra.mxu0 %v1292
    %2091 = vmatpush.msra.mxu0 %v1288
    %2092 = vmatmul.f32.gmra.mxu0 %v878
    %v2093 = vpop.f32.mrf.mxu0
    %v2094 = vadd.f32 %v2071, %v2093
    %2095 = vmatmul.f32.gmra.mxu0 %v894
    %v2096 = vpop.f32.mrf.mxu0
    %v2097 = vadd.f32 %v2074, %v2096
    %2098 = vdwg.mxu0
    %2099 = vmatpush.msra.mxu0 %v1412
    %2100 = vmatpush.msra.mxu0 %v1408
    %2101 = vmatpush.msra.mxu0 %v1404
    %2102 = vmatpush.msra.mxu0 %v1400
    %2103 = vmatpush.msra.mxu0 %v1396
    %2104 = vmatpush.msra.mxu0 %v1392
    %2105 = vmatpush.msra.mxu0 %v1388
    %2106 = vmatpush.msra.mxu0 %v1384
    %2107 = vmatpush.msra.mxu0 %v1380
    %2108 = vmatpush.msra.mxu0 %v1376
    %2109 = vmatpush.msra.mxu0 %v1372
    %2110 = vmatpush.msra.mxu0 %v1368
    %2111 = vmatpush.msra.mxu0 %v1364
    %2112 = vmatpush.msra.mxu0 %v1360
    %2113 = vmatpush.msra.mxu0 %v1356
    %2114 = vmatpush.msra.mxu0 %v1352
    %2115 = vmatmul.f32.gmra.mxu0 %v879
    %v2116 = vpop.f32.mrf.mxu0
    %v2117 = vadd.f32 %v2094, %v2116
    %2118 = vmatmul.f32.gmra.mxu0 %v895
    %v2119 = vpop.f32.mrf.mxu0
    %v2120 = vadd.f32 %v2097, %v2119
    %2121 = vdwg.mxu0
    %2122 = vmatpush.msra.mxu0 %v1476
    %2123 = vmatpush.msra.mxu0 %v1472
    %2124 = vmatpush.msra.mxu0 %v1468
    %2125 = vmatpush.msra.mxu0 %v1464
    %2126 = vmatpush.msra.mxu0 %v1460
    %2127 = vmatpush.msra.mxu0 %v1456
    %2128 = vmatpush.msra.mxu0 %v1452
    %2129 = vmatpush.msra.mxu0 %v1448
    %2130 = vmatpush.msra.mxu0 %v1444
    %2131 = vmatpush.msra.mxu0 %v1440
    %2132 = vmatpush.msra.mxu0 %v1436
    %2133 = vmatpush.msra.mxu0 %v1432
    %2134 = vmatpush.msra.mxu0 %v1428
    %2135 = vmatpush.msra.mxu0 %v1424
    %2136 = vmatpush.msra.mxu0 %v1420
    %2137 = vmatpush.msra.mxu0 %v1416
    %2138 = vmatmul.f32.gmra.mxu0 %v880
    %v2139 = vpop.f32.mrf.mxu0
    %v2140 = vadd.f32 %v2117, %v2139
    %2141 = vmatmul.f32.gmra.mxu0 %v896
    %v2142 = vpop.f32.mrf.mxu0
    %v2143 = vadd.f32 %v2120, %v2142
    %2144 = vdwg.mxu0
    %2145 = vmatpush.msra.mxu0 %v1540
    %2146 = vmatpush.msra.mxu0 %v1536
    %2147 = vmatpush.msra.mxu0 %v1532
    %2148 = vmatpush.msra.mxu0 %v1528
    %2149 = vmatpush.msra.mxu0 %v1524
    %2150 = vmatpush.msra.mxu0 %v1520
    %2151 = vmatpush.msra.mxu0 %v1516
    %2152 = vmatpush.msra.mxu0 %v1512
    %2153 = vmatpush.msra.mxu0 %v1508
    %2154 = vmatpush.msra.mxu0 %v1504
    %2155 = vmatpush.msra.mxu0 %v1500
    %2156 = vmatpush.msra.mxu0 %v1496
    %2157 = vmatpush.msra.mxu0 %v1492
    %2158 = vmatpush.msra.mxu0 %v1488
    %2159 = vmatpush.msra.mxu0 %v1484
    %2160 = vmatpush.msra.mxu0 %v1480
    %2161 = vmatmul.f32.gmra.mxu0 %v881
    %v2162 = vpop.f32.mrf.mxu0
    %v2163 = vadd.f32 %v2140, %v2162
    %2164 = vmatmul.f32.gmra.mxu0 %v897
    %v2165 = vpop.f32.mrf.mxu0
    %v2166 = vadd.f32 %v2143, %v2165
    %2167 = vdwg.mxu0
    %2168 = vmatpush.msra.mxu0 %v1604
    %2169 = vmatpush.msra.mxu0 %v1600
    %2170 = vmatpush.msra.mxu0 %v1596
    %2171 = vmatpush.msra.mxu0 %v1592
    %2172 = vmatpush.msra.mxu0 %v1588
    %2173 = vmatpush.msra.mxu0 %v1584
    %2174 = vmatpush.msra.mxu0 %v1580
    %2175 = vmatpush.msra.mxu0 %v1576
    %2176 = vmatpush.msra.mxu0 %v1572
    %2177 = vmatpush.msra.mxu0 %v1568
    %2178 = vmatpush.msra.mxu0 %v1564
    %2179 = vmatpush.msra.mxu0 %v1560
    %2180 = vmatpush.msra.mxu0 %v1556
    %2181 = vmatpush.msra.mxu0 %v1552
    %2182 = vmatpush.msra.mxu0 %v1548
    %2183 = vmatpush.msra.mxu0 %v1544
    %2184 = vmatmul.f32.gmra.mxu0 %v882
    %v2185 = vpop.f32.mrf.mxu0
    %v2186 = vadd.f32 %v2163, %v2185
    %2187 = vmatmul.f32.gmra.mxu0 %v898
    %v2188 = vpop.f32.mrf.mxu0
    %v2189 = vadd.f32 %v2166, %v2188
    %2190 = vdwg.mxu0
    %2191 = vmatpush.msra.mxu0 %v1668
    %2192 = vmatpush.msra.mxu0 %v1664
    %2193 = vmatpush.msra.mxu0 %v1660
    %2194 = vmatpush.msra.mxu0 %v1656
    %2195 = vmatpush.msra.mxu0 %v1652
    %2196 = vmatpush.msra.mxu0 %v1648
    %2197 = vmatpush.msra.mxu0 %v1644
    %2198 = vmatpush.msra.mxu0 %v1640
    %2199 = vmatpush.msra.mxu0 %v1636
    %2200 = vmatpush.msra.mxu0 %v1632
    %2201 = vmatpush.msra.mxu0 %v1628
    %2202 = vmatpush.msra.mxu0 %v1624
    %2203 = vmatpush.msra.mxu0 %v1620
    %2204 = vmatpush.msra.mxu0 %v1616
    %2205 = vmatpush.msra.mxu0 %v1612
    %2206 = vmatpush.msra.mxu0 %v1608
    %2207 = vmatmul.f32.gmra.mxu0 %v883
    %v2208 = vpop.f32.mrf.mxu0
    %v2209 = vadd.f32 %v2186, %v2208
    %2210 = vmatmul.f32.gmra.mxu0 %v899
    %v2211 = vpop.f32.mrf.mxu0
    %v2212 = vadd.f32 %v2189, %v2211
    %2213 = vdwg.mxu0
    %2214 = vmatpush.msra.mxu0 %v1732
    %2215 = vmatpush.msra.mxu0 %v1728
    %2216 = vmatpush.msra.mxu0 %v1724
    %2217 = vmatpush.msra.mxu0 %v1720
    %2218 = vmatpush.msra.mxu0 %v1716
    %2219 = vmatpush.msra.mxu0 %v1712
    %2220 = vmatpush.msra.mxu0 %v1708
    %2221 = vmatpush.msra.mxu0 %v1704
    %2222 = vmatpush.msra.mxu0 %v1700
    %2223 = vmatpush.msra.mxu0 %v1696
    %2224 = vmatpush.msra.mxu0 %v1692
    %2225 = vmatpush.msra.mxu0 %v1688
    %2226 = vmatpush.msra.mxu0 %v1684
    %2227 = vmatpush.msra.mxu0 %v1680
    %2228 = vmatpush.msra.mxu0 %v1676
    %2229 = vmatpush.msra.mxu0 %v1672
    %2230 = vmatmul.f32.gmra.mxu0 %v884
    %v2231 = vpop.f32.mrf.mxu0
    %v2232 = vadd.f32 %v2209, %v2231
    %2233 = vmatmul.f32.gmra.mxu0 %v900
    %v2234 = vpop.f32.mrf.mxu0
    %v2235 = vadd.f32 %v2212, %v2234
    %2236 = vdwg.mxu0
    %2237 = vmatpush.msra.mxu0 %v1796
    %2238 = vmatpush.msra.mxu0 %v1792
    %2239 = vmatpush.msra.mxu0 %v1788
    %2240 = vmatpush.msra.mxu0 %v1784
    %2241 = vmatpush.msra.mxu0 %v1780
    %2242 = vmatpush.msra.mxu0 %v1776
    %2243 = vmatpush.msra.mxu0 %v1772
    %2244 = vmatpush.msra.mxu0 %v1768
    %2245 = vmatpush.msra.mxu0 %v1764
    %2246 = vmatpush.msra.mxu0 %v1760
    %2247 = vmatpush.msra.mxu0 %v1756
    %2248 = vmatpush.msra.mxu0 %v1752
    %2249 = vmatpush.msra.mxu0 %v1748
    %2250 = vmatpush.msra.mxu0 %v1744
    %2251 = vmatpush.msra.mxu0 %v1740
    %2252 = vmatpush.msra.mxu0 %v1736
    %2253 = vmatmul.f32.gmra.mxu0 %v885
    %v2254 = vpop.f32.mrf.mxu0
    %v2255 = vadd.f32 %v2232, %v2254
    %2256 = vmatmul.f32.gmra.mxu0 %v901
    %v2257 = vpop.f32.mrf.mxu0
    %v2258 = vadd.f32 %v2235, %v2257
    %2259 = vdwg.mxu0
    %2260 = vmatpush.msra.mxu0 %v1860
    %2261 = vmatpush.msra.mxu0 %v1856
    %2262 = vmatpush.msra.mxu0 %v1852
    %2263 = vmatpush.msra.mxu0 %v1848
    %2264 = vmatpush.msra.mxu0 %v1844
    %2265 = vmatpush.msra.mxu0 %v1840
    %2266 = vmatpush.msra.mxu0 %v1836
    %2267 = vmatpush.msra.mxu0 %v1832
    %2268 = vmatpush.msra.mxu0 %v1828
    %2269 = vmatpush.msra.mxu0 %v1824
    %2270 = vmatpush.msra.mxu0 %v1820
    %2271 = vmatpush.msra.mxu0 %v1816
    %2272 = vmatpush.msra.mxu0 %v1812
    %2273 = vmatpush.msra.mxu0 %v1808
    %2274 = vmatpush.msra.mxu0 %v1804
    %2275 = vmatpush.msra.mxu0 %v1800
    %2276 = vmatmul.f32.gmra.mxu0 %v886
    %v2277 = vpop.f32.mrf.mxu0
    %v2278 = vadd.f32 %v2255, %v2277
    %2279 = vmatmul.f32.gmra.mxu0 %v902
    %v2280 = vpop.f32.mrf.mxu0
    %v2281 = vadd.f32 %v2258, %v2280
    %2282 = vdwg.mxu0
    %2283 = vmatpush.msra.mxu0 %v1924
    %2284 = vmatpush.msra.mxu0 %v1920
    %2285 = vmatpush.msra.mxu0 %v1916
    %2286 = vmatpush.msra.mxu0 %v1912
    %2287 = vmatpush.msra.mxu0 %v1908
    %2288 = vmatpush.msra.mxu0 %v1904
    %2289 = vmatpush.msra.mxu0 %v1900
    %2290 = vmatpush.msra.mxu0 %v1896
    %2291 = vmatpush.msra.mxu0 %v1892
    %2292 = vmatpush.msra.mxu0 %v1888
    %2293 = vmatpush.msra.mxu0 %v1884
    %2294 = vmatpush.msra.mxu0 %v1880
    %2295 = vmatpush.msra.mxu0 %v1876
    %2296 = vmatpush.msra.mxu0 %v1872
    %2297 = vmatpush.msra.mxu0 %v1868
    %2298 = vmatpush.msra.mxu0 %v1864
    %2299 = vmatmul.f32.gmra.mxu0 %v887
    %v2300 = vpop.f32.mrf.mxu0
    %v2301 = vadd.f32 %v2278, %v2300
    %2302 = vmatmul.f32.gmra.mxu0 %v903
    %v2303 = vpop.f32.mrf.mxu0
    %v2304 = vadd.f32 %v2281, %v2303
    %2305 = vdwg.mxu0
    %2306 = vmatpush.msra.mxu0 %v965
    %2307 = vmatpush.msra.mxu0 %v961
    %2308 = vmatpush.msra.mxu0 %v957
    %2309 = vmatpush.msra.mxu0 %v953
    %2310 = vmatpush.msra.mxu0 %v949
    %2311 = vmatpush.msra.mxu0 %v945
    %2312 = vmatpush.msra.mxu0 %v941
    %2313 = vmatpush.msra.mxu0 %v937
    %2314 = vmatpush.msra.mxu0 %v933
    %2315 = vmatpush.msra.mxu0 %v929
    %2316 = vmatpush.msra.mxu0 %v925
    %2317 = vmatpush.msra.mxu0 %v921
    %2318 = vmatpush.msra.mxu0 %v917
    %2319 = vmatpush.msra.mxu0 %v913
    %2320 = vmatpush.msra.mxu0 %v909
    %2321 = vmatpush.msra.mxu0 %v905
    %2322 = vmatmul.f32.gmra.mxu0 %v872
    %v2323 = vpop.f32.mrf.mxu0
    %v2324 = vadd.f32 %v1931, %v2323
    %2325 = vmatmul.f32.gmra.mxu0 %v888
    %v2326 = vpop.f32.mrf.mxu0
    %v2327 = vadd.f32 %v1931, %v2326
    %2328 = vdwg.mxu0
    %2329 = vmatpush.msra.mxu0 %v1029
    %2330 = vmatpush.msra.mxu0 %v1025
    %2331 = vmatpush.msra.mxu0 %v1021
    %2332 = vmatpush.msra.mxu0 %v1017
    %2333 = vmatpush.msra.mxu0 %v1013
    %2334 = vmatpush.msra.mxu0 %v1009
    %2335 = vmatpush.msra.mxu0 %v1005
    %2336 = vmatpush.msra.mxu0 %v1001
    %2337 = vmatpush.msra.mxu0 %v997
    %2338 = vmatpush.msra.mxu0 %v993
    %2339 = vmatpush.msra.mxu0 %v989
    %2340 = vmatpush.msra.mxu0 %v985
    %2341 = vmatpush.msra.mxu0 %v981
    %2342 = vmatpush.msra.mxu0 %v977
    %2343 = vmatpush.msra.mxu0 %v973
    %2344 = vmatpush.msra.mxu0 %v969
    %2345 = vmatmul.f32.gmra.mxu0 %v873
    %v2346 = vpop.f32.mrf.mxu0
    %v2347 = vadd.f32 %v2324, %v2346
    %2348 = vmatmul.f32.gmra.mxu0 %v889
    %v2349 = vpop.f32.mrf.mxu0
    %v2350 = vadd.f32 %v2327, %v2349
    %2351 = vdwg.mxu0
    %2352 = vmatpush.msra.mxu0 %v1093
    %2353 = vmatpush.msra.mxu0 %v1089
    %2354 = vmatpush.msra.mxu0 %v1085
    %2355 = vmatpush.msra.mxu0 %v1081
    %2356 = vmatpush.msra.mxu0 %v1077
    %2357 = vmatpush.msra.mxu0 %v1073
    %2358 = vmatpush.msra.mxu0 %v1069
    %2359 = vmatpush.msra.mxu0 %v1065
    %2360 = vmatpush.msra.mxu0 %v1061
    %2361 = vmatpush.msra.mxu0 %v1057
    %2362 = vmatpush.msra.mxu0 %v1053
    %2363 = vmatpush.msra.mxu0 %v1049
    %2364 = vmatpush.msra.mxu0 %v1045
    %2365 = vmatpush.msra.mxu0 %v1041
    %2366 = vmatpush.msra.mxu0 %v1037
    %2367 = vmatpush.msra.mxu0 %v1033
    %2368 = vmatmul.f32.gmra.mxu0 %v874
    %v2369 = vpop.f32.mrf.mxu0
    %v2370 = vadd.f32 %v2347, %v2369
    %2371 = vmatmul.f32.gmra.mxu0 %v890
    %v2372 = vpop.f32.mrf.mxu0
    %v2373 = vadd.f32 %v2350, %v2372
    %2374 = vdwg.mxu0
    %2375 = vmatpush.msra.mxu0 %v1157
    %2376 = vmatpush.msra.mxu0 %v1153
    %2377 = vmatpush.msra.mxu0 %v1149
    %2378 = vmatpush.msra.mxu0 %v1145
    %2379 = vmatpush.msra.mxu0 %v1141
    %2380 = vmatpush.msra.mxu0 %v1137
    %2381 = vmatpush.msra.mxu0 %v1133
    %2382 = vmatpush.msra.mxu0 %v1129
    %2383 = vmatpush.msra.mxu0 %v1125
    %2384 = vmatpush.msra.mxu0 %v1121
    %2385 = vmatpush.msra.mxu0 %v1117
    %2386 = vmatpush.msra.mxu0 %v1113
    %2387 = vmatpush.msra.mxu0 %v1109
    %2388 = vmatpush.msra.mxu0 %v1105
    %2389 = vmatpush.msra.mxu0 %v1101
    %2390 = vmatpush.msra.mxu0 %v1097
    %2391 = vmatmul.f32.gmra.mxu0 %v875
    %v2392 = vpop.f32.mrf.mxu0
    %v2393 = vadd.f32 %v2370, %v2392
    %2394 = vmatmul.f32.gmra.mxu0 %v891
    %v2395 = vpop.f32.mrf.mxu0
    %v2396 = vadd.f32 %v2373, %v2395
    %2397 = vdwg.mxu0
    %2398 = vmatpush.msra.mxu0 %v1221
    %2399 = vmatpush.msra.mxu0 %v1217
    %2400 = vmatpush.msra.mxu0 %v1213
    %2401 = vmatpush.msra.mxu0 %v1209
    %2402 = vmatpush.msra.mxu0 %v1205
    %2403 = vmatpush.msra.mxu0 %v1201
    %2404 = vmatpush.msra.mxu0 %v1197
    %2405 = vmatpush.msra.mxu0 %v1193
    %2406 = vmatpush.msra.mxu0 %v1189
    %2407 = vmatpush.msra.mxu0 %v1185
    %2408 = vmatpush.msra.mxu0 %v1181
    %2409 = vmatpush.msra.mxu0 %v1177
    %2410 = vmatpush.msra.mxu0 %v1173
    %2411 = vmatpush.msra.mxu0 %v1169
    %2412 = vmatpush.msra.mxu0 %v1165
    %2413 = vmatpush.msra.mxu0 %v1161
    %2414 = vmatmul.f32.gmra.mxu0 %v876
    %v2415 = vpop.f32.mrf.mxu0
    %v2416 = vadd.f32 %v2393, %v2415
    %2417 = vmatmul.f32.gmra.mxu0 %v892
    %v2418 = vpop.f32.mrf.mxu0
    %v2419 = vadd.f32 %v2396, %v2418
    %2420 = vdwg.mxu0
    %2421 = vmatpush.msra.mxu0 %v1285
    %2422 = vmatpush.msra.mxu0 %v1281
    %2423 = vmatpush.msra.mxu0 %v1277
    %2424 = vmatpush.msra.mxu0 %v1273
    %2425 = vmatpush.msra.mxu0 %v1269
    %2426 = vmatpush.msra.mxu0 %v1265
    %2427 = vmatpush.msra.mxu0 %v1261
    %2428 = vmatpush.msra.mxu0 %v1257
    %2429 = vmatpush.msra.mxu0 %v1253
    %2430 = vmatpush.msra.mxu0 %v1249
    %2431 = vmatpush.msra.mxu0 %v1245
    %2432 = vmatpush.msra.mxu0 %v1241
    %2433 = vmatpush.msra.mxu0 %v1237
    %2434 = vmatpush.msra.mxu0 %v1233
    %2435 = vmatpush.msra.mxu0 %v1229
    %2436 = vmatpush.msra.mxu0 %v1225
    %2437 = vmatmul.f32.gmra.mxu0 %v877
    %v2438 = vpop.f32.mrf.mxu0
    %v2439 = vadd.f32 %v2416, %v2438
    %2440 = vmatmul.f32.gmra.mxu0 %v893
    %v2441 = vpop.f32.mrf.mxu0
    %v2442 = vadd.f32 %v2419, %v2441
    %2443 = vdwg.mxu0
    %2444 = vmatpush.msra.mxu0 %v1349
    %2445 = vmatpush.msra.mxu0 %v1345
    %2446 = vmatpush.msra.mxu0 %v1341
    %2447 = vmatpush.msra.mxu0 %v1337
    %2448 = vmatpush.msra.mxu0 %v1333
    %2449 = vmatpush.msra.mxu0 %v1329
    %2450 = vmatpush.msra.mxu0 %v1325
    %2451 = vmatpush.msra.mxu0 %v1321
    %2452 = vmatpush.msra.mxu0 %v1317
    %2453 = vmatpush.msra.mxu0 %v1313
    %2454 = vmatpush.msra.mxu0 %v1309
    %2455 = vmatpush.msra.mxu0 %v1305
    %2456 = vmatpush.msra.mxu0 %v1301
    %2457 = vmatpush.msra.mxu0 %v1297
    %2458 = vmatpush.msra.mxu0 %v1293
    %2459 = vmatpush.msra.mxu0 %v1289
    %2460 = vmatmul.f32.gmra.mxu0 %v878
    %v2461 = vpop.f32.mrf.mxu0
    %v2462 = vadd.f32 %v2439, %v2461
    %2463 = vmatmul.f32.gmra.mxu0 %v894
    %v2464 = vpop.f32.mrf.mxu0
    %v2465 = vadd.f32 %v2442, %v2464
    %2466 = vdwg.mxu0
    %2467 = vmatpush.msra.mxu0 %v1413
    %2468 = vmatpush.msra.mxu0 %v1409
    %2469 = vmatpush.msra.mxu0 %v1405
    %2470 = vmatpush.msra.mxu0 %v1401
    %2471 = vmatpush.msra.mxu0 %v1397
    %2472 = vmatpush.msra.mxu0 %v1393
    %2473 = vmatpush.msra.mxu0 %v1389
    %2474 = vmatpush.msra.mxu0 %v1385
    %2475 = vmatpush.msra.mxu0 %v1381
    %2476 = vmatpush.msra.mxu0 %v1377
    %2477 = vmatpush.msra.mxu0 %v1373
    %2478 = vmatpush.msra.mxu0 %v1369
    %2479 = vmatpush.msra.mxu0 %v1365
    %2480 = vmatpush.msra.mxu0 %v1361
    %2481 = vmatpush.msra.mxu0 %v1357
    %2482 = vmatpush.msra.mxu0 %v1353
    %2483 = vmatmul.f32.gmra.mxu0 %v879
    %v2484 = vpop.f32.mrf.mxu0
    %v2485 = vadd.f32 %v2462, %v2484
    %2486 = vmatmul.f32.gmra.mxu0 %v895
    %v2487 = vpop.f32.mrf.mxu0
    %v2488 = vadd.f32 %v2465, %v2487
    %2489 = vdwg.mxu0
    %2490 = vmatpush.msra.mxu0 %v1477
    %2491 = vmatpush.msra.mxu0 %v1473
    %2492 = vmatpush.msra.mxu0 %v1469
    %2493 = vmatpush.msra.mxu0 %v1465
    %2494 = vmatpush.msra.mxu0 %v1461
    %2495 = vmatpush.msra.mxu0 %v1457
    %2496 = vmatpush.msra.mxu0 %v1453
    %2497 = vmatpush.msra.mxu0 %v1449
    %2498 = vmatpush.msra.mxu0 %v1445
    %2499 = vmatpush.msra.mxu0 %v1441
    %2500 = vmatpush.msra.mxu0 %v1437
    %2501 = vmatpush.msra.mxu0 %v1433
    %2502 = vmatpush.msra.mxu0 %v1429
    %2503 = vmatpush.msra.mxu0 %v1425
    %2504 = vmatpush.msra.mxu0 %v1421
    %2505 = vmatpush.msra.mxu0 %v1417
    %2506 = vmatmul.f32.gmra.mxu0 %v880
    %v2507 = vpop.f32.mrf.mxu0
    %v2508 = vadd.f32 %v2485, %v2507
    %2509 = vmatmul.f32.gmra.mxu0 %v896
    %v2510 = vpop.f32.mrf.mxu0
    %v2511 = vadd.f32 %v2488, %v2510
    %2512 = vdwg.mxu0
    %2513 = vmatpush.msra.mxu0 %v1541
    %2514 = vmatpush.msra.mxu0 %v1537
    %2515 = vmatpush.msra.mxu0 %v1533
    %2516 = vmatpush.msra.mxu0 %v1529
    %2517 = vmatpush.msra.mxu0 %v1525
    %2518 = vmatpush.msra.mxu0 %v1521
    %2519 = vmatpush.msra.mxu0 %v1517
    %2520 = vmatpush.msra.mxu0 %v1513
    %2521 = vmatpush.msra.mxu0 %v1509
    %2522 = vmatpush.msra.mxu0 %v1505
    %2523 = vmatpush.msra.mxu0 %v1501
    %2524 = vmatpush.msra.mxu0 %v1497
    %2525 = vmatpush.msra.mxu0 %v1493
    %2526 = vmatpush.msra.mxu0 %v1489
    %2527 = vmatpush.msra.mxu0 %v1485
    %2528 = vmatpush.msra.mxu0 %v1481
    %2529 = vmatmul.f32.gmra.mxu0 %v881
    %v2530 = vpop.f32.mrf.mxu0
    %v2531 = vadd.f32 %v2508, %v2530
    %2532 = vmatmul.f32.gmra.mxu0 %v897
    %v2533 = vpop.f32.mrf.mxu0
    %v2534 = vadd.f32 %v2511, %v2533
    %2535 = vdwg.mxu0
    %2536 = vmatpush.msra.mxu0 %v1605
    %2537 = vmatpush.msra.mxu0 %v1601
    %2538 = vmatpush.msra.mxu0 %v1597
    %2539 = vmatpush.msra.mxu0 %v1593
    %2540 = vmatpush.msra.mxu0 %v1589
    %2541 = vmatpush.msra.mxu0 %v1585
    %2542 = vmatpush.msra.mxu0 %v1581
    %2543 = vmatpush.msra.mxu0 %v1577
    %2544 = vmatpush.msra.mxu0 %v1573
    %2545 = vmatpush.msra.mxu0 %v1569
    %2546 = vmatpush.msra.mxu0 %v1565
    %2547 = vmatpush.msra.mxu0 %v1561
    %2548 = vmatpush.msra.mxu0 %v1557
    %2549 = vmatpush.msra.mxu0 %v1553
    %2550 = vmatpush.msra.mxu0 %v1549
    %2551 = vmatpush.msra.mxu0 %v1545
    %2552 = vmatmul.f32.gmra.mxu0 %v882
    %v2553 = vpop.f32.mrf.mxu0
    %v2554 = vadd.f32 %v2531, %v2553
    %2555 = vmatmul.f32.gmra.mxu0 %v898
    %v2556 = vpop.f32.mrf.mxu0
    %v2557 = vadd.f32 %v2534, %v2556
    %2558 = vdwg.mxu0
    %2559 = vmatpush.msra.mxu0 %v1669
    %2560 = vmatpush.msra.mxu0 %v1665
    %2561 = vmatpush.msra.mxu0 %v1661
    %2562 = vmatpush.msra.mxu0 %v1657
    %2563 = vmatpush.msra.mxu0 %v1653
    %2564 = vmatpush.msra.mxu0 %v1649
    %2565 = vmatpush.msra.mxu0 %v1645
    %2566 = vmatpush.msra.mxu0 %v1641
    %2567 = vmatpush.msra.mxu0 %v1637
    %2568 = vmatpush.msra.mxu0 %v1633
    %2569 = vmatpush.msra.mxu0 %v1629
    %2570 = vmatpush.msra.mxu0 %v1625
    %2571 = vmatpush.msra.mxu0 %v1621
    %2572 = vmatpush.msra.mxu0 %v1617
    %2573 = vmatpush.msra.mxu0 %v1613
    %2574 = vmatpush.msra.mxu0 %v1609
    %2575 = vmatmul.f32.gmra.mxu0 %v883
    %v2576 = vpop.f32.mrf.mxu0
    %v2577 = vadd.f32 %v2554, %v2576
    %2578 = vmatmul.f32.gmra.mxu0 %v899
    %v2579 = vpop.f32.mrf.mxu0
    %v2580 = vadd.f32 %v2557, %v2579
    %2581 = vdwg.mxu0
    %2582 = vmatpush.msra.mxu0 %v1733
    %2583 = vmatpush.msra.mxu0 %v1729
    %2584 = vmatpush.msra.mxu0 %v1725
    %2585 = vmatpush.msra.mxu0 %v1721
    %2586 = vmatpush.msra.mxu0 %v1717
    %2587 = vmatpush.msra.mxu0 %v1713
    %2588 = vmatpush.msra.mxu0 %v1709
    %2589 = vmatpush.msra.mxu0 %v1705
    %2590 = vmatpush.msra.mxu0 %v1701
    %2591 = vmatpush.msra.mxu0 %v1697
    %2592 = vmatpush.msra.mxu0 %v1693
    %2593 = vmatpush.msra.mxu0 %v1689
    %2594 = vmatpush.msra.mxu0 %v1685
    %2595 = vmatpush.msra.mxu0 %v1681
    %2596 = vmatpush.msra.mxu0 %v1677
    %2597 = vmatpush.msra.mxu0 %v1673
    %2598 = vmatmul.f32.gmra.mxu0 %v884
    %v2599 = vpop.f32.mrf.mxu0
    %v2600 = vadd.f32 %v2577, %v2599
    %2601 = vmatmul.f32.gmra.mxu0 %v900
    %v2602 = vpop.f32.mrf.mxu0
    %v2603 = vadd.f32 %v2580, %v2602
    %2604 = vdwg.mxu0
    %2605 = vmatpush.msra.mxu0 %v1797
    %2606 = vmatpush.msra.mxu0 %v1793
    %2607 = vmatpush.msra.mxu0 %v1789
    %2608 = vmatpush.msra.mxu0 %v1785
    %2609 = vmatpush.msra.mxu0 %v1781
    %2610 = vmatpush.msra.mxu0 %v1777
    %2611 = vmatpush.msra.mxu0 %v1773
    %2612 = vmatpush.msra.mxu0 %v1769
    %2613 = vmatpush.msra.mxu0 %v1765
    %2614 = vmatpush.msra.mxu0 %v1761
    %2615 = vmatpush.msra.mxu0 %v1757
    %2616 = vmatpush.msra.mxu0 %v1753
    %2617 = vmatpush.msra.mxu0 %v1749
    %2618 = vmatpush.msra.mxu0 %v1745
    %2619 = vmatpush.msra.mxu0 %v1741
    %2620 = vmatpush.msra.mxu0 %v1737
    %2621 = vmatmul.f32.gmra.mxu0 %v885
    %v2622 = vpop.f32.mrf.mxu0
    %v2623 = vadd.f32 %v2600, %v2622
    %2624 = vmatmul.f32.gmra.mxu0 %v901
    %v2625 = vpop.f32.mrf.mxu0
    %v2626 = vadd.f32 %v2603, %v2625
    %2627 = vdwg.mxu0
    %2628 = vmatpush.msra.mxu0 %v1861
    %2629 = vmatpush.msra.mxu0 %v1857
    %2630 = vmatpush.msra.mxu0 %v1853
    %2631 = vmatpush.msra.mxu0 %v1849
    %2632 = vmatpush.msra.mxu0 %v1845
    %2633 = vmatpush.msra.mxu0 %v1841
    %2634 = vmatpush.msra.mxu0 %v1837
    %2635 = vmatpush.msra.mxu0 %v1833
    %2636 = vmatpush.msra.mxu0 %v1829
    %2637 = vmatpush.msra.mxu0 %v1825
    %2638 = vmatpush.msra.mxu0 %v1821
    %2639 = vmatpush.msra.mxu0 %v1817
    %2640 = vmatpush.msra.mxu0 %v1813
    %2641 = vmatpush.msra.mxu0 %v1809
    %2642 = vmatpush.msra.mxu0 %v1805
    %2643 = vmatpush.msra.mxu0 %v1801
    %2644 = vmatmul.f32.gmra.mxu0 %v886
    %v2645 = vpop.f32.mrf.mxu0
    %v2646 = vadd.f32 %v2623, %v2645
    %2647 = vmatmul.f32.gmra.mxu0 %v902
    %v2648 = vpop.f32.mrf.mxu0
    %v2649 = vadd.f32 %v2626, %v2648
    %2650 = vdwg.mxu0
    %2651 = vmatpush.msra.mxu0 %v1925
    %2652 = vmatpush.msra.mxu0 %v1921
    %2653 = vmatpush.msra.mxu0 %v1917
    %2654 = vmatpush.msra.mxu0 %v1913
    %2655 = vmatpush.msra.mxu0 %v1909
    %2656 = vmatpush.msra.mxu0 %v1905
    %2657 = vmatpush.msra.mxu0 %v1901
    %2658 = vmatpush.msra.mxu0 %v1897
    %2659 = vmatpush.msra.mxu0 %v1893
    %2660 = vmatpush.msra.mxu0 %v1889
    %2661 = vmatpush.msra.mxu0 %v1885
    %2662 = vmatpush.msra.mxu0 %v1881
    %2663 = vmatpush.msra.mxu0 %v1877
    %2664 = vmatpush.msra.mxu0 %v1873
    %2665 = vmatpush.msra.mxu0 %v1869
    %2666 = vmatpush.msra.mxu0 %v1865
    %2667 = vmatmul.f32.gmra.mxu0 %v887
    %v2668 = vpop.f32.mrf.mxu0
    %v2669 = vadd.f32 %v2646, %v2668
    %2670 = vmatmul.f32.gmra.mxu0 %v903
    %v2671 = vpop.f32.mrf.mxu0
    %v2672 = vadd.f32 %v2649, %v2671
    %2673 = vdwg.mxu0
    %2674 = vmatpush.msra.mxu0 %v966
    %2675 = vmatpush.msra.mxu0 %v962
    %2676 = vmatpush.msra.mxu0 %v958
    %2677 = vmatpush.msra.mxu0 %v954
    %2678 = vmatpush.msra.mxu0 %v950
    %2679 = vmatpush.msra.mxu0 %v946
    %2680 = vmatpush.msra.mxu0 %v942
    %2681 = vmatpush.msra.mxu0 %v938
    %2682 = vmatpush.msra.mxu0 %v934
    %2683 = vmatpush.msra.mxu0 %v930
    %2684 = vmatpush.msra.mxu0 %v926
    %2685 = vmatpush.msra.mxu0 %v922
    %2686 = vmatpush.msra.mxu0 %v918
    %2687 = vmatpush.msra.mxu0 %v914
    %2688 = vmatpush.msra.mxu0 %v910
    %2689 = vmatpush.msra.mxu0 %v906
    %2690 = vmatmul.f32.gmra.mxu0 %v872
    %v2691 = vpop.f32.mrf.mxu0
    %v2692 = vadd.f32 %v1932, %v2691
    %2693 = vmatmul.f32.gmra.mxu0 %v888
    %v2694 = vpop.f32.mrf.mxu0
    %v2695 = vadd.f32 %v1932, %v2694
    %2696 = vdwg.mxu0
    %2697 = vmatpush.msra.mxu0 %v1030
    %2698 = vmatpush.msra.mxu0 %v1026
    %2699 = vmatpush.msra.mxu0 %v1022
    %2700 = vmatpush.msra.mxu0 %v1018
    %2701 = vmatpush.msra.mxu0 %v1014
    %2702 = vmatpush.msra.mxu0 %v1010
    %2703 = vmatpush.msra.mxu0 %v1006
    %2704 = vmatpush.msra.mxu0 %v1002
    %2705 = vmatpush.msra.mxu0 %v998
    %2706 = vmatpush.msra.mxu0 %v994
    %2707 = vmatpush.msra.mxu0 %v990
    %2708 = vmatpush.msra.mxu0 %v986
    %2709 = vmatpush.msra.mxu0 %v982
    %2710 = vmatpush.msra.mxu0 %v978
    %2711 = vmatpush.msra.mxu0 %v974
    %2712 = vmatpush.msra.mxu0 %v970
    %2713 = vmatmul.f32.gmra.mxu0 %v873
    %v2714 = vpop.f32.mrf.mxu0
    %v2715 = vadd.f32 %v2692, %v2714
    %2716 = vmatmul.f32.gmra.mxu0 %v889
    %v2717 = vpop.f32.mrf.mxu0
    %v2718 = vadd.f32 %v2695, %v2717
    %2719 = vdwg.mxu0
    %2720 = vmatpush.msra.mxu0 %v1094
    %2721 = vmatpush.msra.mxu0 %v1090
    %2722 = vmatpush.msra.mxu0 %v1086
    %2723 = vmatpush.msra.mxu0 %v1082
    %2724 = vmatpush.msra.mxu0 %v1078
    %2725 = vmatpush.msra.mxu0 %v1074
    %2726 = vmatpush.msra.mxu0 %v1070
    %2727 = vmatpush.msra.mxu0 %v1066
    %2728 = vmatpush.msra.mxu0 %v1062
    %2729 = vmatpush.msra.mxu0 %v1058
    %2730 = vmatpush.msra.mxu0 %v1054
    %2731 = vmatpush.msra.mxu0 %v1050
    %2732 = vmatpush.msra.mxu0 %v1046
    %2733 = vmatpush.msra.mxu0 %v1042
    %2734 = vmatpush.msra.mxu0 %v1038
    %2735 = vmatpush.msra.mxu0 %v1034
    %2736 = vmatmul.f32.gmra.mxu0 %v874
    %v2737 = vpop.f32.mrf.mxu0
    %v2738 = vadd.f32 %v2715, %v2737
    %2739 = vmatmul.f32.gmra.mxu0 %v890
    %v2740 = vpop.f32.mrf.mxu0
    %v2741 = vadd.f32 %v2718, %v2740
    %2742 = vdwg.mxu0
    %2743 = vmatpush.msra.mxu0 %v1158
    %2744 = vmatpush.msra.mxu0 %v1154
    %2745 = vmatpush.msra.mxu0 %v1150
    %2746 = vmatpush.msra.mxu0 %v1146
    %2747 = vmatpush.msra.mxu0 %v1142
    %2748 = vmatpush.msra.mxu0 %v1138
    %2749 = vmatpush.msra.mxu0 %v1134
    %2750 = vmatpush.msra.mxu0 %v1130
    %2751 = vmatpush.msra.mxu0 %v1126
    %2752 = vmatpush.msra.mxu0 %v1122
    %2753 = vmatpush.msra.mxu0 %v1118
    %2754 = vmatpush.msra.mxu0 %v1114
    %2755 = vmatpush.msra.mxu0 %v1110
    %2756 = vmatpush.msra.mxu0 %v1106
    %2757 = vmatpush.msra.mxu0 %v1102
    %2758 = vmatpush.msra.mxu0 %v1098
    %2759 = vmatmul.f32.gmra.mxu0 %v875
    %v2760 = vpop.f32.mrf.mxu0
    %v2761 = vadd.f32 %v2738, %v2760
    %2762 = vmatmul.f32.gmra.mxu0 %v891
    %v2763 = vpop.f32.mrf.mxu0
    %v2764 = vadd.f32 %v2741, %v2763
    %2765 = vdwg.mxu0
    %2766 = vmatpush.msra.mxu0 %v1222
    %2767 = vmatpush.msra.mxu0 %v1218
    %2768 = vmatpush.msra.mxu0 %v1214
    %2769 = vmatpush.msra.mxu0 %v1210
    %2770 = vmatpush.msra.mxu0 %v1206
    %2771 = vmatpush.msra.mxu0 %v1202
    %2772 = vmatpush.msra.mxu0 %v1198
    %2773 = vmatpush.msra.mxu0 %v1194
    %2774 = vmatpush.msra.mxu0 %v1190
    %2775 = vmatpush.msra.mxu0 %v1186
    %2776 = vmatpush.msra.mxu0 %v1182
    %2777 = vmatpush.msra.mxu0 %v1178
    %2778 = vmatpush.msra.mxu0 %v1174
    %2779 = vmatpush.msra.mxu0 %v1170
    %2780 = vmatpush.msra.mxu0 %v1166
    %2781 = vmatpush.msra.mxu0 %v1162
    %2782 = vmatmul.f32.gmra.mxu0 %v876
    %v2783 = vpop.f32.mrf.mxu0
    %v2784 = vadd.f32 %v2761, %v2783
    %2785 = vmatmul.f32.gmra.mxu0 %v892
    %v2786 = vpop.f32.mrf.mxu0
    %v2787 = vadd.f32 %v2764, %v2786
    %2788 = vdwg.mxu0
    %2789 = vmatpush.msra.mxu0 %v1286
    %2790 = vmatpush.msra.mxu0 %v1282
    %2791 = vmatpush.msra.mxu0 %v1278
    %2792 = vmatpush.msra.mxu0 %v1274
    %2793 = vmatpush.msra.mxu0 %v1270
    %2794 = vmatpush.msra.mxu0 %v1266
    %2795 = vmatpush.msra.mxu0 %v1262
    %2796 = vmatpush.msra.mxu0 %v1258
    %2797 = vmatpush.msra.mxu0 %v1254
    %2798 = vmatpush.msra.mxu0 %v1250
    %2799 = vmatpush.msra.mxu0 %v1246
    %2800 = vmatpush.msra.mxu0 %v1242
    %2801 = vmatpush.msra.mxu0 %v1238
    %2802 = vmatpush.msra.mxu0 %v1234
    %2803 = vmatpush.msra.mxu0 %v1230
    %2804 = vmatpush.msra.mxu0 %v1226
    %2805 = vmatmul.f32.gmra.mxu0 %v877
    %v2806 = vpop.f32.mrf.mxu0
    %v2807 = vadd.f32 %v2784, %v2806
    %2808 = vmatmul.f32.gmra.mxu0 %v893
    %v2809 = vpop.f32.mrf.mxu0
    %v2810 = vadd.f32 %v2787, %v2809
    %2811 = vdwg.mxu0
    %2812 = vmatpush.msra.mxu0 %v1350
    %2813 = vmatpush.msra.mxu0 %v1346
    %2814 = vmatpush.msra.mxu0 %v1342
    %2815 = vmatpush.msra.mxu0 %v1338
    %2816 = vmatpush.msra.mxu0 %v1334
    %2817 = vmatpush.msra.mxu0 %v1330
    %2818 = vmatpush.msra.mxu0 %v1326
    %2819 = vmatpush.msra.mxu0 %v1322
    %2820 = vmatpush.msra.mxu0 %v1318
    %2821 = vmatpush.msra.mxu0 %v1314
    %2822 = vmatpush.msra.mxu0 %v1310
    %2823 = vmatpush.msra.mxu0 %v1306
    %2824 = vmatpush.msra.mxu0 %v1302
    %2825 = vmatpush.msra.mxu0 %v1298
    %2826 = vmatpush.msra.mxu0 %v1294
    %2827 = vmatpush.msra.mxu0 %v1290
    %2828 = vmatmul.f32.gmra.mxu0 %v878
    %v2829 = vpop.f32.mrf.mxu0
    %v2830 = vadd.f32 %v2807, %v2829
    %2831 = vmatmul.f32.gmra.mxu0 %v894
    %v2832 = vpop.f32.mrf.mxu0
    %v2833 = vadd.f32 %v2810, %v2832
    %2834 = vdwg.mxu0
    %2835 = vmatpush.msra.mxu0 %v1414
    %2836 = vmatpush.msra.mxu0 %v1410
    %2837 = vmatpush.msra.mxu0 %v1406
    %2838 = vmatpush.msra.mxu0 %v1402
    %2839 = vmatpush.msra.mxu0 %v1398
    %2840 = vmatpush.msra.mxu0 %v1394
    %2841 = vmatpush.msra.mxu0 %v1390
    %2842 = vmatpush.msra.mxu0 %v1386
    %2843 = vmatpush.msra.mxu0 %v1382
    %2844 = vmatpush.msra.mxu0 %v1378
    %2845 = vmatpush.msra.mxu0 %v1374
    %2846 = vmatpush.msra.mxu0 %v1370
    %2847 = vmatpush.msra.mxu0 %v1366
    %2848 = vmatpush.msra.mxu0 %v1362
    %2849 = vmatpush.msra.mxu0 %v1358
    %2850 = vmatpush.msra.mxu0 %v1354
    %2851 = vmatmul.f32.gmra.mxu0 %v879
    %v2852 = vpop.f32.mrf.mxu0
    %v2853 = vadd.f32 %v2830, %v2852
    %2854 = vmatmul.f32.gmra.mxu0 %v895
    %v2855 = vpop.f32.mrf.mxu0
    %v2856 = vadd.f32 %v2833, %v2855
    %2857 = vdwg.mxu0
    %2858 = vmatpush.msra.mxu0 %v1478
    %2859 = vmatpush.msra.mxu0 %v1474
    %2860 = vmatpush.msra.mxu0 %v1470
    %2861 = vmatpush.msra.mxu0 %v1466
    %2862 = vmatpush.msra.mxu0 %v1462
    %2863 = vmatpush.msra.mxu0 %v1458
    %2864 = vmatpush.msra.mxu0 %v1454
    %2865 = vmatpush.msra.mxu0 %v1450
    %2866 = vmatpush.msra.mxu0 %v1446
    %2867 = vmatpush.msra.mxu0 %v1442
    %2868 = vmatpush.msra.mxu0 %v1438
    %2869 = vmatpush.msra.mxu0 %v1434
    %2870 = vmatpush.msra.mxu0 %v1430
    %2871 = vmatpush.msra.mxu0 %v1426
    %2872 = vmatpush.msra.mxu0 %v1422
    %2873 = vmatpush.msra.mxu0 %v1418
    %2874 = vmatmul.f32.gmra.mxu0 %v880
    %v2875 = vpop.f32.mrf.mxu0
    %v2876 = vadd.f32 %v2853, %v2875
    %2877 = vmatmul.f32.gmra.mxu0 %v896
    %v2878 = vpop.f32.mrf.mxu0
    %v2879 = vadd.f32 %v2856, %v2878
    %2880 = vdwg.mxu0
    %2881 = vmatpush.msra.mxu0 %v1542
    %2882 = vmatpush.msra.mxu0 %v1538
    %2883 = vmatpush.msra.mxu0 %v1534
    %2884 = vmatpush.msra.mxu0 %v1530
    %2885 = vmatpush.msra.mxu0 %v1526
    %2886 = vmatpush.msra.mxu0 %v1522
    %2887 = vmatpush.msra.mxu0 %v1518
    %2888 = vmatpush.msra.mxu0 %v1514
    %2889 = vmatpush.msra.mxu0 %v1510
    %2890 = vmatpush.msra.mxu0 %v1506
    %2891 = vmatpush.msra.mxu0 %v1502
    %2892 = vmatpush.msra.mxu0 %v1498
    %2893 = vmatpush.msra.mxu0 %v1494
    %2894 = vmatpush.msra.mxu0 %v1490
    %2895 = vmatpush.msra.mxu0 %v1486
    %2896 = vmatpush.msra.mxu0 %v1482
    %2897 = vmatmul.f32.gmra.mxu0 %v881
    %v2898 = vpop.f32.mrf.mxu0
    %v2899 = vadd.f32 %v2876, %v2898
    %2900 = vmatmul.f32.gmra.mxu0 %v897
    %v2901 = vpop.f32.mrf.mxu0
    %v2902 = vadd.f32 %v2879, %v2901
    %2903 = vdwg.mxu0
    %2904 = vmatpush.msra.mxu0 %v1606
    %2905 = vmatpush.msra.mxu0 %v1602
    %2906 = vmatpush.msra.mxu0 %v1598
    %2907 = vmatpush.msra.mxu0 %v1594
    %2908 = vmatpush.msra.mxu0 %v1590
    %2909 = vmatpush.msra.mxu0 %v1586
    %2910 = vmatpush.msra.mxu0 %v1582
    %2911 = vmatpush.msra.mxu0 %v1578
    %2912 = vmatpush.msra.mxu0 %v1574
    %2913 = vmatpush.msra.mxu0 %v1570
    %2914 = vmatpush.msra.mxu0 %v1566
    %2915 = vmatpush.msra.mxu0 %v1562
    %2916 = vmatpush.msra.mxu0 %v1558
    %2917 = vmatpush.msra.mxu0 %v1554
    %2918 = vmatpush.msra.mxu0 %v1550
    %2919 = vmatpush.msra.mxu0 %v1546
    %2920 = vmatmul.f32.gmra.mxu0 %v882
    %v2921 = vpop.f32.mrf.mxu0
    %v2922 = vadd.f32 %v2899, %v2921
    %2923 = vmatmul.f32.gmra.mxu0 %v898
    %v2924 = vpop.f32.mrf.mxu0
    %v2925 = vadd.f32 %v2902, %v2924
    %2926 = vdwg.mxu0
    %2927 = vmatpush.msra.mxu0 %v1670
    %2928 = vmatpush.msra.mxu0 %v1666
    %2929 = vmatpush.msra.mxu0 %v1662
    %2930 = vmatpush.msra.mxu0 %v1658
    %2931 = vmatpush.msra.mxu0 %v1654
    %2932 = vmatpush.msra.mxu0 %v1650
    %2933 = vmatpush.msra.mxu0 %v1646
    %2934 = vmatpush.msra.mxu0 %v1642
    %2935 = vmatpush.msra.mxu0 %v1638
    %2936 = vmatpush.msra.mxu0 %v1634
    %2937 = vmatpush.msra.mxu0 %v1630
    %2938 = vmatpush.msra.mxu0 %v1626
    %2939 = vmatpush.msra.mxu0 %v1622
    %2940 = vmatpush.msra.mxu0 %v1618
    %2941 = vmatpush.msra.mxu0 %v1614
    %2942 = vmatpush.msra.mxu0 %v1610
    %2943 = vmatmul.f32.gmra.mxu0 %v883
    %v2944 = vpop.f32.mrf.mxu0
    %v2945 = vadd.f32 %v2922, %v2944
    %2946 = vmatmul.f32.gmra.mxu0 %v899
    %v2947 = vpop.f32.mrf.mxu0
    %v2948 = vadd.f32 %v2925, %v2947
    %2949 = vdwg.mxu0
    %2950 = vmatpush.msra.mxu0 %v1734
    %2951 = vmatpush.msra.mxu0 %v1730
    %2952 = vmatpush.msra.mxu0 %v1726
    %2953 = vmatpush.msra.mxu0 %v1722
    %2954 = vmatpush.msra.mxu0 %v1718
    %2955 = vmatpush.msra.mxu0 %v1714
    %2956 = vmatpush.msra.mxu0 %v1710
    %2957 = vmatpush.msra.mxu0 %v1706
    %2958 = vmatpush.msra.mxu0 %v1702
    %2959 = vmatpush.msra.mxu0 %v1698
    %2960 = vmatpush.msra.mxu0 %v1694
    %2961 = vmatpush.msra.mxu0 %v1690
    %2962 = vmatpush.msra.mxu0 %v1686
    %2963 = vmatpush.msra.mxu0 %v1682
    %2964 = vmatpush.msra.mxu0 %v1678
    %2965 = vmatpush.msra.mxu0 %v1674
    %2966 = vmatmul.f32.gmra.mxu0 %v884
    %v2967 = vpop.f32.mrf.mxu0
    %v2968 = vadd.f32 %v2945, %v2967
    %2969 = vmatmul.f32.gmra.mxu0 %v900
    %v2970 = vpop.f32.mrf.mxu0
    %v2971 = vadd.f32 %v2948, %v2970
    %2972 = vdwg.mxu0
    %2973 = vmatpush.msra.mxu0 %v1798
    %2974 = vmatpush.msra.mxu0 %v1794
    %2975 = vmatpush.msra.mxu0 %v1790
    %2976 = vmatpush.msra.mxu0 %v1786
    %2977 = vmatpush.msra.mxu0 %v1782
    %2978 = vmatpush.msra.mxu0 %v1778
    %2979 = vmatpush.msra.mxu0 %v1774
    %2980 = vmatpush.msra.mxu0 %v1770
    %2981 = vmatpush.msra.mxu0 %v1766
    %2982 = vmatpush.msra.mxu0 %v1762
    %2983 = vmatpush.msra.mxu0 %v1758
    %2984 = vmatpush.msra.mxu0 %v1754
    %2985 = vmatpush.msra.mxu0 %v1750
    %2986 = vmatpush.msra.mxu0 %v1746
    %2987 = vmatpush.msra.mxu0 %v1742
    %2988 = vmatpush.msra.mxu0 %v1738
    %2989 = vmatmul.f32.gmra.mxu0 %v885
    %v2990 = vpop.f32.mrf.mxu0
    %v2991 = vadd.f32 %v2968, %v2990
    %2992 = vmatmul.f32.gmra.mxu0 %v901
    %v2993 = vpop.f32.mrf.mxu0
    %v2994 = vadd.f32 %v2971, %v2993
    %2995 = vdwg.mxu0
    %2996 = vmatpush.msra.mxu0 %v1862
    %2997 = vmatpush.msra.mxu0 %v1858
    %2998 = vmatpush.msra.mxu0 %v1854
    %2999 = vmatpush.msra.mxu0 %v1850
    %3000 = vmatpush.msra.mxu0 %v1846
    %3001 = vmatpush.msra.mxu0 %v1842
    %3002 = vmatpush.msra.mxu0 %v1838
    %3003 = vmatpush.msra.mxu0 %v1834
    %3004 = vmatpush.msra.mxu0 %v1830
    %3005 = vmatpush.msra.mxu0 %v1826
    %3006 = vmatpush.msra.mxu0 %v1822
    %3007 = vmatpush.msra.mxu0 %v1818
    %3008 = vmatpush.msra.mxu0 %v1814
    %3009 = vmatpush.msra.mxu0 %v1810
    %3010 = vmatpush.msra.mxu0 %v1806
    %3011 = vmatpush.msra.mxu0 %v1802
    %3012 = vmatmul.f32.gmra.mxu0 %v886
    %v3013 = vpop.f32.mrf.mxu0
    %v3014 = vadd.f32 %v2991, %v3013
    %3015 = vmatmul.f32.gmra.mxu0 %v902
    %v3016 = vpop.f32.mrf.mxu0
    %v3017 = vadd.f32 %v2994, %v3016
    %3018 = vdwg.mxu0
    %3019 = vmatpush.msra.mxu0 %v1926
    %3020 = vmatpush.msra.mxu0 %v1922
    %3021 = vmatpush.msra.mxu0 %v1918
    %3022 = vmatpush.msra.mxu0 %v1914
    %3023 = vmatpush.msra.mxu0 %v1910
    %3024 = vmatpush.msra.mxu0 %v1906
    %3025 = vmatpush.msra.mxu0 %v1902
    %3026 = vmatpush.msra.mxu0 %v1898
    %3027 = vmatpush.msra.mxu0 %v1894
    %3028 = vmatpush.msra.mxu0 %v1890
    %3029 = vmatpush.msra.mxu0 %v1886
    %3030 = vmatpush.msra.mxu0 %v1882
    %3031 = vmatpush.msra.mxu0 %v1878
    %3032 = vmatpush.msra.mxu0 %v1874
    %3033 = vmatpush.msra.mxu0 %v1870
    %3034 = vmatpush.msra.mxu0 %v1866
    %3035 = vmatmul.f32.gmra.mxu0 %v887
    %v3036 = vpop.f32.mrf.mxu0
    %v3037 = vadd.f32 %v3014, %v3036
    %3038 = vmatmul.f32.gmra.mxu0 %v903
    %v3039 = vpop.f32.mrf.mxu0
    %v3040 = vadd.f32 %v3017, %v3039
    %3041 = vdwg.mxu0
    %3042 = vmatpush.msra.mxu0 %v967
    %3043 = vmatpush.msra.mxu0 %v963
    %3044 = vmatpush.msra.mxu0 %v959
    %3045 = vmatpush.msra.mxu0 %v955
    %3046 = vmatpush.msra.mxu0 %v951
    %3047 = vmatpush.msra.mxu0 %v947
    %3048 = vmatpush.msra.mxu0 %v943
    %3049 = vmatpush.msra.mxu0 %v939
    %3050 = vmatpush.msra.mxu0 %v935
    %3051 = vmatpush.msra.mxu0 %v931
    %3052 = vmatpush.msra.mxu0 %v927
    %3053 = vmatpush.msra.mxu0 %v923
    %3054 = vmatpush.msra.mxu0 %v919
    %3055 = vmatpush.msra.mxu0 %v915
    %3056 = vmatpush.msra.mxu0 %v911
    %3057 = vmatpush.msra.mxu0 %v907
    %3058 = vmatmul.f32.gmra.mxu0 %v872
    %v3059 = vpop.f32.mrf.mxu0
    %v3060 = vadd.f32 %v1933, %v3059
    %3061 = vmatmul.f32.gmra.mxu0 %v888
    %v3062 = vpop.f32.mrf.mxu0
    %v3063 = vadd.f32 %v1933, %v3062
    %3064 = vdwg.mxu0
    %3065 = vmatpush.msra.mxu0 %v1031
    %3066 = vmatpush.msra.mxu0 %v1027
    %3067 = vmatpush.msra.mxu0 %v1023
    %3068 = vmatpush.msra.mxu0 %v1019
    %3069 = vmatpush.msra.mxu0 %v1015
    %3070 = vmatpush.msra.mxu0 %v1011
    %3071 = vmatpush.msra.mxu0 %v1007
    %3072 = vmatpush.msra.mxu0 %v1003
    %3073 = vmatpush.msra.mxu0 %v999
    %3074 = vmatpush.msra.mxu0 %v995
    %3075 = vmatpush.msra.mxu0 %v991
    %3076 = vmatpush.msra.mxu0 %v987
    %3077 = vmatpush.msra.mxu0 %v983
    %3078 = vmatpush.msra.mxu0 %v979
    %3079 = vmatpush.msra.mxu0 %v975
    %3080 = vmatpush.msra.mxu0 %v971
    %3081 = vmatmul.f32.gmra.mxu0 %v873
    %v3082 = vpop.f32.mrf.mxu0
    %v3083 = vadd.f32 %v3060, %v3082
    %3084 = vmatmul.f32.gmra.mxu0 %v889
    %v3085 = vpop.f32.mrf.mxu0
    %v3086 = vadd.f32 %v3063, %v3085
    %3087 = vdwg.mxu0
    %3088 = vmatpush.msra.mxu0 %v1095
    %3089 = vmatpush.msra.mxu0 %v1091
    %3090 = vmatpush.msra.mxu0 %v1087
    %3091 = vmatpush.msra.mxu0 %v1083
    %3092 = vmatpush.msra.mxu0 %v1079
    %3093 = vmatpush.msra.mxu0 %v1075
    %3094 = vmatpush.msra.mxu0 %v1071
    %3095 = vmatpush.msra.mxu0 %v1067
    %3096 = vmatpush.msra.mxu0 %v1063
    %3097 = vmatpush.msra.mxu0 %v1059
    %3098 = vmatpush.msra.mxu0 %v1055
    %3099 = vmatpush.msra.mxu0 %v1051
    %3100 = vmatpush.msra.mxu0 %v1047
    %3101 = vmatpush.msra.mxu0 %v1043
    %3102 = vmatpush.msra.mxu0 %v1039
    %3103 = vmatpush.msra.mxu0 %v1035
    %3104 = vmatmul.f32.gmra.mxu0 %v874
    %v3105 = vpop.f32.mrf.mxu0
    %v3106 = vadd.f32 %v3083, %v3105
    %3107 = vmatmul.f32.gmra.mxu0 %v890
    %v3108 = vpop.f32.mrf.mxu0
    %v3109 = vadd.f32 %v3086, %v3108
    %3110 = vdwg.mxu0
    %3111 = vmatpush.msra.mxu0 %v1159
    %3112 = vmatpush.msra.mxu0 %v1155
    %3113 = vmatpush.msra.mxu0 %v1151
    %3114 = vmatpush.msra.mxu0 %v1147
    %3115 = vmatpush.msra.mxu0 %v1143
    %3116 = vmatpush.msra.mxu0 %v1139
    %3117 = vmatpush.msra.mxu0 %v1135
    %3118 = vmatpush.msra.mxu0 %v1131
    %3119 = vmatpush.msra.mxu0 %v1127
    %3120 = vmatpush.msra.mxu0 %v1123
    %3121 = vmatpush.msra.mxu0 %v1119
    %3122 = vmatpush.msra.mxu0 %v1115
    %3123 = vmatpush.msra.mxu0 %v1111
    %3124 = vmatpush.msra.mxu0 %v1107
    %3125 = vmatpush.msra.mxu0 %v1103
    %3126 = vmatpush.msra.mxu0 %v1099
    %3127 = vmatmul.f32.gmra.mxu0 %v875
    %v3128 = vpop.f32.mrf.mxu0
    %v3129 = vadd.f32 %v3106, %v3128
    %3130 = vmatmul.f32.gmra.mxu0 %v891
    %v3131 = vpop.f32.mrf.mxu0
    %v3132 = vadd.f32 %v3109, %v3131
    %3133 = vdwg.mxu0
    %3134 = vmatpush.msra.mxu0 %v1223
    %3135 = vmatpush.msra.mxu0 %v1219
    %3136 = vmatpush.msra.mxu0 %v1215
    %3137 = vmatpush.msra.mxu0 %v1211
    %3138 = vmatpush.msra.mxu0 %v1207
    %3139 = vmatpush.msra.mxu0 %v1203
    %3140 = vmatpush.msra.mxu0 %v1199
    %3141 = vmatpush.msra.mxu0 %v1195
    %3142 = vmatpush.msra.mxu0 %v1191
    %3143 = vmatpush.msra.mxu0 %v1187
    %3144 = vmatpush.msra.mxu0 %v1183
    %3145 = vmatpush.msra.mxu0 %v1179
    %3146 = vmatpush.msra.mxu0 %v1175
    %3147 = vmatpush.msra.mxu0 %v1171
    %3148 = vmatpush.msra.mxu0 %v1167
    %3149 = vmatpush.msra.mxu0 %v1163
    %3150 = vmatmul.f32.gmra.mxu0 %v876
    %v3151 = vpop.f32.mrf.mxu0
    %v3152 = vadd.f32 %v3129, %v3151
    %3153 = vmatmul.f32.gmra.mxu0 %v892
    %v3154 = vpop.f32.mrf.mxu0
    %v3155 = vadd.f32 %v3132, %v3154
    %3156 = vdwg.mxu0
    %3157 = vmatpush.msra.mxu0 %v1287
    %3158 = vmatpush.msra.mxu0 %v1283
    %3159 = vmatpush.msra.mxu0 %v1279
    %3160 = vmatpush.msra.mxu0 %v1275
    %3161 = vmatpush.msra.mxu0 %v1271
    %3162 = vmatpush.msra.mxu0 %v1267
    %3163 = vmatpush.msra.mxu0 %v1263
    %3164 = vmatpush.msra.mxu0 %v1259
    %3165 = vmatpush.msra.mxu0 %v1255
    %3166 = vmatpush.msra.mxu0 %v1251
    %3167 = vmatpush.msra.mxu0 %v1247
    %3168 = vmatpush.msra.mxu0 %v1243
    %3169 = vmatpush.msra.mxu0 %v1239
    %3170 = vmatpush.msra.mxu0 %v1235
    %3171 = vmatpush.msra.mxu0 %v1231
    %3172 = vmatpush.msra.mxu0 %v1227
    %3173 = vmatmul.f32.gmra.mxu0 %v877
    %v3174 = vpop.f32.mrf.mxu0
    %v3175 = vadd.f32 %v3152, %v3174
    %3176 = vmatmul.f32.gmra.mxu0 %v893
    %v3177 = vpop.f32.mrf.mxu0
    %v3178 = vadd.f32 %v3155, %v3177
    %3179 = vdwg.mxu0
    %3180 = vmatpush.msra.mxu0 %v1351
    %3181 = vmatpush.msra.mxu0 %v1347
    %3182 = vmatpush.msra.mxu0 %v1343
    %3183 = vmatpush.msra.mxu0 %v1339
    %3184 = vmatpush.msra.mxu0 %v1335
    %3185 = vmatpush.msra.mxu0 %v1331
    %3186 = vmatpush.msra.mxu0 %v1327
    %3187 = vmatpush.msra.mxu0 %v1323
    %3188 = vmatpush.msra.mxu0 %v1319
    %3189 = vmatpush.msra.mxu0 %v1315
    %3190 = vmatpush.msra.mxu0 %v1311
    %3191 = vmatpush.msra.mxu0 %v1307
    %3192 = vmatpush.msra.mxu0 %v1303
    %3193 = vmatpush.msra.mxu0 %v1299
    %3194 = vmatpush.msra.mxu0 %v1295
    %3195 = vmatpush.msra.mxu0 %v1291
    %3196 = vmatmul.f32.gmra.mxu0 %v878
    %v3197 = vpop.f32.mrf.mxu0
    %v3198 = vadd.f32 %v3175, %v3197
    %3199 = vmatmul.f32.gmra.mxu0 %v894
    %v3200 = vpop.f32.mrf.mxu0
    %v3201 = vadd.f32 %v3178, %v3200
    %3202 = vdwg.mxu0
    %3203 = vmatpush.msra.mxu0 %v1415
    %3204 = vmatpush.msra.mxu0 %v1411
    %3205 = vmatpush.msra.mxu0 %v1407
    %3206 = vmatpush.msra.mxu0 %v1403
    %3207 = vmatpush.msra.mxu0 %v1399
    %3208 = vmatpush.msra.mxu0 %v1395
    %3209 = vmatpush.msra.mxu0 %v1391
    %3210 = vmatpush.msra.mxu0 %v1387
    %3211 = vmatpush.msra.mxu0 %v1383
    %3212 = vmatpush.msra.mxu0 %v1379
    %3213 = vmatpush.msra.mxu0 %v1375
    %3214 = vmatpush.msra.mxu0 %v1371
    %3215 = vmatpush.msra.mxu0 %v1367
    %3216 = vmatpush.msra.mxu0 %v1363
    %3217 = vmatpush.msra.mxu0 %v1359
    %3218 = vmatpush.msra.mxu0 %v1355
    %3219 = vmatmul.f32.gmra.mxu0 %v879
    %v3220 = vpop.f32.mrf.mxu0
    %v3221 = vadd.f32 %v3198, %v3220
    %3222 = vmatmul.f32.gmra.mxu0 %v895
    %v3223 = vpop.f32.mrf.mxu0
    %v3224 = vadd.f32 %v3201, %v3223
    %3225 = vdwg.mxu0
    %3226 = vmatpush.msra.mxu0 %v1479
    %3227 = vmatpush.msra.mxu0 %v1475
    %3228 = vmatpush.msra.mxu0 %v1471
    %3229 = vmatpush.msra.mxu0 %v1467
    %3230 = vmatpush.msra.mxu0 %v1463
    %3231 = vmatpush.msra.mxu0 %v1459
    %3232 = vmatpush.msra.mxu0 %v1455
    %3233 = vmatpush.msra.mxu0 %v1451
    %3234 = vmatpush.msra.mxu0 %v1447
    %3235 = vmatpush.msra.mxu0 %v1443
    %3236 = vmatpush.msra.mxu0 %v1439
    %3237 = vmatpush.msra.mxu0 %v1435
    %3238 = vmatpush.msra.mxu0 %v1431
    %3239 = vmatpush.msra.mxu0 %v1427
    %3240 = vmatpush.msra.mxu0 %v1423
    %3241 = vmatpush.msra.mxu0 %v1419
    %3242 = vmatmul.f32.gmra.mxu0 %v880
    %v3243 = vpop.f32.mrf.mxu0
    %v3244 = vadd.f32 %v3221, %v3243
    %3245 = vmatmul.f32.gmra.mxu0 %v896
    %v3246 = vpop.f32.mrf.mxu0
    %v3247 = vadd.f32 %v3224, %v3246
    %3248 = vdwg.mxu0
    %3249 = vmatpush.msra.mxu0 %v1543
    %3250 = vmatpush.msra.mxu0 %v1539
    %3251 = vmatpush.msra.mxu0 %v1535
    %3252 = vmatpush.msra.mxu0 %v1531
    %3253 = vmatpush.msra.mxu0 %v1527
    %3254 = vmatpush.msra.mxu0 %v1523
    %3255 = vmatpush.msra.mxu0 %v1519
    %3256 = vmatpush.msra.mxu0 %v1515
    %3257 = vmatpush.msra.mxu0 %v1511
    %3258 = vmatpush.msra.mxu0 %v1507
    %3259 = vmatpush.msra.mxu0 %v1503
    %3260 = vmatpush.msra.mxu0 %v1499
    %3261 = vmatpush.msra.mxu0 %v1495
    %3262 = vmatpush.msra.mxu0 %v1491
    %3263 = vmatpush.msra.mxu0 %v1487
    %3264 = vmatpush.msra.mxu0 %v1483
    %3265 = vmatmul.f32.gmra.mxu0 %v881
    %v3266 = vpop.f32.mrf.mxu0
    %v3267 = vadd.f32 %v3244, %v3266
    %3268 = vmatmul.f32.gmra.mxu0 %v897
    %v3269 = vpop.f32.mrf.mxu0
    %v3270 = vadd.f32 %v3247, %v3269
    %3271 = vdwg.mxu0
    %3272 = vmatpush.msra.mxu0 %v1607
    %3273 = vmatpush.msra.mxu0 %v1603
    %3274 = vmatpush.msra.mxu0 %v1599
    %3275 = vmatpush.msra.mxu0 %v1595
    %3276 = vmatpush.msra.mxu0 %v1591
    %3277 = vmatpush.msra.mxu0 %v1587
    %3278 = vmatpush.msra.mxu0 %v1583
    %3279 = vmatpush.msra.mxu0 %v1579
    %3280 = vmatpush.msra.mxu0 %v1575
    %3281 = vmatpush.msra.mxu0 %v1571
    %3282 = vmatpush.msra.mxu0 %v1567
    %3283 = vmatpush.msra.mxu0 %v1563
    %3284 = vmatpush.msra.mxu0 %v1559
    %3285 = vmatpush.msra.mxu0 %v1555
    %3286 = vmatpush.msra.mxu0 %v1551
    %3287 = vmatpush.msra.mxu0 %v1547
    %3288 = vmatmul.f32.gmra.mxu0 %v882
    %v3289 = vpop.f32.mrf.mxu0
    %v3290 = vadd.f32 %v3267, %v3289
    %3291 = vmatmul.f32.gmra.mxu0 %v898
    %v3292 = vpop.f32.mrf.mxu0
    %v3293 = vadd.f32 %v3270, %v3292
    %3294 = vdwg.mxu0
    %3295 = vmatpush.msra.mxu0 %v1671
    %3296 = vmatpush.msra.mxu0 %v1667
    %3297 = vmatpush.msra.mxu0 %v1663
    %3298 = vmatpush.msra.mxu0 %v1659
    %3299 = vmatpush.msra.mxu0 %v1655
    %3300 = vmatpush.msra.mxu0 %v1651
    %3301 = vmatpush.msra.mxu0 %v1647
    %3302 = vmatpush.msra.mxu0 %v1643
    %3303 = vmatpush.msra.mxu0 %v1639
    %3304 = vmatpush.msra.mxu0 %v1635
    %3305 = vmatpush.msra.mxu0 %v1631
    %3306 = vmatpush.msra.mxu0 %v1627
    %3307 = vmatpush.msra.mxu0 %v1623
    %3308 = vmatpush.msra.mxu0 %v1619
    %3309 = vmatpush.msra.mxu0 %v1615
    %3310 = vmatpush.msra.mxu0 %v1611
    %3311 = vmatmul.f32.gmra.mxu0 %v883
    %v3312 = vpop.f32.mrf.mxu0
    %v3313 = vadd.f32 %v3290, %v3312
    %3314 = vmatmul.f32.gmra.mxu0 %v899
    %v3315 = vpop.f32.mrf.mxu0
    %v3316 = vadd.f32 %v3293, %v3315
    %3317 = vdwg.mxu0
    %3318 = vmatpush.msra.mxu0 %v1735
    %3319 = vmatpush.msra.mxu0 %v1731
    %3320 = vmatpush.msra.mxu0 %v1727
    %3321 = vmatpush.msra.mxu0 %v1723
    %3322 = vmatpush.msra.mxu0 %v1719
    %3323 = vmatpush.msra.mxu0 %v1715
    %3324 = vmatpush.msra.mxu0 %v1711
    %3325 = vmatpush.msra.mxu0 %v1707
    %3326 = vmatpush.msra.mxu0 %v1703
    %3327 = vmatpush.msra.mxu0 %v1699
    %3328 = vmatpush.msra.mxu0 %v1695
    %3329 = vmatpush.msra.mxu0 %v1691
    %3330 = vmatpush.msra.mxu0 %v1687
    %3331 = vmatpush.msra.mxu0 %v1683
    %3332 = vmatpush.msra.mxu0 %v1679
    %3333 = vmatpush.msra.mxu0 %v1675
    %3334 = vmatmul.f32.gmra.mxu0 %v884
    %v3335 = vpop.f32.mrf.mxu0
    %v3336 = vadd.f32 %v3313, %v3335
    %3337 = vmatmul.f32.gmra.mxu0 %v900
    %v3338 = vpop.f32.mrf.mxu0
    %v3339 = vadd.f32 %v3316, %v3338
    %3340 = vdwg.mxu0
    %3341 = vmatpush.msra.mxu0 %v1799
    %3342 = vmatpush.msra.mxu0 %v1795
    %3343 = vmatpush.msra.mxu0 %v1791
    %3344 = vmatpush.msra.mxu0 %v1787
    %3345 = vmatpush.msra.mxu0 %v1783
    %3346 = vmatpush.msra.mxu0 %v1779
    %3347 = vmatpush.msra.mxu0 %v1775
    %3348 = vmatpush.msra.mxu0 %v1771
    %3349 = vmatpush.msra.mxu0 %v1767
    %3350 = vmatpush.msra.mxu0 %v1763
    %3351 = vmatpush.msra.mxu0 %v1759
    %3352 = vmatpush.msra.mxu0 %v1755
    %3353 = vmatpush.msra.mxu0 %v1751
    %3354 = vmatpush.msra.mxu0 %v1747
    %3355 = vmatpush.msra.mxu0 %v1743
    %3356 = vmatpush.msra.mxu0 %v1739
    %3357 = vmatmul.f32.gmra.mxu0 %v885
    %v3358 = vpop.f32.mrf.mxu0
    %v3359 = vadd.f32 %v3336, %v3358
    %3360 = vmatmul.f32.gmra.mxu0 %v901
    %v3361 = vpop.f32.mrf.mxu0
    %v3362 = vadd.f32 %v3339, %v3361
    %3363 = vdwg.mxu0
    %3364 = vmatpush.msra.mxu0 %v1863
    %3365 = vmatpush.msra.mxu0 %v1859
    %3366 = vmatpush.msra.mxu0 %v1855
    %3367 = vmatpush.msra.mxu0 %v1851
    %3368 = vmatpush.msra.mxu0 %v1847
    %3369 = vmatpush.msra.mxu0 %v1843
    %3370 = vmatpush.msra.mxu0 %v1839
    %3371 = vmatpush.msra.mxu0 %v1835
    %3372 = vmatpush.msra.mxu0 %v1831
    %3373 = vmatpush.msra.mxu0 %v1827
    %3374 = vmatpush.msra.mxu0 %v1823
    %3375 = vmatpush.msra.mxu0 %v1819
    %3376 = vmatpush.msra.mxu0 %v1815
    %3377 = vmatpush.msra.mxu0 %v1811
    %3378 = vmatpush.msra.mxu0 %v1807
    %3379 = vmatpush.msra.mxu0 %v1803
    %3380 = vmatmul.f32.gmra.mxu0 %v886
    %v3381 = vpop.f32.mrf.mxu0
    %v3382 = vadd.f32 %v3359, %v3381
    %3383 = vmatmul.f32.gmra.mxu0 %v902
    %v3384 = vpop.f32.mrf.mxu0
    %v3385 = vadd.f32 %v3362, %v3384
    %3386 = vdwg.mxu0
    %3387 = vmatpush.msra.mxu0 %v1927
    %3388 = vmatpush.msra.mxu0 %v1923
    %3389 = vmatpush.msra.mxu0 %v1919
    %3390 = vmatpush.msra.mxu0 %v1915
    %3391 = vmatpush.msra.mxu0 %v1911
    %3392 = vmatpush.msra.mxu0 %v1907
    %3393 = vmatpush.msra.mxu0 %v1903
    %3394 = vmatpush.msra.mxu0 %v1899
    %3395 = vmatpush.msra.mxu0 %v1895
    %3396 = vmatpush.msra.mxu0 %v1891
    %3397 = vmatpush.msra.mxu0 %v1887
    %3398 = vmatpush.msra.mxu0 %v1883
    %3399 = vmatpush.msra.mxu0 %v1879
    %3400 = vmatpush.msra.mxu0 %v1875
    %3401 = vmatpush.msra.mxu0 %v1871
    %3402 = vmatpush.msra.mxu0 %v1867
    %3403 = vmatmul.f32.gmra.mxu0 %v887
    %v3404 = vpop.f32.mrf.mxu0
    %v3405 = vadd.f32 %v3382, %v3404
    %3406 = vmatmul.f32.gmra.mxu0 %v903
    %v3407 = vpop.f32.mrf.mxu0
    %v3408 = vadd.f32 %v3385, %v3407
    %3409 = vdwg.mxu0
    %v3410 = vmax.f32 %v2301, 0.0
    %v3411 = vmax.f32 %v2669, 0.0
    %v3412 = vmax.f32 %v3037, 0.0
    %v3413 = vmax.f32 %v3405, 0.0
    %v3414 = vmax.f32 %v2304, 0.0
    %v3415 = vmax.f32 %v2672, 0.0
    %v3416 = vmax.f32 %v3040, 0.0
    %v3417 = vmax.f32 %v3408, 0.0
    %v3418 = vld [vmem:[#allocation14] sm:$0xff]
    %v3419 = vld [vmem:[#allocation14 + $0x8] sm:$0xff]
    %v3420 = vld [vmem:[#allocation14 + $0x10] sm:$0xff]
    %v3421 = vld [vmem:[#allocation14 + $0x18] sm:$0xff]
    %v3422 = vld [vmem:[#allocation14 + $0x20] sm:$0xff]
    %v3423 = vld [vmem:[#allocation14 + $0x28] sm:$0xff]
    %v3424 = vld [vmem:[#allocation14 + $0x30] sm:$0xff]
    %v3425 = vld [vmem:[#allocation14 + $0x38] sm:$0xff]
    %v3426 = vld [vmem:[#allocation14 + $0x40] sm:$0xff]
    %v3427 = vld [vmem:[#allocation14 + $0x48] sm:$0xff]
    %v3428 = vld [vmem:[#allocation14 + $0x50] sm:$0xff]
    %v3429 = vld [vmem:[#allocation14 + $0x58] sm:$0xff]
    %v3430 = vld [vmem:[#allocation14 + $0x60] sm:$0xff]
    %v3431 = vld [vmem:[#allocation14 + $0x68] sm:$0xff]
    %v3432 = vld [vmem:[#allocation14 + $0x70] sm:$0xff]
    %v3433 = vld [vmem:[#allocation14 + $0x78] sm:$0xff]
    %v3434 = vld [vmem:[#allocation14 + $0x80] sm:$0xff]
    %v3435 = vld [vmem:[#allocation14 + $0x88] sm:$0xff]
    %v3436 = vld [vmem:[#allocation14 + $0x90] sm:$0xff]
    %v3437 = vld [vmem:[#allocation14 + $0x98] sm:$0xff]
    %v3438 = vld [vmem:[#allocation14 + $0xa0] sm:$0xff]
    %v3439 = vld [vmem:[#allocation14 + $0xa8] sm:$0xff]
    %v3440 = vld [vmem:[#allocation14 + $0xb0] sm:$0xff]
    %v3441 = vld [vmem:[#allocation14 + $0xb8] sm:$0xff]
    %v3442 = vld [vmem:[#allocation14 + $0xc0] sm:$0xff]
    %v3443 = vld [vmem:[#allocation14 + $0xc8] sm:$0xff]
    %v3444 = vld [vmem:[#allocation14 + $0xd0] sm:$0xff]
    %v3445 = vld [vmem:[#allocation14 + $0xd8] sm:$0xff]
    %v3446 = vld [vmem:[#allocation14 + $0xe0] sm:$0xff]
    %v3447 = vld [vmem:[#allocation14 + $0xe8] sm:$0xff]
    %v3448 = vld [vmem:[#allocation14 + $0xf0] sm:$0xff]
    %v3449 = vld [vmem:[#allocation14 + $0xf8] sm:$0xff]
    %v3450 = vld [vmem:[#allocation14 + $0x100] sm:$0xff]
    %v3451 = vld [vmem:[#allocation14 + $0x108] sm:$0xff]
    %v3452 = vld [vmem:[#allocation14 + $0x110] sm:$0xff]
    %v3453 = vld [vmem:[#allocation14 + $0x118] sm:$0xff]
    %v3454 = vld [vmem:[#allocation14 + $0x120] sm:$0xff]
    %v3455 = vld [vmem:[#allocation14 + $0x128] sm:$0xff]
    %v3456 = vld [vmem:[#allocation14 + $0x130] sm:$0xff]
    %v3457 = vld [vmem:[#allocation14 + $0x138] sm:$0xff]
    %v3458 = vld [vmem:[#allocation14 + $0x140] sm:$0xff]
    %v3459 = vld [vmem:[#allocation14 + $0x148] sm:$0xff]
    %v3460 = vld [vmem:[#allocation14 + $0x150] sm:$0xff]
    %v3461 = vld [vmem:[#allocation14 + $0x158] sm:$0xff]
    %v3462 = vld [vmem:[#allocation14 + $0x160] sm:$0xff]
    %v3463 = vld [vmem:[#allocation14 + $0x168] sm:$0xff]
    %v3464 = vld [vmem:[#allocation14 + $0x170] sm:$0xff]
    %v3465 = vld [vmem:[#allocation14 + $0x178] sm:$0xff]
    %v3466 = vld [vmem:[#allocation14 + $0x180] sm:$0xff]
    %v3467 = vld [vmem:[#allocation14 + $0x188] sm:$0xff]
    %v3468 = vld [vmem:[#allocation14 + $0x190] sm:$0xff]
    %v3469 = vld [vmem:[#allocation14 + $0x198] sm:$0xff]
    %v3470 = vld [vmem:[#allocation14 + $0x1a0] sm:$0xff]
    %v3471 = vld [vmem:[#allocation14 + $0x1a8] sm:$0xff]
    %v3472 = vld [vmem:[#allocation14 + $0x1b0] sm:$0xff]
    %v3473 = vld [vmem:[#allocation14 + $0x1b8] sm:$0xff]
    %v3474 = vld [vmem:[#allocation14 + $0x1c0] sm:$0xff]
    %v3475 = vld [vmem:[#allocation14 + $0x1c8] sm:$0xff]
    %v3476 = vld [vmem:[#allocation14 + $0x1d0] sm:$0xff]
    %v3477 = vld [vmem:[#allocation14 + $0x1d8] sm:$0xff]
    %v3478 = vld [vmem:[#allocation14 + $0x1e0] sm:$0xff]
    %v3479 = vld [vmem:[#allocation14 + $0x1e8] sm:$0xff]
    %v3480 = vld [vmem:[#allocation14 + $0x1f0] sm:$0xff]
    %v3481 = vld [vmem:[#allocation14 + $0x1f8] sm:$0xff]
    %v3482 = vld [vmem:[#allocation16] sm:$0x1]
    %v3484 = vperm.slane %v3482, 0
    %3486 = vmatpush.msra.mxu0 %v3433
    %3487 = vmatpush.msra.mxu0 %v3432
    %3488 = vmatpush.msra.mxu0 %v3431
    %3489 = vmatpush.msra.mxu0 %v3430
    %3490 = vmatpush.msra.mxu0 %v3429
    %3491 = vmatpush.msra.mxu0 %v3428
    %3492 = vmatpush.msra.mxu0 %v3427
    %3493 = vmatpush.msra.mxu0 %v3426
    %3494 = vmatpush.msra.mxu0 %v3425
    %3495 = vmatpush.msra.mxu0 %v3424
    %3496 = vmatpush.msra.mxu0 %v3423
    %3497 = vmatpush.msra.mxu0 %v3422
    %3498 = vmatpush.msra.mxu0 %v3421
    %3499 = vmatpush.msra.mxu0 %v3420
    %3500 = vmatpush.msra.mxu0 %v3419
    %3501 = vmatpush.msra.mxu0 %v3418
    %3502 = vmatmul.f32.gmra.mxu0 %v3410
    %v3503 = vpop.f32.mrf.mxu0
    %v3504 = vadd.f32 %v3484, %v3503
    %3505 = vmatmul.f32.gmra.mxu0 %v3414
    %v3506 = vpop.f32.mrf.mxu0
    %v3507 = vadd.f32 %v3484, %v3506
    %3508 = vdwg.mxu0
    %3509 = vmatpush.msra.mxu0 %v3449
    %3510 = vmatpush.msra.mxu0 %v3448
    %3511 = vmatpush.msra.mxu0 %v3447
    %3512 = vmatpush.msra.mxu0 %v3446
    %3513 = vmatpush.msra.mxu0 %v3445
    %3514 = vmatpush.msra.mxu0 %v3444
    %3515 = vmatpush.msra.mxu0 %v3443
    %3516 = vmatpush.msra.mxu0 %v3442
    %3517 = vmatpush.msra.mxu0 %v3441
    %3518 = vmatpush.msra.mxu0 %v3440
    %3519 = vmatpush.msra.mxu0 %v3439
    %3520 = vmatpush.msra.mxu0 %v3438
    %3521 = vmatpush.msra.mxu0 %v3437
    %3522 = vmatpush.msra.mxu0 %v3436
    %3523 = vmatpush.msra.mxu0 %v3435
    %3524 = vmatpush.msra.mxu0 %v3434
    %3525 = vmatmul.f32.gmra.mxu0 %v3411
    %v3526 = vpop.f32.mrf.mxu0
    %v3527 = vadd.f32 %v3504, %v3526
    %3528 = vmatmul.f32.gmra.mxu0 %v3415
    %v3529 = vpop.f32.mrf.mxu0
    %v3530 = vadd.f32 %v3507, %v3529
    %3531 = vdwg.mxu0
    %3532 = vmatpush.msra.mxu0 %v3465
    %3533 = vmatpush.msra.mxu0 %v3464
    %3534 = vmatpush.msra.mxu0 %v3463
    %3535 = vmatpush.msra.mxu0 %v3462
    %3536 = vmatpush.msra.mxu0 %v3461
    %3537 = vmatpush.msra.mxu0 %v3460
    %3538 = vmatpush.msra.mxu0 %v3459
    %3539 = vmatpush.msra.mxu0 %v3458
    %3540 = vmatpush.msra.mxu0 %v3457
    %3541 = vmatpush.msra.mxu0 %v3456
    %3542 = vmatpush.msra.mxu0 %v3455
    %3543 = vmatpush.msra.mxu0 %v3454
    %3544 = vmatpush.msra.mxu0 %v3453
    %3545 = vmatpush.msra.mxu0 %v3452
    %3546 = vmatpush.msra.mxu0 %v3451
    %3547 = vmatpush.msra.mxu0 %v3450
    %3548 = vmatmul.f32.gmra.mxu0 %v3412
    %v3549 = vpop.f32.mrf.mxu0
    %v3550 = vadd.f32 %v3527, %v3549
    %3551 = vmatmul.f32.gmra.mxu0 %v3416
    %v3552 = vpop.f32.mrf.mxu0
    %v3553 = vadd.f32 %v3530, %v3552
    %3554 = vdwg.mxu0
    %3555 = vmatpush.msra.mxu0 %v3481
    %3556 = vmatpush.msra.mxu0 %v3480
    %3557 = vmatpush.msra.mxu0 %v3479
    %3558 = vmatpush.msra.mxu0 %v3478
    %3559 = vmatpush.msra.mxu0 %v3477
    %3560 = vmatpush.msra.mxu0 %v3476
    %3561 = vmatpush.msra.mxu0 %v3475
    %3562 = vmatpush.msra.mxu0 %v3474
    %3563 = vmatpush.msra.mxu0 %v3473
    %3564 = vmatpush.msra.mxu0 %v3472
    %3565 = vmatpush.msra.mxu0 %v3471
    %3566 = vmatpush.msra.mxu0 %v3470
    %3567 = vmatpush.msra.mxu0 %v3469
    %3568 = vmatpush.msra.mxu0 %v3468
    %3569 = vmatpush.msra.mxu0 %v3467
    %3570 = vmatpush.msra.mxu0 %v3466
    %3571 = vmatmul.f32.gmra.mxu0 %v3413
    %v3572 = vpop.f32.mrf.mxu0
    %v3573 = vadd.f32 %v3550, %v3572
    %3574 = vmatmul.f32.gmra.mxu0 %v3417
    %v3575 = vpop.f32.mrf.mxu0
    %v3576 = vadd.f32 %v3553, %v3575
    %3577 = vdwg.mxu0
    %vm3578 = vcmp.gt.f32.partialorder %v3573, 0.0
    %vm3579 = vcmp.gt.f32.partialorder %v3576, 0.0
    %v3580 = vmul.f32 %v3573, 0.01
    %v3581 = vmul.f32 %v3576, 0.01
    %v3582 = vsel %vm3578, %v3573, %v3580
    %v3583 = vsel %vm3579, %v3576, %v3581
    %3584 = vst [vmem:[#allocation17] sm:$0xff] %v3582
    %3585 = vst [vmem:[#allocation17 + $0x8] sm:$0xff] %v3583
    // Predicated region
    $region74: #{tpu_custom_call.1} parent=1 // pred_check
      _
    $region75: #{tpu_custom_call.1} parent=1 // pred_check_branch
      %3587 = sbr.rel (0) target = $region77
    $region76: #{tpu_custom_call.1} parent=1 // pred_region
      %3589 = vsyncadd [#allocation4], 0
      %s3590 = sshll.u32 [#allocation17], 4
      %s3591 = int_to_ptr.vmem [resolvable:$true] %s3590
      %s3592 = sshll.u32 %s9, 4
      %s3593 = int_to_ptr.hbm [resolvable:$true] %s3592
      %3598 = dma.vmem_to_hbm [thread:$0]  %s3591, 256, %s3593, [#allocation4], 128, 128, 8
    $region77: #{tpu_custom_call.1} parent=1 // pred_fallthru
      _
    // Predicated region
    $region78: #{tpu_custom_call.1} parent=1 // pred_check
      _
    $region79: #{tpu_custom_call.1} parent=1 // pred_check_branch
      %3600 = sbr.rel (0) target = $region81
    $region80: #{tpu_custom_call.1} parent=1 // pred_region
      %3602 = dma.done [#allocation4], 256
    $region81: #{tpu_custom_call.1} parent=1 // pred_fallthru
      _
    %3603 = vsyncpa [#allocation3], 1
    %3604 = vsyncpa [#allocation6], 1
    %3605 = vsyncpa [#allocation9], 1
    %3606 = vsyncpa [#allocation12], 1
    %3607 = vsyncpa [#allocation15], 1
    %3608 = vsyncpa [#allocation4], 1

</llo_original>
